<compile_context>
chip_gen: v6e
topology: v6e:2x2x1
jax: 0.10.0
libtpu: 0.0.40
codegen_flags: <defaults>
</compile_context>

<pallas_src>
import jax
import jax.numpy as jnp
import numpy as np
from jax import lax
from jax.experimental import pallas as pl
from jax.experimental.pallas import tpu as pltpu


# ---------------------------------------------------------------------------
# Fused kernel: Conv1d (matmul) + ReLU + MaxPool1d + LSTM + Linear + Softmax
# ---------------------------------------------------------------------------
def conv_pool_lstm_head_kernel(patch_ref, wc_ref, bc_ref, wih_ref, whh_ref, bg_ref,
                               wlin_ref, blin_ref, probs_ref, logits_ref, xp_ref):
    # patch_ref: (P, T*N, K)  patches, rows ordered (t, n) within each pool position p
    # wc_ref:    (K, F)   conv weight (transposed)       bc_ref: (1, F) conv bias
    # wih_ref:   (F, 4H)  LSTM input weights (transposed)
    # whh_ref:   (H, 4H)  LSTM recurrent weights (transposed)
    # bg_ref:    (1, 4H)  b_ih + b_hh
    # wlin_ref:  (H, C)   classifier weight (transposed) blin_ref: (1, C)
    # probs_ref: (N, C)   softmax output   logits_ref: (N, C) pre-softmax logits
    # xp_ref:    (T, N, 4H) VMEM scratch holding the hoisted input projection
    P, TN, K = patch_ref.shape
    H = whh_ref.shape[0]
    N = probs_ref.shape[0]
    T = TN // N

    wc = wc_ref[...]

    # --- Conv: P independent MXU dots (pipelined pushes), then tree-max pooling over the
    # P pool positions.  bias + ReLU commute with the max (same bias everywhere, ReLU monotone).
    zs = [jnp.dot(patch_ref[p], wc, preferred_element_type=jnp.float32)     # each (TN, F)
          for p in range(P)]
    while len(zs) > 1:
        zs = [jnp.maximum(zs[i], zs[i + 1]) if i + 1 < len(zs) else zs[i]
              for i in range(0, len(zs), 2)]
    pooled = jnp.maximum(zs[0] + bc_ref[...], 0.0)                          # (TN, F)

    # --- Hoisted LSTM input projection: ONE matmul for all timesteps, bias folded in once.
    proj = (jnp.dot(pooled, wih_ref[...], preferred_element_type=jnp.float32)
            + bg_ref[...])                                                  # (TN, 4H)
    # Stage per-timestep rows into an aligned (T, N, 4H) scratch: static slab stores, off the
    # recurrent chain; the per-step reads become clean leading-axis loads.
    for t in range(T):
        xp_ref[t] = proj[t * N:(t + 1) * N, :]

    whh = whh_ref[...]

    # Loop-invariant lane constants for the single-tanh gate trick:
    #   sigmoid(x) = 0.5 * tanh(0.5 x) + 0.5  on the i/f/o lane ranges, plain tanh on g.
    lane = lax.broadcasted_iota(jnp.int32, (1, 4 * H), 1)
    is_g = (lane >= 2 * H) & (lane < 3 * H)
    pre_scale = jnp.where(is_g, jnp.float32(1.0), jnp.float32(0.5))         # (1, 4H)
    post_shift = jnp.where(is_g, jnp.float32(0.0), jnp.float32(0.5))        # (1, 4H)

    # --- Recurrent loop, fully unrolled (T is static): only h @ W_hh + elementwise gate math
    # sits on the serial chain; 2 EUP pushes per step (tanh(gates), tanh(c_new)).
    h = jnp.zeros((N, H), jnp.float32)
    c = jnp.zeros((N, H), jnp.float32)
    for t in range(T):
        xp_t = xp_ref[t]                                                    # (N, 4H) aligned load
        gates = xp_t + jnp.dot(h, whh, preferred_element_type=jnp.float32)  # (N, 4H)
        acts = jnp.tanh(gates * pre_scale) * pre_scale + post_shift         # sigmoids + tanh(g)
        i_g = acts[:, 0:H]
        f_g = acts[:, H:2 * H]
        g_g = acts[:, 2 * H:3 * H]
        o_g = acts[:, 3 * H:4 * H]
        c = f_g * c + i_g * g_g
        h = o_g * jnp.tanh(c)

    # --- Classifier head + softmax (reciprocal on the EUP, off the chain).
    logits = jnp.dot(h, wlin_ref[...], preferred_element_type=jnp.float32) + blin_ref[...]
    logits_ref[...] = logits
    m = jnp.max(logits, axis=1, keepdims=True)
    e = jnp.exp(logits - m)
    probs_ref[...] = e * pl.reciprocal(jnp.sum(e, axis=1, keepdims=True), approx=True)


# ---------------------------------------------------------------------------
# Wrapper: gather-free patch construction + layout plumbing, one fused pallas_call
# ---------------------------------------------------------------------------
def conv_lstm_forward(wav, params, *, conv_kernel_size, conv_stride, num_features,
                      pooling_kernel, hidden_size, num_of_classes):
    N, c_in, L = wav.shape
    assert c_in == 1
    K, S, F = conv_kernel_size, conv_stride, num_features
    H, C = hidden_size, num_of_classes
    P = pooling_kernel if pooling_kernel > 1 else 1

    L_conv = (L - K) // S + 1
    T = L_conv // P            # MaxPool1d floor semantics: tail frames are dropped
    TP = T * P                 # conv frames actually consumed
    TN = T * N

    x = wav[:, 0, :].astype(jnp.float32)                        # (N, L) lane-dense waveform

    # Gather-free im2col restricted to the frames the pool keeps: K strided slices + stack.
    cols = [x[:, k: k + (TP - 1) * S + 1: S] for k in range(K)]  # each (N, TP)
    patches = jnp.stack(cols, axis=-1)                           # (N, TP, K)
    # Order rows (p, t, n) so the kernel pools with P slab-max ops and the per-step LSTM
    # projection rows for timestep t are contiguous.
    patches = patches.reshape(N, T, P, K).transpose(2, 1, 0, 3).reshape(P, TN, K)

    wc = jnp.transpose(params["conv_w"][:, 0, :])                # (K, F)
    bc = params["conv_b"].reshape(1, F)
    wih_t = jnp.transpose(params["w_ih"])                        # (F, 4H)
    whh_t = jnp.transpose(params["w_hh"])                        # (H, 4H)
    bg = (params["b_ih"] + params["b_hh"]).reshape(1, 4 * H)
    wlin_t = jnp.transpose(params["w_lin"])                      # (H, C)
    blin = params["b_lin"].reshape(1, C)

    # Advisory cost hint so XLA overlaps the wrapper-side slicing/transposes with the kernel.
    flops = 2 * (P * TN * K * F + TN * F * 4 * H + T * N * H * 4 * H + N * H * C)
    transcendentals = T * (N * 4 * H + N * H) + N * C
    bytes_accessed = 4 * (P * TN * K + K * F + F + F * 4 * H + H * 4 * H + 4 * H
                          + H * C + C + 2 * N * C)
    cost = pl.CostEstimate(flops=flops, transcendentals=transcendentals,
                           bytes_accessed=bytes_accessed)

    probs, logits = pl.pallas_call(
        conv_pool_lstm_head_kernel,
        out_shape=(jax.ShapeDtypeStruct((N, C), jnp.float32),
                   jax.ShapeDtypeStruct((N, C), jnp.float32)),
        grid=(1,),
        in_specs=[
            pl.BlockSpec((P, TN, K), lambda i: (0, 0, 0)),
            pl.BlockSpec((K, F), lambda i: (0, 0)),
            pl.BlockSpec((1, F), lambda i: (0, 0)),
            pl.BlockSpec((F, 4 * H), lambda i: (0, 0)),
            pl.BlockSpec((H, 4 * H), lambda i: (0, 0)),
            pl.BlockSpec((1, 4 * H), lambda i: (0, 0)),
            pl.BlockSpec((H, C), lambda i: (0, 0)),
            pl.BlockSpec((1, C), lambda i: (0, 0)),
        ],
        out_specs=(
            pl.BlockSpec((N, C), lambda i: (0, 0)),
            pl.BlockSpec((N, C), lambda i: (0, 0)),
        ),
        scratch_shapes=[pltpu.VMEM((T, N, 4 * H), jnp.float32)],
        compiler_params=pltpu.CompilerParams(dimension_semantics=("arbitrary",)),
        cost_estimate=cost,
    )(patches, wc, bc, wih_t, whh_t, bg, wlin_t, blin)
    return probs, logits


# ---------------------------------------------------------------------------
# Pure-JAX reference (mirrors PyTorch semantics) for the correctness check
# ---------------------------------------------------------------------------
def reference_forward(wav, params, *, conv_kernel_size, conv_stride, num_features,
                      pooling_kernel, hidden_size, num_of_classes):
    N, _, L = wav.shape
    K, S, F, H = conv_kernel_size, conv_stride, num_features, hidden_size
    L_conv = (L - K) // S + 1
    P = pooling_kernel if pooling_kernel > 1 else 1
    T = L_conv // P

    x = wav[:, 0, :].astype(jnp.float32)
    idx = jnp.arange(L_conv)[:, None] * S + jnp.arange(K)[None, :]
    patches = x[:, idx]                                          # (N, L_conv, K)
    y = jnp.einsum("nlk,fk->nlf", patches, params["conv_w"][:, 0, :]) + params["conv_b"]
    y = jnp.maximum(y, 0.0)
    y = y[:, : T * P, :].reshape(N, T, P, F).max(axis=2)         # (N, T, F)
    xs = jnp.transpose(y, (1, 0, 2))                             # (T, N, F)

    h = jnp.zeros((N, H), jnp.float32)
    c = jnp.zeros((N, H), jnp.float32)
    for t in range(T):
        gates = xs[t] @ params["w_ih"].T + params["b_ih"] + h @ params["w_hh"].T + params["b_hh"]
        i = jax.nn.sigmoid(gates[:, 0:H])
        f = jax.nn.sigmoid(gates[:, H:2 * H])
        g = jnp.tanh(gates[:, 2 * H:3 * H])
        o = jax.nn.sigmoid(gates[:, 3 * H:4 * H])
        c = f * c + i * g
        h = o * jnp.tanh(c)

    logits = h @ params["w_lin"].T + params["b_lin"]
    return jax.nn.softmax(logits, axis=1), logits


if __name__ == "__main__":
    # Hyperparameters (num_layers=1; for num_layers>1 PyTorch still reads h_n[0] = layer 0).
    conv_kernel_size = 8
    conv_stride = 2
    num_features = 8
    pooling_kernel = 4
    hidden_size = 32
    num_of_classes = 2

    N, L = 2, 256
    H, F, K, C = hidden_size, num_features, conv_kernel_size, num_of_classes

    key = jax.random.PRNGKey(0)
    ks = jax.random.split(key, 9)
    b_conv = 1.0 / np.sqrt(1 * K)
    b_lstm = 1.0 / np.sqrt(H)
    params = {
        "conv_w": jax.random.uniform(ks[0], (F, 1, K), jnp.float32, -b_conv, b_conv),
        "conv_b": jax.random.uniform(ks[1], (F,), jnp.float32, -b_conv, b_conv),
        "w_ih": jax.random.uniform(ks[2], (4 * H, F), jnp.float32, -b_lstm, b_lstm),
        "w_hh": jax.random.uniform(ks[3], (4 * H, H), jnp.float32, -b_lstm, b_lstm),
        "b_ih": jax.random.uniform(ks[4], (4 * H,), jnp.float32, -b_lstm, b_lstm),
        "b_hh": jax.random.uniform(ks[5], (4 * H,), jnp.float32, -b_lstm, b_lstm),
        "w_lin": jax.random.uniform(ks[6], (C, H), jnp.float32, -b_lstm, b_lstm),
        "b_lin": jax.random.uniform(ks[7], (C,), jnp.float32, -b_lstm, b_lstm),
    }
    wav = jax.random.normal(ks[8], (N, 1, L), jnp.float32)

    hp = dict(conv_kernel_size=conv_kernel_size, conv_stride=conv_stride,
              num_features=num_features, pooling_kernel=pooling_kernel,
              hidden_size=hidden_size, num_of_classes=num_of_classes)

    probs, logits = conv_lstm_forward(wav, params, **hp)
    probs = jax.block_until_ready(probs)
    logits = jax.block_until_ready(logits)

    ref_probs, ref_logits = reference_forward(wav, params, **hp)
    ref_probs = jax.block_until_ready(ref_probs)

    assert probs.shape == (N, C)
    # Probabilities sum to 1 (approx reciprocal in the softmax => loose-ish bound).
    np.testing.assert_allclose(np.asarray(jnp.sum(probs, axis=1)), np.ones((N,)), atol=1e-3)
    # Tighter check on pre-softmax logits, plus the probability check.
    np.testing.assert_allclose(np.asarray(logits), np.asarray(ref_logits), rtol=0, atol=5e-3)
    np.testing.assert_allclose(np.asarray(probs), np.asarray(ref_probs), rtol=0, atol=2e-3)

    print("KERNEL_OK")
</pallas_src>

<mosaic_0001>
module attributes {stable_mosaic.version = 11 : i64} {
  func.func @conv_pool_lstm_head_kernel(%arg0: i32, %arg1: memref<4x62x8xf32, #tpu.memory_space<vmem>>, %arg2: memref<8x8xf32, #tpu.memory_space<vmem>>, %arg3: memref<1x8xf32, #tpu.memory_space<vmem>>, %arg4: memref<8x128xf32, #tpu.memory_space<vmem>>, %arg5: memref<32x128xf32, #tpu.memory_space<vmem>>, %arg6: memref<1x128xf32, #tpu.memory_space<vmem>>, %arg7: memref<32x2xf32, #tpu.memory_space<vmem>>, %arg8: memref<1x2xf32, #tpu.memory_space<vmem>>, %arg9: memref<2x2xf32, #tpu.memory_space<vmem>>, %arg10: memref<2x2xf32, #tpu.memory_space<vmem>>, %arg11: memref<31x2x128xf32, #tpu.memory_space<vmem>>) attributes {dimension_semantics = [#tpu.dimension_semantics<arbitrary>], iteration_bounds = array<i64: 1>, scalar_prefetch = 0 : i64, scratch_operands = 1 : i64, tpu.core_type = #tpu.core_type<tc>, window_params = [{pipeline_mode = #tpu.pipeline_mode<synchronous>, transform_indices = @transform_0, window_bounds = array<i64: 4, 62, 8>}, {pipeline_mode = #tpu.pipeline_mode<synchronous>, transform_indices = @transform_1, window_bounds = array<i64: 8, 8>}, {pipeline_mode = #tpu.pipeline_mode<synchronous>, transform_indices = @transform_2, window_bounds = array<i64: 1, 8>}, {pipeline_mode = #tpu.pipeline_mode<synchronous>, transform_indices = @transform_3, window_bounds = array<i64: 8, 128>}, {pipeline_mode = #tpu.pipeline_mode<synchronous>, transform_indices = @transform_4, window_bounds = array<i64: 32, 128>}, {pipeline_mode = #tpu.pipeline_mode<synchronous>, transform_indices = @transform_5, window_bounds = array<i64: 1, 128>}, {pipeline_mode = #tpu.pipeline_mode<synchronous>, transform_indices = @transform_6, window_bounds = array<i64: 32, 2>}, {pipeline_mode = #tpu.pipeline_mode<synchronous>, transform_indices = @transform_7, window_bounds = array<i64: 1, 2>}, {pipeline_mode = #tpu.pipeline_mode<synchronous>, transform_indices = @transform_8, window_bounds = array<i64: 2, 2>}, {pipeline_mode = #tpu.pipeline_mode<synchronous>, transform_indices = @transform_9, window_bounds = array<i64: 2, 2>}]} {
    %c0 = arith.constant 0 : index
    %c0_0 = arith.constant 0 : index
    %0 = vector.load %arg2[%c0, %c0_0] : memref<8x8xf32, #tpu.memory_space<vmem>>, vector<8x8xf32>
    %c0_1 = arith.constant 0 : index
    %c0_2 = arith.constant 0 : index
    %c0_3 = arith.constant 0 : index
    %1 = vector.load %arg1[%c0_1, %c0_2, %c0_3] : memref<4x62x8xf32, #tpu.memory_space<vmem>>, vector<1x62x8xf32>
    %2 = vector.shape_cast %1 : vector<1x62x8xf32> to vector<62x8xf32>
    %cst = arith.constant dense<0.000000e+00> : vector<62x8xf32>
    %3 = tpu.matmul %2, %0, %cst {dimension_numbers = #tpu.dot_dimension_numbers<[1], [0], [0], [1], [0, 0, 1, 1], [], []>} : vector<62x8xf32>, vector<8x8xf32>, vector<62x8xf32> -> vector<62x8xf32>
    %c1 = arith.constant 1 : index
    %c0_4 = arith.constant 0 : index
    %c0_5 = arith.constant 0 : index
    %4 = vector.load %arg1[%c1, %c0_4, %c0_5] : memref<4x62x8xf32, #tpu.memory_space<vmem>>, vector<1x62x8xf32>
    %5 = vector.shape_cast %4 : vector<1x62x8xf32> to vector<62x8xf32>
    %cst_6 = arith.constant dense<0.000000e+00> : vector<62x8xf32>
    %6 = tpu.matmul %5, %0, %cst_6 {dimension_numbers = #tpu.dot_dimension_numbers<[1], [0], [0], [1], [0, 0, 1, 1], [], []>} : vector<62x8xf32>, vector<8x8xf32>, vector<62x8xf32> -> vector<62x8xf32>
    %c2 = arith.constant 2 : index
    %c0_7 = arith.constant 0 : index
    %c0_8 = arith.constant 0 : index
    %7 = vector.load %arg1[%c2, %c0_7, %c0_8] : memref<4x62x8xf32, #tpu.memory_space<vmem>>, vector<1x62x8xf32>
    %8 = vector.shape_cast %7 : vector<1x62x8xf32> to vector<62x8xf32>
    %cst_9 = arith.constant dense<0.000000e+00> : vector<62x8xf32>
    %9 = tpu.matmul %8, %0, %cst_9 {dimension_numbers = #tpu.dot_dimension_numbers<[1], [0], [0], [1], [0, 0, 1, 1], [], []>} : vector<62x8xf32>, vector<8x8xf32>, vector<62x8xf32> -> vector<62x8xf32>
    %c3 = arith.constant 3 : index
    %c0_10 = arith.constant 0 : index
    %c0_11 = arith.constant 0 : index
    %10 = vector.load %arg1[%c3, %c0_10, %c0_11] : memref<4x62x8xf32, #tpu.memory_space<vmem>>, vector<1x62x8xf32>
    %11 = vector.shape_cast %10 : vector<1x62x8xf32> to vector<62x8xf32>
    %cst_12 = arith.constant dense<0.000000e+00> : vector<62x8xf32>
    %12 = tpu.matmul %11, %0, %cst_12 {dimension_numbers = #tpu.dot_dimension_numbers<[1], [0], [0], [1], [0, 0, 1, 1], [], []>} : vector<62x8xf32>, vector<8x8xf32>, vector<62x8xf32> -> vector<62x8xf32>
    %13 = arith.maximumf %3, %6 : vector<62x8xf32>
    %14 = arith.maximumf %9, %12 : vector<62x8xf32>
    %15 = arith.maximumf %13, %14 : vector<62x8xf32>
    %c0_13 = arith.constant 0 : index
    %c0_14 = arith.constant 0 : index
    %16 = vector.load %arg3[%c0_13, %c0_14] : memref<1x8xf32, #tpu.memory_space<vmem>>, vector<1x8xf32>
    %17 = vector.broadcast %16 : vector<1x8xf32> to vector<62x8xf32>
    %18 = arith.addf %15, %17 : vector<62x8xf32>
    %cst_15 = arith.constant 0.000000e+00 : f32
    %19 = vector.broadcast %cst_15 : f32 to vector<62x8xf32>
    %20 = arith.maximumf %18, %19 : vector<62x8xf32>
    %c0_16 = arith.constant 0 : index
    %c0_17 = arith.constant 0 : index
    %21 = vector.load %arg4[%c0_16, %c0_17] : memref<8x128xf32, #tpu.memory_space<vmem>>, vector<8x128xf32>
    %cst_18 = arith.constant dense<0.000000e+00> : vector<62x128xf32>
    %22 = tpu.matmul %20, %21, %cst_18 {dimension_numbers = #tpu.dot_dimension_numbers<[1], [0], [0], [1], [0, 0, 1, 1], [], []>} : vector<62x8xf32>, vector<8x128xf32>, vector<62x128xf32> -> vector<62x128xf32>
    %c0_19 = arith.constant 0 : index
    %c0_20 = arith.constant 0 : index
    %23 = vector.load %arg6[%c0_19, %c0_20] : memref<1x128xf32, #tpu.memory_space<vmem>>, vector<1x128xf32>
    %24 = vector.broadcast %23 : vector<1x128xf32> to vector<62x128xf32>
    %25 = arith.addf %22, %24 : vector<62x128xf32>
    %26 = vector.extract_strided_slice %25 {offsets = [0, 0], sizes = [2, 128], strides = [1, 1]} : vector<62x128xf32> to vector<2x128xf32>
    %c0_21 = arith.constant 0 : index
    %c0_22 = arith.constant 0 : index
    %c0_23 = arith.constant 0 : index
    %27 = vector.load %arg11[%c0_21, %c0_22, %c0_23] : memref<31x2x128xf32, #tpu.memory_space<vmem>>, vector<1x2x128xf32>
    %28 = vector.shape_cast %27 : vector<1x2x128xf32> to vector<2x128xf32>
    %29 = vector.shape_cast %26 : vector<2x128xf32> to vector<1x2x128xf32>
    tpu.vector_store %arg11[%c0_21, %c0_22, %c0_23], %29 {strides = array<i32>} : memref<31x2x128xf32, #tpu.memory_space<vmem>>, vector<1x2x128xf32>,
    %30 = vector.extract_strided_slice %25 {offsets = [2, 0], sizes = [2, 128], strides = [1, 1]} : vector<62x128xf32> to vector<2x128xf32>
    %c1_24 = arith.constant 1 : index
    %c0_25 = arith.constant 0 : index
    %c0_26 = arith.constant 0 : index
    %31 = vector.load %arg11[%c1_24, %c0_25, %c0_26] : memref<31x2x128xf32, #tpu.memory_space<vmem>>, vector<1x2x128xf32>
    %32 = vector.shape_cast %31 : vector<1x2x128xf32> to vector<2x128xf32>
    %33 = vector.shape_cast %30 : vector<2x128xf32> to vector<1x2x128xf32>
    tpu.vector_store %arg11[%c1_24, %c0_25, %c0_26], %33 {strides = array<i32>} : memref<31x2x128xf32, #tpu.memory_space<vmem>>, vector<1x2x128xf32>,
    %34 = vector.extract_strided_slice %25 {offsets = [4, 0], sizes = [2, 128], strides = [1, 1]} : vector<62x128xf32> to vector<2x128xf32>
    %c2_27 = arith.constant 2 : index
    %c0_28 = arith.constant 0 : index
    %c0_29 = arith.constant 0 : index
    %35 = vector.load %arg11[%c2_27, %c0_28, %c0_29] : memref<31x2x128xf32, #tpu.memory_space<vmem>>, vector<1x2x128xf32>
    %36 = vector.shape_cast %35 : vector<1x2x128xf32> to vector<2x128xf32>
    %37 = vector.shape_cast %34 : vector<2x128xf32> to vector<1x2x128xf32>
    tpu.vector_store %arg11[%c2_27, %c0_28, %c0_29], %37 {strides = array<i32>} : memref<31x2x128xf32, #tpu.memory_space<vmem>>, vector<1x2x128xf32>,
    %38 = vector.extract_strided_slice %25 {offsets = [6, 0], sizes = [2, 128], strides = [1, 1]} : vector<62x128xf32> to vector<2x128xf32>
    %c3_30 = arith.constant 3 : index
    %c0_31 = arith.constant 0 : index
    %c0_32 = arith.constant 0 : index
    %39 = vector.load %arg11[%c3_30, %c0_31, %c0_32] : memref<31x2x128xf32, #tpu.memory_space<vmem>>, vector<1x2x128xf32>
    %40 = vector.shape_cast %39 : vector<1x2x128xf32> to vector<2x128xf32>
    %41 = vector.shape_cast %38 : vector<2x128xf32> to vector<1x2x128xf32>
    tpu.vector_store %arg11[%c3_30, %c0_31, %c0_32], %41 {strides = array<i32>} : memref<31x2x128xf32, #tpu.memory_space<vmem>>, vector<1x2x128xf32>,
    %42 = vector.extract_strided_slice %25 {offsets = [8, 0], sizes = [2, 128], strides = [1, 1]} : vector<62x128xf32> to vector<2x128xf32>
    %c4 = arith.constant 4 : index
    %c0_33 = arith.constant 0 : index
    %c0_34 = arith.constant 0 : index
    %43 = vector.load %arg11[%c4, %c0_33, %c0_34] : memref<31x2x128xf32, #tpu.memory_space<vmem>>, vector<1x2x128xf32>
    %44 = vector.shape_cast %43 : vector<1x2x128xf32> to vector<2x128xf32>
    %45 = vector.shape_cast %42 : vector<2x128xf32> to vector<1x2x128xf32>
    tpu.vector_store %arg11[%c4, %c0_33, %c0_34], %45 {strides = array<i32>} : memref<31x2x128xf32, #tpu.memory_space<vmem>>, vector<1x2x128xf32>,
    %46 = vector.extract_strided_slice %25 {offsets = [10, 0], sizes = [2, 128], strides = [1, 1]} : vector<62x128xf32> to vector<2x128xf32>
    %c5 = arith.constant 5 : index
    %c0_35 = arith.constant 0 : index
    %c0_36 = arith.constant 0 : index
    %47 = vector.load %arg11[%c5, %c0_35, %c0_36] : memref<31x2x128xf32, #tpu.memory_space<vmem>>, vector<1x2x128xf32>
    %48 = vector.shape_cast %47 : vector<1x2x128xf32> to vector<2x128xf32>
    %49 = vector.shape_cast %46 : vector<2x128xf32> to vector<1x2x128xf32>
    tpu.vector_store %arg11[%c5, %c0_35, %c0_36], %49 {strides = array<i32>} : memref<31x2x128xf32, #tpu.memory_space<vmem>>, vector<1x2x128xf32>,
    %50 = vector.extract_strided_slice %25 {offsets = [12, 0], sizes = [2, 128], strides = [1, 1]} : vector<62x128xf32> to vector<2x128xf32>
    %c6 = arith.constant 6 : index
    %c0_37 = arith.constant 0 : index
    %c0_38 = arith.constant 0 : index
    %51 = vector.load %arg11[%c6, %c0_37, %c0_38] : memref<31x2x128xf32, #tpu.memory_space<vmem>>, vector<1x2x128xf32>
    %52 = vector.shape_cast %51 : vector<1x2x128xf32> to vector<2x128xf32>
    %53 = vector.shape_cast %50 : vector<2x128xf32> to vector<1x2x128xf32>
    tpu.vector_store %arg11[%c6, %c0_37, %c0_38], %53 {strides = array<i32>} : memref<31x2x128xf32, #tpu.memory_space<vmem>>, vector<1x2x128xf32>,
    %54 = vector.extract_strided_slice %25 {offsets = [14, 0], sizes = [2, 128], strides = [1, 1]} : vector<62x128xf32> to vector<2x128xf32>
    %c7 = arith.constant 7 : index
    %c0_39 = arith.constant 0 : index
    %c0_40 = arith.constant 0 : index
    %55 = vector.load %arg11[%c7, %c0_39, %c0_40] : memref<31x2x128xf32, #tpu.memory_space<vmem>>, vector<1x2x128xf32>
    %56 = vector.shape_cast %55 : vector<1x2x128xf32> to vector<2x128xf32>
    %57 = vector.shape_cast %54 : vector<2x128xf32> to vector<1x2x128xf32>
    tpu.vector_store %arg11[%c7, %c0_39, %c0_40], %57 {strides = array<i32>} : memref<31x2x128xf32, #tpu.memory_space<vmem>>, vector<1x2x128xf32>,
    %58 = vector.extract_strided_slice %25 {offsets = [16, 0], sizes = [2, 128], strides = [1, 1]} : vector<62x128xf32> to vector<2x128xf32>
    %c8 = arith.constant 8 : index
    %c0_41 = arith.constant 0 : index
    %c0_42 = arith.constant 0 : index
    %59 = vector.load %arg11[%c8, %c0_41, %c0_42] : memref<31x2x128xf32, #tpu.memory_space<vmem>>, vector<1x2x128xf32>
    %60 = vector.shape_cast %59 : vector<1x2x128xf32> to vector<2x128xf32>
    %61 = vector.shape_cast %58 : vector<2x128xf32> to vector<1x2x128xf32>
    tpu.vector_store %arg11[%c8, %c0_41, %c0_42], %61 {strides = array<i32>} : memref<31x2x128xf32, #tpu.memory_space<vmem>>, vector<1x2x128xf32>,
    %62 = vector.extract_strided_slice %25 {offsets = [18, 0], sizes = [2, 128], strides = [1, 1]} : vector<62x128xf32> to vector<2x128xf32>
    %c9 = arith.constant 9 : index
    %c0_43 = arith.constant 0 : index
    %c0_44 = arith.constant 0 : index
    %63 = vector.load %arg11[%c9, %c0_43, %c0_44] : memref<31x2x128xf32, #tpu.memory_space<vmem>>, vector<1x2x128xf32>
    %64 = vector.shape_cast %63 : vector<1x2x128xf32> to vector<2x128xf32>
    %65 = vector.shape_cast %62 : vector<2x128xf32> to vector<1x2x128xf32>
    tpu.vector_store %arg11[%c9, %c0_43, %c0_44], %65 {strides = array<i32>} : memref<31x2x128xf32, #tpu.memory_space<vmem>>, vector<1x2x128xf32>,
    %66 = vector.extract_strided_slice %25 {offsets = [20, 0], sizes = [2, 128], strides = [1, 1]} : vector<62x128xf32> to vector<2x128xf32>
    %c10 = arith.constant 10 : index
    %c0_45 = arith.constant 0 : index
    %c0_46 = arith.constant 0 : index
    %67 = vector.load %arg11[%c10, %c0_45, %c0_46] : memref<31x2x128xf32, #tpu.memory_space<vmem>>, vector<1x2x128xf32>
    %68 = vector.shape_cast %67 : vector<1x2x128xf32> to vector<2x128xf32>
    %69 = vector.shape_cast %66 : vector<2x128xf32> to vector<1x2x128xf32>
    tpu.vector_store %arg11[%c10, %c0_45, %c0_46], %69 {strides = array<i32>} : memref<31x2x128xf32, #tpu.memory_space<vmem>>, vector<1x2x128xf32>,
    %70 = vector.extract_strided_slice %25 {offsets = [22, 0], sizes = [2, 128], strides = [1, 1]} : vector<62x128xf32> to vector<2x128xf32>
    %c11 = arith.constant 11 : index
    %c0_47 = arith.constant 0 : index
    %c0_48 = arith.constant 0 : index
    %71 = vector.load %arg11[%c11, %c0_47, %c0_48] : memref<31x2x128xf32, #tpu.memory_space<vmem>>, vector<1x2x128xf32>
    %72 = vector.shape_cast %71 : vector<1x2x128xf32> to vector<2x128xf32>
    %73 = vector.shape_cast %70 : vector<2x128xf32> to vector<1x2x128xf32>
    tpu.vector_store %arg11[%c11, %c0_47, %c0_48], %73 {strides = array<i32>} : memref<31x2x128xf32, #tpu.memory_space<vmem>>, vector<1x2x128xf32>,
    %74 = vector.extract_strided_slice %25 {offsets = [24, 0], sizes = [2, 128], strides = [1, 1]} : vector<62x128xf32> to vector<2x128xf32>
    %c12 = arith.constant 12 : index
    %c0_49 = arith.constant 0 : index
    %c0_50 = arith.constant 0 : index
    %75 = vector.load %arg11[%c12, %c0_49, %c0_50] : memref<31x2x128xf32, #tpu.memory_space<vmem>>, vector<1x2x128xf32>
    %76 = vector.shape_cast %75 : vector<1x2x128xf32> to vector<2x128xf32>
    %77 = vector.shape_cast %74 : vector<2x128xf32> to vector<1x2x128xf32>
    tpu.vector_store %arg11[%c12, %c0_49, %c0_50], %77 {strides = array<i32>} : memref<31x2x128xf32, #tpu.memory_space<vmem>>, vector<1x2x128xf32>,
    %78 = vector.extract_strided_slice %25 {offsets = [26, 0], sizes = [2, 128], strides = [1, 1]} : vector<62x128xf32> to vector<2x128xf32>
    %c13 = arith.constant 13 : index
    %c0_51 = arith.constant 0 : index
    %c0_52 = arith.constant 0 : index
    %79 = vector.load %arg11[%c13, %c0_51, %c0_52] : memref<31x2x128xf32, #tpu.memory_space<vmem>>, vector<1x2x128xf32>
    %80 = vector.shape_cast %79 : vector<1x2x128xf32> to vector<2x128xf32>
    %81 = vector.shape_cast %78 : vector<2x128xf32> to vector<1x2x128xf32>
    tpu.vector_store %arg11[%c13, %c0_51, %c0_52], %81 {strides = array<i32>} : memref<31x2x128xf32, #tpu.memory_space<vmem>>, vector<1x2x128xf32>,
    %82 = vector.extract_strided_slice %25 {offsets = [28, 0], sizes = [2, 128], strides = [1, 1]} : vector<62x128xf32> to vector<2x128xf32>
    %c14 = arith.constant 14 : index
    %c0_53 = arith.constant 0 : index
    %c0_54 = arith.constant 0 : index
    %83 = vector.load %arg11[%c14, %c0_53, %c0_54] : memref<31x2x128xf32, #tpu.memory_space<vmem>>, vector<1x2x128xf32>
    %84 = vector.shape_cast %83 : vector<1x2x128xf32> to vector<2x128xf32>
    %85 = vector.shape_cast %82 : vector<2x128xf32> to vector<1x2x128xf32>
    tpu.vector_store %arg11[%c14, %c0_53, %c0_54], %85 {strides = array<i32>} : memref<31x2x128xf32, #tpu.memory_space<vmem>>, vector<1x2x128xf32>,
    %86 = vector.extract_strided_slice %25 {offsets = [30, 0], sizes = [2, 128], strides = [1, 1]} : vector<62x128xf32> to vector<2x128xf32>
    %c15 = arith.constant 15 : index
    %c0_55 = arith.constant 0 : index
    %c0_56 = arith.constant 0 : index
    %87 = vector.load %arg11[%c15, %c0_55, %c0_56] : memref<31x2x128xf32, #tpu.memory_space<vmem>>, vector<1x2x128xf32>
    %88 = vector.shape_cast %87 : vector<1x2x128xf32> to vector<2x128xf32>
    %89 = vector.shape_cast %86 : vector<2x128xf32> to vector<1x2x128xf32>
    tpu.vector_store %arg11[%c15, %c0_55, %c0_56], %89 {strides = array<i32>} : memref<31x2x128xf32, #tpu.memory_space<vmem>>, vector<1x2x128xf32>,
    %90 = vector.extract_strided_slice %25 {offsets = [32, 0], sizes = [2, 128], strides = [1, 1]} : vector<62x128xf32> to vector<2x128xf32>
    %c16 = arith.constant 16 : index
    %c0_57 = arith.constant 0 : index
    %c0_58 = arith.constant 0 : index
    %91 = vector.load %arg11[%c16, %c0_57, %c0_58] : memref<31x2x128xf32, #tpu.memory_space<vmem>>, vector<1x2x128xf32>
    %92 = vector.shape_cast %91 : vector<1x2x128xf32> to vector<2x128xf32>
    %93 = vector.shape_cast %90 : vector<2x128xf32> to vector<1x2x128xf32>
    tpu.vector_store %arg11[%c16, %c0_57, %c0_58], %93 {strides = array<i32>} : memref<31x2x128xf32, #tpu.memory_space<vmem>>, vector<1x2x128xf32>,
    %94 = vector.extract_strided_slice %25 {offsets = [34, 0], sizes = [2, 128], strides = [1, 1]} : vector<62x128xf32> to vector<2x128xf32>
    %c17 = arith.constant 17 : index
    %c0_59 = arith.constant 0 : index
    %c0_60 = arith.constant 0 : index
    %95 = vector.load %arg11[%c17, %c0_59, %c0_60] : memref<31x2x128xf32, #tpu.memory_space<vmem>>, vector<1x2x128xf32>
    %96 = vector.shape_cast %95 : vector<1x2x128xf32> to vector<2x128xf32>
    %97 = vector.shape_cast %94 : vector<2x128xf32> to vector<1x2x128xf32>
    tpu.vector_store %arg11[%c17, %c0_59, %c0_60], %97 {strides = array<i32>} : memref<31x2x128xf32, #tpu.memory_space<vmem>>, vector<1x2x128xf32>,
    %98 = vector.extract_strided_slice %25 {offsets = [36, 0], sizes = [2, 128], strides = [1, 1]} : vector<62x128xf32> to vector<2x128xf32>
    %c18 = arith.constant 18 : index
    %c0_61 = arith.constant 0 : index
    %c0_62 = arith.constant 0 : index
    %99 = vector.load %arg11[%c18, %c0_61, %c0_62] : memref<31x2x128xf32, #tpu.memory_space<vmem>>, vector<1x2x128xf32>
    %100 = vector.shape_cast %99 : vector<1x2x128xf32> to vector<2x128xf32>
    %101 = vector.shape_cast %98 : vector<2x128xf32> to vector<1x2x128xf32>
    tpu.vector_store %arg11[%c18, %c0_61, %c0_62], %101 {strides = array<i32>} : memref<31x2x128xf32, #tpu.memory_space<vmem>>, vector<1x2x128xf32>,
    %102 = vector.extract_strided_slice %25 {offsets = [38, 0], sizes = [2, 128], strides = [1, 1]} : vector<62x128xf32> to vector<2x128xf32>
    %c19 = arith.constant 19 : index
    %c0_63 = arith.constant 0 : index
    %c0_64 = arith.constant 0 : index
    %103 = vector.load %arg11[%c19, %c0_63, %c0_64] : memref<31x2x128xf32, #tpu.memory_space<vmem>>, vector<1x2x128xf32>
    %104 = vector.shape_cast %103 : vector<1x2x128xf32> to vector<2x128xf32>
    %105 = vector.shape_cast %102 : vector<2x128xf32> to vector<1x2x128xf32>
    tpu.vector_store %arg11[%c19, %c0_63, %c0_64], %105 {strides = array<i32>} : memref<31x2x128xf32, #tpu.memory_space<vmem>>, vector<1x2x128xf32>,
    %106 = vector.extract_strided_slice %25 {offsets = [40, 0], sizes = [2, 128], strides = [1, 1]} : vector<62x128xf32> to vector<2x128xf32>
    %c20 = arith.constant 20 : index
    %c0_65 = arith.constant 0 : index
    %c0_66 = arith.constant 0 : index
    %107 = vector.load %arg11[%c20, %c0_65, %c0_66] : memref<31x2x128xf32, #tpu.memory_space<vmem>>, vector<1x2x128xf32>
    %108 = vector.shape_cast %107 : vector<1x2x128xf32> to vector<2x128xf32>
    %109 = vector.shape_cast %106 : vector<2x128xf32> to vector<1x2x128xf32>
    tpu.vector_store %arg11[%c20, %c0_65, %c0_66], %109 {strides = array<i32>} : memref<31x2x128xf32, #tpu.memory_space<vmem>>, vector<1x2x128xf32>,
    %110 = vector.extract_strided_slice %25 {offsets = [42, 0], sizes = [2, 128], strides = [1, 1]} : vector<62x128xf32> to vector<2x128xf32>
    %c21 = arith.constant 21 : index
    %c0_67 = arith.constant 0 : index
    %c0_68 = arith.constant 0 : index
    %111 = vector.load %arg11[%c21, %c0_67, %c0_68] : memref<31x2x128xf32, #tpu.memory_space<vmem>>, vector<1x2x128xf32>
    %112 = vector.shape_cast %111 : vector<1x2x128xf32> to vector<2x128xf32>
    %113 = vector.shape_cast %110 : vector<2x128xf32> to vector<1x2x128xf32>
    tpu.vector_store %arg11[%c21, %c0_67, %c0_68], %113 {strides = array<i32>} : memref<31x2x128xf32, #tpu.memory_space<vmem>>, vector<1x2x128xf32>,
    %114 = vector.extract_strided_slice %25 {offsets = [44, 0], sizes = [2, 128], strides = [1, 1]} : vector<62x128xf32> to vector<2x128xf32>
    %c22 = arith.constant 22 : index
    %c0_69 = arith.constant 0 : index
    %c0_70 = arith.constant 0 : index
    %115 = vector.load %arg11[%c22, %c0_69, %c0_70] : memref<31x2x128xf32, #tpu.memory_space<vmem>>, vector<1x2x128xf32>
    %116 = vector.shape_cast %115 : vector<1x2x128xf32> to vector<2x128xf32>
    %117 = vector.shape_cast %114 : vector<2x128xf32> to vector<1x2x128xf32>
    tpu.vector_store %arg11[%c22, %c0_69, %c0_70], %117 {strides = array<i32>} : memref<31x2x128xf32, #tpu.memory_space<vmem>>, vector<1x2x128xf32>,
    %118 = vector.extract_strided_slice %25 {offsets = [46, 0], sizes = [2, 128], strides = [1, 1]} : vector<62x128xf32> to vector<2x128xf32>
    %c23 = arith.constant 23 : index
    %c0_71 = arith.constant 0 : index
    %c0_72 = arith.constant 0 : index
    %119 = vector.load %arg11[%c23, %c0_71, %c0_72] : memref<31x2x128xf32, #tpu.memory_space<vmem>>, vector<1x2x128xf32>
    %120 = vector.shape_cast %119 : vector<1x2x128xf32> to vector<2x128xf32>
    %121 = vector.shape_cast %118 : vector<2x128xf32> to vector<1x2x128xf32>
    tpu.vector_store %arg11[%c23, %c0_71, %c0_72], %121 {strides = array<i32>} : memref<31x2x128xf32, #tpu.memory_space<vmem>>, vector<1x2x128xf32>,
    %122 = vector.extract_strided_slice %25 {offsets = [48, 0], sizes = [2, 128], strides = [1, 1]} : vector<62x128xf32> to vector<2x128xf32>
    %c24 = arith.constant 24 : index
    %c0_73 = arith.constant 0 : index
    %c0_74 = arith.constant 0 : index
    %123 = vector.load %arg11[%c24, %c0_73, %c0_74] : memref<31x2x128xf32, #tpu.memory_space<vmem>>, vector<1x2x128xf32>
    %124 = vector.shape_cast %123 : vector<1x2x128xf32> to vector<2x128xf32>
    %125 = vector.shape_cast %122 : vector<2x128xf32> to vector<1x2x128xf32>
    tpu.vector_store %arg11[%c24, %c0_73, %c0_74], %125 {strides = array<i32>} : memref<31x2x128xf32, #tpu.memory_space<vmem>>, vector<1x2x128xf32>,
    %126 = vector.extract_strided_slice %25 {offsets = [50, 0], sizes = [2, 128], strides = [1, 1]} : vector<62x128xf32> to vector<2x128xf32>
    %c25 = arith.constant 25 : index
    %c0_75 = arith.constant 0 : index
    %c0_76 = arith.constant 0 : index
    %127 = vector.load %arg11[%c25, %c0_75, %c0_76] : memref<31x2x128xf32, #tpu.memory_space<vmem>>, vector<1x2x128xf32>
    %128 = vector.shape_cast %127 : vector<1x2x128xf32> to vector<2x128xf32>
    %129 = vector.shape_cast %126 : vector<2x128xf32> to vector<1x2x128xf32>
    tpu.vector_store %arg11[%c25, %c0_75, %c0_76], %129 {strides = array<i32>} : memref<31x2x128xf32, #tpu.memory_space<vmem>>, vector<1x2x128xf32>,
    %130 = vector.extract_strided_slice %25 {offsets = [52, 0], sizes = [2, 128], strides = [1, 1]} : vector<62x128xf32> to vector<2x128xf32>
    %c26 = arith.constant 26 : index
    %c0_77 = arith.constant 0 : index
    %c0_78 = arith.constant 0 : index
    %131 = vector.load %arg11[%c26, %c0_77, %c0_78] : memref<31x2x128xf32, #tpu.memory_space<vmem>>, vector<1x2x128xf32>
    %132 = vector.shape_cast %131 : vector<1x2x128xf32> to vector<2x128xf32>
    %133 = vector.shape_cast %130 : vector<2x128xf32> to vector<1x2x128xf32>
    tpu.vector_store %arg11[%c26, %c0_77, %c0_78], %133 {strides = array<i32>} : memref<31x2x128xf32, #tpu.memory_space<vmem>>, vector<1x2x128xf32>,
    %134 = vector.extract_strided_slice %25 {offsets = [54, 0], sizes = [2, 128], strides = [1, 1]} : vector<62x128xf32> to vector<2x128xf32>
    %c27 = arith.constant 27 : index
    %c0_79 = arith.constant 0 : index
    %c0_80 = arith.constant 0 : index
    %135 = vector.load %arg11[%c27, %c0_79, %c0_80] : memref<31x2x128xf32, #tpu.memory_space<vmem>>, vector<1x2x128xf32>
    %136 = vector.shape_cast %135 : vector<1x2x128xf32> to vector<2x128xf32>
    %137 = vector.shape_cast %134 : vector<2x128xf32> to vector<1x2x128xf32>
    tpu.vector_store %arg11[%c27, %c0_79, %c0_80], %137 {strides = array<i32>} : memref<31x2x128xf32, #tpu.memory_space<vmem>>, vector<1x2x128xf32>,
    %138 = vector.extract_strided_slice %25 {offsets = [56, 0], sizes = [2, 128], strides = [1, 1]} : vector<62x128xf32> to vector<2x128xf32>
    %c28 = arith.constant 28 : index
    %c0_81 = arith.constant 0 : index
    %c0_82 = arith.constant 0 : index
    %139 = vector.load %arg11[%c28, %c0_81, %c0_82] : memref<31x2x128xf32, #tpu.memory_space<vmem>>, vector<1x2x128xf32>
    %140 = vector.shape_cast %139 : vector<1x2x128xf32> to vector<2x128xf32>
    %141 = vector.shape_cast %138 : vector<2x128xf32> to vector<1x2x128xf32>
    tpu.vector_store %arg11[%c28, %c0_81, %c0_82], %141 {strides = array<i32>} : memref<31x2x128xf32, #tpu.memory_space<vmem>>, vector<1x2x128xf32>,
    %142 = vector.extract_strided_slice %25 {offsets = [58, 0], sizes = [2, 128], strides = [1, 1]} : vector<62x128xf32> to vector<2x128xf32>
    %c29 = arith.constant 29 : index
    %c0_83 = arith.constant 0 : index
    %c0_84 = arith.constant 0 : index
    %143 = vector.load %arg11[%c29, %c0_83, %c0_84] : memref<31x2x128xf32, #tpu.memory_space<vmem>>, vector<1x2x128xf32>
    %144 = vector.shape_cast %143 : vector<1x2x128xf32> to vector<2x128xf32>
    %145 = vector.shape_cast %142 : vector<2x128xf32> to vector<1x2x128xf32>
    tpu.vector_store %arg11[%c29, %c0_83, %c0_84], %145 {strides = array<i32>} : memref<31x2x128xf32, #tpu.memory_space<vmem>>, vector<1x2x128xf32>,
    %146 = vector.extract_strided_slice %25 {offsets = [60, 0], sizes = [2, 128], strides = [1, 1]} : vector<62x128xf32> to vector<2x128xf32>
    %c30 = arith.constant 30 : index
    %c0_85 = arith.constant 0 : index
    %c0_86 = arith.constant 0 : index
    %147 = vector.load %arg11[%c30, %c0_85, %c0_86] : memref<31x2x128xf32, #tpu.memory_space<vmem>>, vector<1x2x128xf32>
    %148 = vector.shape_cast %147 : vector<1x2x128xf32> to vector<2x128xf32>
    %149 = vector.shape_cast %146 : vector<2x128xf32> to vector<1x2x128xf32>
    tpu.vector_store %arg11[%c30, %c0_85, %c0_86], %149 {strides = array<i32>} : memref<31x2x128xf32, #tpu.memory_space<vmem>>, vector<1x2x128xf32>,
    %c0_87 = arith.constant 0 : index
    %c0_88 = arith.constant 0 : index
    %150 = vector.load %arg5[%c0_87, %c0_88] : memref<32x128xf32, #tpu.memory_space<vmem>>, vector<32x128xf32>
    %151 = tpu.iota {dimensions = array<i32: 1>} : vector<1x128xi32>
    %c64_i32 = arith.constant 64 : i32
    %152 = vector.broadcast %c64_i32 : i32 to vector<1x128xi32>
    %153 = arith.cmpi sge, %151, %152 : vector<1x128xi32>
    %c96_i32 = arith.constant 96 : i32
    %154 = vector.broadcast %c96_i32 : i32 to vector<1x128xi32>
    %155 = arith.cmpi slt, %151, %154 : vector<1x128xi32>
    %156 = arith.andi %153, %155 : vector<1x128xi1>
    %cst_89 = arith.constant 1.000000e+00 : f32
    %cst_90 = arith.constant 5.000000e-01 : f32
    %157 = vector.broadcast %cst_89 : f32 to vector<1x128xf32>
    %158 = vector.broadcast %cst_90 : f32 to vector<1x128xf32>
    %159 = arith.select %156, %157, %158 : vector<1x128xi1>, vector<1x128xf32>
    %cst_91 = arith.constant 0.000000e+00 : f32
    %cst_92 = arith.constant 5.000000e-01 : f32
    %160 = vector.broadcast %cst_91 : f32 to vector<1x128xf32>
    %161 = vector.broadcast %cst_92 : f32 to vector<1x128xf32>
    %162 = arith.select %156, %160, %161 : vector<1x128xi1>, vector<1x128xf32>
    %cst_93 = arith.constant 0.000000e+00 : f32
    %163 = vector.broadcast %cst_93 : f32 to vector<2x32xf32>
    %cst_94 = arith.constant 0.000000e+00 : f32
    %164 = vector.broadcast %cst_94 : f32 to vector<2x32xf32>
    %c0_95 = arith.constant 0 : index
    %c0_96 = arith.constant 0 : index
    %c0_97 = arith.constant 0 : index
    %165 = vector.load %arg11[%c0_95, %c0_96, %c0_97] : memref<31x2x128xf32, #tpu.memory_space<vmem>>, vector<1x2x128xf32>
    %166 = vector.shape_cast %165 : vector<1x2x128xf32> to vector<2x128xf32>
    %cst_98 = arith.constant dense<0.000000e+00> : vector<2x128xf32>
    %167 = tpu.matmul %163, %150, %cst_98 {dimension_numbers = #tpu.dot_dimension_numbers<[1], [0], [0], [1], [0, 0, 1, 1], [], []>} : vector<2x32xf32>, vector<32x128xf32>, vector<2x128xf32> -> vector<2x128xf32>
    %168 = arith.addf %166, %167 : vector<2x128xf32>
    %169 = vector.broadcast %159 : vector<1x128xf32> to vector<2x128xf32>
    %170 = arith.mulf %168, %169 : vector<2x128xf32>
    %171 = math.tanh %170 : vector<2x128xf32>
    %172 = vector.broadcast %159 : vector<1x128xf32> to vector<2x128xf32>
    %173 = arith.mulf %171, %172 : vector<2x128xf32>
    %174 = vector.broadcast %162 : vector<1x128xf32> to vector<2x128xf32>
    %175 = arith.addf %173, %174 : vector<2x128xf32>
    %176 = vector.extract_strided_slice %175 {offsets = [0, 0], sizes = [2, 32], strides = [1, 1]} : vector<2x128xf32> to vector<2x32xf32>
    %177 = vector.extract_strided_slice %175 {offsets = [0, 32], sizes = [2, 32], strides = [1, 1]} : vector<2x128xf32> to vector<2x32xf32>
    %178 = vector.extract_strided_slice %175 {offsets = [0, 64], sizes = [2, 32], strides = [1, 1]} : vector<2x128xf32> to vector<2x32xf32>
    %179 = vector.extract_strided_slice %175 {offsets = [0, 96], sizes = [2, 32], strides = [1, 1]} : vector<2x128xf32> to vector<2x32xf32>
    %180 = arith.mulf %177, %164 : vector<2x32xf32>
    %181 = arith.mulf %176, %178 : vector<2x32xf32>
    %182 = arith.addf %180, %181 : vector<2x32xf32>
    %183 = math.tanh %182 : vector<2x32xf32>
    %184 = arith.mulf %179, %183 : vector<2x32xf32>
    %c1_99 = arith.constant 1 : index
    %c0_100 = arith.constant 0 : index
    %c0_101 = arith.constant 0 : index
    %185 = vector.load %arg11[%c1_99, %c0_100, %c0_101] : memref<31x2x128xf32, #tpu.memory_space<vmem>>, vector<1x2x128xf32>
    %186 = vector.shape_cast %185 : vector<1x2x128xf32> to vector<2x128xf32>
    %cst_102 = arith.constant dense<0.000000e+00> : vector<2x128xf32>
    %187 = tpu.matmul %184, %150, %cst_102 {dimension_numbers = #tpu.dot_dimension_numbers<[1], [0], [0], [1], [0, 0, 1, 1], [], []>} : vector<2x32xf32>, vector<32x128xf32>, vector<2x128xf32> -> vector<2x128xf32>
    %188 = arith.addf %186, %187 : vector<2x128xf32>
    %189 = vector.broadcast %159 : vector<1x128xf32> to vector<2x128xf32>
    %190 = arith.mulf %188, %189 : vector<2x128xf32>
    %191 = math.tanh %190 : vector<2x128xf32>
    %192 = vector.broadcast %159 : vector<1x128xf32> to vector<2x128xf32>
    %193 = arith.mulf %191, %192 : vector<2x128xf32>
    %194 = vector.broadcast %162 : vector<1x128xf32> to vector<2x128xf32>
    %195 = arith.addf %193, %194 : vector<2x128xf32>
    %196 = vector.extract_strided_slice %195 {offsets = [0, 0], sizes = [2, 32], strides = [1, 1]} : vector<2x128xf32> to vector<2x32xf32>
    %197 = vector.extract_strided_slice %195 {offsets = [0, 32], sizes = [2, 32], strides = [1, 1]} : vector<2x128xf32> to vector<2x32xf32>
    %198 = vector.extract_strided_slice %195 {offsets = [0, 64], sizes = [2, 32], strides = [1, 1]} : vector<2x128xf32> to vector<2x32xf32>
    %199 = vector.extract_strided_slice %195 {offsets = [0, 96], sizes = [2, 32], strides = [1, 1]} : vector<2x128xf32> to vector<2x32xf32>
    %200 = arith.mulf %197, %182 : vector<2x32xf32>
    %201 = arith.mulf %196, %198 : vector<2x32xf32>
    %202 = arith.addf %200, %201 : vector<2x32xf32>
    %203 = math.tanh %202 : vector<2x32xf32>
    %204 = arith.mulf %199, %203 : vector<2x32xf32>
    %c2_103 = arith.constant 2 : index
    %c0_104 = arith.constant 0 : index
    %c0_105 = arith.constant 0 : index
    %205 = vector.load %arg11[%c2_103, %c0_104, %c0_105] : memref<31x2x128xf32, #tpu.memory_space<vmem>>, vector<1x2x128xf32>
    %206 = vector.shape_cast %205 : vector<1x2x128xf32> to vector<2x128xf32>
    %cst_106 = arith.constant dense<0.000000e+00> : vector<2x128xf32>
    %207 = tpu.matmul %204, %150, %cst_106 {dimension_numbers = #tpu.dot_dimension_numbers<[1], [0], [0], [1], [0, 0, 1, 1], [], []>} : vector<2x32xf32>, vector<32x128xf32>, vector<2x128xf32> -> vector<2x128xf32>
    %208 = arith.addf %206, %207 : vector<2x128xf32>
    %209 = vector.broadcast %159 : vector<1x128xf32> to vector<2x128xf32>
    %210 = arith.mulf %208, %209 : vector<2x128xf32>
    %211 = math.tanh %210 : vector<2x128xf32>
    %212 = vector.broadcast %159 : vector<1x128xf32> to vector<2x128xf32>
    %213 = arith.mulf %211, %212 : vector<2x128xf32>
    %214 = vector.broadcast %162 : vector<1x128xf32> to vector<2x128xf32>
    %215 = arith.addf %213, %214 : vector<2x128xf32>
    %216 = vector.extract_strided_slice %215 {offsets = [0, 0], sizes = [2, 32], strides = [1, 1]} : vector<2x128xf32> to vector<2x32xf32>
    %217 = vector.extract_strided_slice %215 {offsets = [0, 32], sizes = [2, 32], strides = [1, 1]} : vector<2x128xf32> to vector<2x32xf32>
    %218 = vector.extract_strided_slice %215 {offsets = [0, 64], sizes = [2, 32], strides = [1, 1]} : vector<2x128xf32> to vector<2x32xf32>
    %219 = vector.extract_strided_slice %215 {offsets = [0, 96], sizes = [2, 32], strides = [1, 1]} : vector<2x128xf32> to vector<2x32xf32>
    %220 = arith.mulf %217, %202 : vector<2x32xf32>
    %221 = arith.mulf %216, %218 : vector<2x32xf32>
    %222 = arith.addf %220, %221 : vector<2x32xf32>
    %223 = math.tanh %222 : vector<2x32xf32>
    %224 = arith.mulf %219, %223 : vector<2x32xf32>
    %c3_107 = arith.constant 3 : index
    %c0_108 = arith.constant 0 : index
    %c0_109 = arith.constant 0 : index
    %225 = vector.load %arg11[%c3_107, %c0_108, %c0_109] : memref<31x2x128xf32, #tpu.memory_space<vmem>>, vector<1x2x128xf32>
    %226 = vector.shape_cast %225 : vector<1x2x128xf32> to vector<2x128xf32>
    %cst_110 = arith.constant dense<0.000000e+00> : vector<2x128xf32>
    %227 = tpu.matmul %224, %150, %cst_110 {dimension_numbers = #tpu.dot_dimension_numbers<[1], [0], [0], [1], [0, 0, 1, 1], [], []>} : vector<2x32xf32>, vector<32x128xf32>, vector<2x128xf32> -> vector<2x128xf32>
    %228 = arith.addf %226, %227 : vector<2x128xf32>
    %229 = vector.broadcast %159 : vector<1x128xf32> to vector<2x128xf32>
    %230 = arith.mulf %228, %229 : vector<2x128xf32>
    %231 = math.tanh %230 : vector<2x128xf32>
    %232 = vector.broadcast %159 : vector<1x128xf32> to vector<2x128xf32>
    %233 = arith.mulf %231, %232 : vector<2x128xf32>
    %234 = vector.broadcast %162 : vector<1x128xf32> to vector<2x128xf32>
    %235 = arith.addf %233, %234 : vector<2x128xf32>
    %236 = vector.extract_strided_slice %235 {offsets = [0, 0], sizes = [2, 32], strides = [1, 1]} : vector<2x128xf32> to vector<2x32xf32>
    %237 = vector.extract_strided_slice %235 {offsets = [0, 32], sizes = [2, 32], strides = [1, 1]} : vector<2x128xf32> to vector<2x32xf32>
    %238 = vector.extract_strided_slice %235 {offsets = [0, 64], sizes = [2, 32], strides = [1, 1]} : vector<2x128xf32> to vector<2x32xf32>
    %239 = vector.extract_strided_slice %235 {offsets = [0, 96], sizes = [2, 32], strides = [1, 1]} : vector<2x128xf32> to vector<2x32xf32>
    %240 = arith.mulf %237, %222 : vector<2x32xf32>
    %241 = arith.mulf %236, %238 : vector<2x32xf32>
    %242 = arith.addf %240, %241 : vector<2x32xf32>
    %243 = math.tanh %242 : vector<2x32xf32>
    %244 = arith.mulf %239, %243 : vector<2x32xf32>
    %c4_111 = arith.constant 4 : index
    %c0_112 = arith.constant 0 : index
    %c0_113 = arith.constant 0 : index
    %245 = vector.load %arg11[%c4_111, %c0_112, %c0_113] : memref<31x2x128xf32, #tpu.memory_space<vmem>>, vector<1x2x128xf32>
    %246 = vector.shape_cast %245 : vector<1x2x128xf32> to vector<2x128xf32>
    %cst_114 = arith.constant dense<0.000000e+00> : vector<2x128xf32>
    %247 = tpu.matmul %244, %150, %cst_114 {dimension_numbers = #tpu.dot_dimension_numbers<[1], [0], [0], [1], [0, 0, 1, 1], [], []>} : vector<2x32xf32>, vector<32x128xf32>, vector<2x128xf32> -> vector<2x128xf32>
    %248 = arith.addf %246, %247 : vector<2x128xf32>
    %249 = vector.broadcast %159 : vector<1x128xf32> to vector<2x128xf32>
    %250 = arith.mulf %248, %249 : vector<2x128xf32>
    %251 = math.tanh %250 : vector<2x128xf32>
    %252 = vector.broadcast %159 : vector<1x128xf32> to vector<2x128xf32>
    %253 = arith.mulf %251, %252 : vector<2x128xf32>
    %254 = vector.broadcast %162 : vector<1x128xf32> to vector<2x128xf32>
    %255 = arith.addf %253, %254 : vector<2x128xf32>
    %256 = vector.extract_strided_slice %255 {offsets = [0, 0], sizes = [2, 32], strides = [1, 1]} : vector<2x128xf32> to vector<2x32xf32>
    %257 = vector.extract_strided_slice %255 {offsets = [0, 32], sizes = [2, 32], strides = [1, 1]} : vector<2x128xf32> to vector<2x32xf32>
    %258 = vector.extract_strided_slice %255 {offsets = [0, 64], sizes = [2, 32], strides = [1, 1]} : vector<2x128xf32> to vector<2x32xf32>
    %259 = vector.extract_strided_slice %255 {offsets = [0, 96], sizes = [2, 32], strides = [1, 1]} : vector<2x128xf32> to vector<2x32xf32>
    %260 = arith.mulf %257, %242 : vector<2x32xf32>
    %261 = arith.mulf %256, %258 : vector<2x32xf32>
    %262 = arith.addf %260, %261 : vector<2x32xf32>
    %263 = math.tanh %262 : vector<2x32xf32>
    %264 = arith.mulf %259, %263 : vector<2x32xf32>
    %c5_115 = arith.constant 5 : index
    %c0_116 = arith.constant 0 : index
    %c0_117 = arith.constant 0 : index
    %265 = vector.load %arg11[%c5_115, %c0_116, %c0_117] : memref<31x2x128xf32, #tpu.memory_space<vmem>>, vector<1x2x128xf32>
    %266 = vector.shape_cast %265 : vector<1x2x128xf32> to vector<2x128xf32>
    %cst_118 = arith.constant dense<0.000000e+00> : vector<2x128xf32>
    %267 = tpu.matmul %264, %150, %cst_118 {dimension_numbers = #tpu.dot_dimension_numbers<[1], [0], [0], [1], [0, 0, 1, 1], [], []>} : vector<2x32xf32>, vector<32x128xf32>, vector<2x128xf32> -> vector<2x128xf32>
    %268 = arith.addf %266, %267 : vector<2x128xf32>
    %269 = vector.broadcast %159 : vector<1x128xf32> to vector<2x128xf32>
    %270 = arith.mulf %268, %269 : vector<2x128xf32>
    %271 = math.tanh %270 : vector<2x128xf32>
    %272 = vector.broadcast %159 : vector<1x128xf32> to vector<2x128xf32>
    %273 = arith.mulf %271, %272 : vector<2x128xf32>
    %274 = vector.broadcast %162 : vector<1x128xf32> to vector<2x128xf32>
    %275 = arith.addf %273, %274 : vector<2x128xf32>
    %276 = vector.extract_strided_slice %275 {offsets = [0, 0], sizes = [2, 32], strides = [1, 1]} : vector<2x128xf32> to vector<2x32xf32>
    %277 = vector.extract_strided_slice %275 {offsets = [0, 32], sizes = [2, 32], strides = [1, 1]} : vector<2x128xf32> to vector<2x32xf32>
    %278 = vector.extract_strided_slice %275 {offsets = [0, 64], sizes = [2, 32], strides = [1, 1]} : vector<2x128xf32> to vector<2x32xf32>
    %279 = vector.extract_strided_slice %275 {offsets = [0, 96], sizes = [2, 32], strides = [1, 1]} : vector<2x128xf32> to vector<2x32xf32>
    %280 = arith.mulf %277, %262 : vector<2x32xf32>
    %281 = arith.mulf %276, %278 : vector<2x32xf32>
    %282 = arith.addf %280, %281 : vector<2x32xf32>
    %283 = math.tanh %282 : vector<2x32xf32>
    %284 = arith.mulf %279, %283 : vector<2x32xf32>
    %c6_119 = arith.constant 6 : index
    %c0_120 = arith.constant 0 : index
    %c0_121 = arith.constant 0 : index
    %285 = vector.load %arg11[%c6_119, %c0_120, %c0_121] : memref<31x2x128xf32, #tpu.memory_space<vmem>>, vector<1x2x128xf32>
    %286 = vector.shape_cast %285 : vector<1x2x128xf32> to vector<2x128xf32>
    %cst_122 = arith.constant dense<0.000000e+00> : vector<2x128xf32>
    %287 = tpu.matmul %284, %150, %cst_122 {dimension_numbers = #tpu.dot_dimension_numbers<[1], [0], [0], [1], [0, 0, 1, 1], [], []>} : vector<2x32xf32>, vector<32x128xf32>, vector<2x128xf32> -> vector<2x128xf32>
    %288 = arith.addf %286, %287 : vector<2x128xf32>
    %289 = vector.broadcast %159 : vector<1x128xf32> to vector<2x128xf32>
    %290 = arith.mulf %288, %289 : vector<2x128xf32>
    %291 = math.tanh %290 : vector<2x128xf32>
    %292 = vector.broadcast %159 : vector<1x128xf32> to vector<2x128xf32>
    %293 = arith.mulf %291, %292 : vector<2x128xf32>
    %294 = vector.broadcast %162 : vector<1x128xf32> to vector<2x128xf32>
    %295 = arith.addf %293, %294 : vector<2x128xf32>
    %296 = vector.extract_strided_slice %295 {offsets = [0, 0], sizes = [2, 32], strides = [1, 1]} : vector<2x128xf32> to vector<2x32xf32>
    %297 = vector.extract_strided_slice %295 {offsets = [0, 32], sizes = [2, 32], strides = [1, 1]} : vector<2x128xf32> to vector<2x32xf32>
    %298 = vector.extract_strided_slice %295 {offsets = [0, 64], sizes = [2, 32], strides = [1, 1]} : vector<2x128xf32> to vector<2x32xf32>
    %299 = vector.extract_strided_slice %295 {offsets = [0, 96], sizes = [2, 32], strides = [1, 1]} : vector<2x128xf32> to vector<2x32xf32>
    %300 = arith.mulf %297, %282 : vector<2x32xf32>
    %301 = arith.mulf %296, %298 : vector<2x32xf32>
    %302 = arith.addf %300, %301 : vector<2x32xf32>
    %303 = math.tanh %302 : vector<2x32xf32>
    %304 = arith.mulf %299, %303 : vector<2x32xf32>
    %c7_123 = arith.constant 7 : index
    %c0_124 = arith.constant 0 : index
    %c0_125 = arith.constant 0 : index
    %305 = vector.load %arg11[%c7_123, %c0_124, %c0_125] : memref<31x2x128xf32, #tpu.memory_space<vmem>>, vector<1x2x128xf32>
    %306 = vector.shape_cast %305 : vector<1x2x128xf32> to vector<2x128xf32>
    %cst_126 = arith.constant dense<0.000000e+00> : vector<2x128xf32>
    %307 = tpu.matmul %304, %150, %cst_126 {dimension_numbers = #tpu.dot_dimension_numbers<[1], [0], [0], [1], [0, 0, 1, 1], [], []>} : vector<2x32xf32>, vector<32x128xf32>, vector<2x128xf32> -> vector<2x128xf32>
    %308 = arith.addf %306, %307 : vector<2x128xf32>
    %309 = vector.broadcast %159 : vector<1x128xf32> to vector<2x128xf32>
    %310 = arith.mulf %308, %309 : vector<2x128xf32>
    %311 = math.tanh %310 : vector<2x128xf32>
    %312 = vector.broadcast %159 : vector<1x128xf32> to vector<2x128xf32>
    %313 = arith.mulf %311, %312 : vector<2x128xf32>
    %314 = vector.broadcast %162 : vector<1x128xf32> to vector<2x128xf32>
    %315 = arith.addf %313, %314 : vector<2x128xf32>
    %316 = vector.extract_strided_slice %315 {offsets = [0, 0], sizes = [2, 32], strides = [1, 1]} : vector<2x128xf32> to vector<2x32xf32>
    %317 = vector.extract_strided_slice %315 {offsets = [0, 32], sizes = [2, 32], strides = [1, 1]} : vector<2x128xf32> to vector<2x32xf32>
    %318 = vector.extract_strided_slice %315 {offsets = [0, 64], sizes = [2, 32], strides = [1, 1]} : vector<2x128xf32> to vector<2x32xf32>
    %319 = vector.extract_strided_slice %315 {offsets = [0, 96], sizes = [2, 32], strides = [1, 1]} : vector<2x128xf32> to vector<2x32xf32>
    %320 = arith.mulf %317, %302 : vector<2x32xf32>
    %321 = arith.mulf %316, %318 : vector<2x32xf32>
    %322 = arith.addf %320, %321 : vector<2x32xf32>
    %323 = math.tanh %322 : vector<2x32xf32>
    %324 = arith.mulf %319, %323 : vector<2x32xf32>
    %c8_127 = arith.constant 8 : index
    %c0_128 = arith.constant 0 : index
    %c0_129 = arith.constant 0 : index
    %325 = vector.load %arg11[%c8_127, %c0_128, %c0_129] : memref<31x2x128xf32, #tpu.memory_space<vmem>>, vector<1x2x128xf32>
    %326 = vector.shape_cast %325 : vector<1x2x128xf32> to vector<2x128xf32>
    %cst_130 = arith.constant dense<0.000000e+00> : vector<2x128xf32>
    %327 = tpu.matmul %324, %150, %cst_130 {dimension_numbers = #tpu.dot_dimension_numbers<[1], [0], [0], [1], [0, 0, 1, 1], [], []>} : vector<2x32xf32>, vector<32x128xf32>, vector<2x128xf32> -> vector<2x128xf32>
    %328 = arith.addf %326, %327 : vector<2x128xf32>
    %329 = vector.broadcast %159 : vector<1x128xf32> to vector<2x128xf32>
    %330 = arith.mulf %328, %329 : vector<2x128xf32>
    %331 = math.tanh %330 : vector<2x128xf32>
    %332 = vector.broadcast %159 : vector<1x128xf32> to vector<2x128xf32>
    %333 = arith.mulf %331, %332 : vector<2x128xf32>
    %334 = vector.broadcast %162 : vector<1x128xf32> to vector<2x128xf32>
    %335 = arith.addf %333, %334 : vector<2x128xf32>
    %336 = vector.extract_strided_slice %335 {offsets = [0, 0], sizes = [2, 32], strides = [1, 1]} : vector<2x128xf32> to vector<2x32xf32>
    %337 = vector.extract_strided_slice %335 {offsets = [0, 32], sizes = [2, 32], strides = [1, 1]} : vector<2x128xf32> to vector<2x32xf32>
    %338 = vector.extract_strided_slice %335 {offsets = [0, 64], sizes = [2, 32], strides = [1, 1]} : vector<2x128xf32> to vector<2x32xf32>
    %339 = vector.extract_strided_slice %335 {offsets = [0, 96], sizes = [2, 32], strides = [1, 1]} : vector<2x128xf32> to vector<2x32xf32>
    %340 = arith.mulf %337, %322 : vector<2x32xf32>
    %341 = arith.mulf %336, %338 : vector<2x32xf32>
    %342 = arith.addf %340, %341 : vector<2x32xf32>
    %343 = math.tanh %342 : vector<2x32xf32>
    %344 = arith.mulf %339, %343 : vector<2x32xf32>
    %c9_131 = arith.constant 9 : index
    %c0_132 = arith.constant 0 : index
    %c0_133 = arith.constant 0 : index
    %345 = vector.load %arg11[%c9_131, %c0_132, %c0_133] : memref<31x2x128xf32, #tpu.memory_space<vmem>>, vector<1x2x128xf32>
    %346 = vector.shape_cast %345 : vector<1x2x128xf32> to vector<2x128xf32>
    %cst_134 = arith.constant dense<0.000000e+00> : vector<2x128xf32>
    %347 = tpu.matmul %344, %150, %cst_134 {dimension_numbers = #tpu.dot_dimension_numbers<[1], [0], [0], [1], [0, 0, 1, 1], [], []>} : vector<2x32xf32>, vector<32x128xf32>, vector<2x128xf32> -> vector<2x128xf32>
    %348 = arith.addf %346, %347 : vector<2x128xf32>
    %349 = vector.broadcast %159 : vector<1x128xf32> to vector<2x128xf32>
    %350 = arith.mulf %348, %349 : vector<2x128xf32>
    %351 = math.tanh %350 : vector<2x128xf32>
    %352 = vector.broadcast %159 : vector<1x128xf32> to vector<2x128xf32>
    %353 = arith.mulf %351, %352 : vector<2x128xf32>
    %354 = vector.broadcast %162 : vector<1x128xf32> to vector<2x128xf32>
    %355 = arith.addf %353, %354 : vector<2x128xf32>
    %356 = vector.extract_strided_slice %355 {offsets = [0, 0], sizes = [2, 32], strides = [1, 1]} : vector<2x128xf32> to vector<2x32xf32>
    %357 = vector.extract_strided_slice %355 {offsets = [0, 32], sizes = [2, 32], strides = [1, 1]} : vector<2x128xf32> to vector<2x32xf32>
    %358 = vector.extract_strided_slice %355 {offsets = [0, 64], sizes = [2, 32], strides = [1, 1]} : vector<2x128xf32> to vector<2x32xf32>
    %359 = vector.extract_strided_slice %355 {offsets = [0, 96], sizes = [2, 32], strides = [1, 1]} : vector<2x128xf32> to vector<2x32xf32>
    %360 = arith.mulf %357, %342 : vector<2x32xf32>
    %361 = arith.mulf %356, %358 : vector<2x32xf32>
    %362 = arith.addf %360, %361 : vector<2x32xf32>
    %363 = math.tanh %362 : vector<2x32xf32>
    %364 = arith.mulf %359, %363 : vector<2x32xf32>
    %c10_135 = arith.constant 10 : index
    %c0_136 = arith.constant 0 : index
    %c0_137 = arith.constant 0 : index
    %365 = vector.load %arg11[%c10_135, %c0_136, %c0_137] : memref<31x2x128xf32, #tpu.memory_space<vmem>>, vector<1x2x128xf32>
    %366 = vector.shape_cast %365 : vector<1x2x128xf32> to vector<2x128xf32>
    %cst_138 = arith.constant dense<0.000000e+00> : vector<2x128xf32>
    %367 = tpu.matmul %364, %150, %cst_138 {dimension_numbers = #tpu.dot_dimension_numbers<[1], [0], [0], [1], [0, 0, 1, 1], [], []>} : vector<2x32xf32>, vector<32x128xf32>, vector<2x128xf32> -> vector<2x128xf32>
    %368 = arith.addf %366, %367 : vector<2x128xf32>
    %369 = vector.broadcast %159 : vector<1x128xf32> to vector<2x128xf32>
    %370 = arith.mulf %368, %369 : vector<2x128xf32>
    %371 = math.tanh %370 : vector<2x128xf32>
    %372 = vector.broadcast %159 : vector<1x128xf32> to vector<2x128xf32>
    %373 = arith.mulf %371, %372 : vector<2x128xf32>
    %374 = vector.broadcast %162 : vector<1x128xf32> to vector<2x128xf32>
    %375 = arith.addf %373, %374 : vector<2x128xf32>
    %376 = vector.extract_strided_slice %375 {offsets = [0, 0], sizes = [2, 32], strides = [1, 1]} : vector<2x128xf32> to vector<2x32xf32>
    %377 = vector.extract_strided_slice %375 {offsets = [0, 32], sizes = [2, 32], strides = [1, 1]} : vector<2x128xf32> to vector<2x32xf32>
    %378 = vector.extract_strided_slice %375 {offsets = [0, 64], sizes = [2, 32], strides = [1, 1]} : vector<2x128xf32> to vector<2x32xf32>
    %379 = vector.extract_strided_slice %375 {offsets = [0, 96], sizes = [2, 32], strides = [1, 1]} : vector<2x128xf32> to vector<2x32xf32>
    %380 = arith.mulf %377, %362 : vector<2x32xf32>
    %381 = arith.mulf %376, %378 : vector<2x32xf32>
    %382 = arith.addf %380, %381 : vector<2x32xf32>
    %383 = math.tanh %382 : vector<2x32xf32>
    %384 = arith.mulf %379, %383 : vector<2x32xf32>
    %c11_139 = arith.constant 11 : index
    %c0_140 = arith.constant 0 : index
    %c0_141 = arith.constant 0 : index
    %385 = vector.load %arg11[%c11_139, %c0_140, %c0_141] : memref<31x2x128xf32, #tpu.memory_space<vmem>>, vector<1x2x128xf32>
    %386 = vector.shape_cast %385 : vector<1x2x128xf32> to vector<2x128xf32>
    %cst_142 = arith.constant dense<0.000000e+00> : vector<2x128xf32>
    %387 = tpu.matmul %384, %150, %cst_142 {dimension_numbers = #tpu.dot_dimension_numbers<[1], [0], [0], [1], [0, 0, 1, 1], [], []>} : vector<2x32xf32>, vector<32x128xf32>, vector<2x128xf32> -> vector<2x128xf32>
    %388 = arith.addf %386, %387 : vector<2x128xf32>
    %389 = vector.broadcast %159 : vector<1x128xf32> to vector<2x128xf32>
    %390 = arith.mulf %388, %389 : vector<2x128xf32>
    %391 = math.tanh %390 : vector<2x128xf32>
    %392 = vector.broadcast %159 : vector<1x128xf32> to vector<2x128xf32>
    %393 = arith.mulf %391, %392 : vector<2x128xf32>
    %394 = vector.broadcast %162 : vector<1x128xf32> to vector<2x128xf32>
    %395 = arith.addf %393, %394 : vector<2x128xf32>
    %396 = vector.extract_strided_slice %395 {offsets = [0, 0], sizes = [2, 32], strides = [1, 1]} : vector<2x128xf32> to vector<2x32xf32>
    %397 = vector.extract_strided_slice %395 {offsets = [0, 32], sizes = [2, 32], strides = [1, 1]} : vector<2x128xf32> to vector<2x32xf32>
    %398 = vector.extract_strided_slice %395 {offsets = [0, 64], sizes = [2, 32], strides = [1, 1]} : vector<2x128xf32> to vector<2x32xf32>
    %399 = vector.extract_strided_slice %395 {offsets = [0, 96], sizes = [2, 32], strides = [1, 1]} : vector<2x128xf32> to vector<2x32xf32>
    %400 = arith.mulf %397, %382 : vector<2x32xf32>
    %401 = arith.mulf %396, %398 : vector<2x32xf32>
    %402 = arith.addf %400, %401 : vector<2x32xf32>
    %403 = math.tanh %402 : vector<2x32xf32>
    %404 = arith.mulf %399, %403 : vector<2x32xf32>
    %c12_143 = arith.constant 12 : index
    %c0_144 = arith.constant 0 : index
    %c0_145 = arith.constant 0 : index
    %405 = vector.load %arg11[%c12_143, %c0_144, %c0_145] : memref<31x2x128xf32, #tpu.memory_space<vmem>>, vector<1x2x128xf32>
    %406 = vector.shape_cast %405 : vector<1x2x128xf32> to vector<2x128xf32>
    %cst_146 = arith.constant dense<0.000000e+00> : vector<2x128xf32>
    %407 = tpu.matmul %404, %150, %cst_146 {dimension_numbers = #tpu.dot_dimension_numbers<[1], [0], [0], [1], [0, 0, 1, 1], [], []>} : vector<2x32xf32>, vector<32x128xf32>, vector<2x128xf32> -> vector<2x128xf32>
    %408 = arith.addf %406, %407 : vector<2x128xf32>
    %409 = vector.broadcast %159 : vector<1x128xf32> to vector<2x128xf32>
    %410 = arith.mulf %408, %409 : vector<2x128xf32>
    %411 = math.tanh %410 : vector<2x128xf32>
    %412 = vector.broadcast %159 : vector<1x128xf32> to vector<2x128xf32>
    %413 = arith.mulf %411, %412 : vector<2x128xf32>
    %414 = vector.broadcast %162 : vector<1x128xf32> to vector<2x128xf32>
    %415 = arith.addf %413, %414 : vector<2x128xf32>
    %416 = vector.extract_strided_slice %415 {offsets = [0, 0], sizes = [2, 32], strides = [1, 1]} : vector<2x128xf32> to vector<2x32xf32>
    %417 = vector.extract_strided_slice %415 {offsets = [0, 32], sizes = [2, 32], strides = [1, 1]} : vector<2x128xf32> to vector<2x32xf32>
    %418 = vector.extract_strided_slice %415 {offsets = [0, 64], sizes = [2, 32], strides = [1, 1]} : vector<2x128xf32> to vector<2x32xf32>
    %419 = vector.extract_strided_slice %415 {offsets = [0, 96], sizes = [2, 32], strides = [1, 1]} : vector<2x128xf32> to vector<2x32xf32>
    %420 = arith.mulf %417, %402 : vector<2x32xf32>
    %421 = arith.mulf %416, %418 : vector<2x32xf32>
    %422 = arith.addf %420, %421 : vector<2x32xf32>
    %423 = math.tanh %422 : vector<2x32xf32>
    %424 = arith.mulf %419, %423 : vector<2x32xf32>
    %c13_147 = arith.constant 13 : index
    %c0_148 = arith.constant 0 : index
    %c0_149 = arith.constant 0 : index
    %425 = vector.load %arg11[%c13_147, %c0_148, %c0_149] : memref<31x2x128xf32, #tpu.memory_space<vmem>>, vector<1x2x128xf32>
    %426 = vector.shape_cast %425 : vector<1x2x128xf32> to vector<2x128xf32>
    %cst_150 = arith.constant dense<0.000000e+00> : vector<2x128xf32>
    %427 = tpu.matmul %424, %150, %cst_150 {dimension_numbers = #tpu.dot_dimension_numbers<[1], [0], [0], [1], [0, 0, 1, 1], [], []>} : vector<2x32xf32>, vector<32x128xf32>, vector<2x128xf32> -> vector<2x128xf32>
    %428 = arith.addf %426, %427 : vector<2x128xf32>
    %429 = vector.broadcast %159 : vector<1x128xf32> to vector<2x128xf32>
    %430 = arith.mulf %428, %429 : vector<2x128xf32>
    %431 = math.tanh %430 : vector<2x128xf32>
    %432 = vector.broadcast %159 : vector<1x128xf32> to vector<2x128xf32>
    %433 = arith.mulf %431, %432 : vector<2x128xf32>
    %434 = vector.broadcast %162 : vector<1x128xf32> to vector<2x128xf32>
    %435 = arith.addf %433, %434 : vector<2x128xf32>
    %436 = vector.extract_strided_slice %435 {offsets = [0, 0], sizes = [2, 32], strides = [1, 1]} : vector<2x128xf32> to vector<2x32xf32>
    %437 = vector.extract_strided_slice %435 {offsets = [0, 32], sizes = [2, 32], strides = [1, 1]} : vector<2x128xf32> to vector<2x32xf32>
    %438 = vector.extract_strided_slice %435 {offsets = [0, 64], sizes = [2, 32], strides = [1, 1]} : vector<2x128xf32> to vector<2x32xf32>
    %439 = vector.extract_strided_slice %435 {offsets = [0, 96], sizes = [2, 32], strides = [1, 1]} : vector<2x128xf32> to vector<2x32xf32>
    %440 = arith.mulf %437, %422 : vector<2x32xf32>
    %441 = arith.mulf %436, %438 : vector<2x32xf32>
    %442 = arith.addf %440, %441 : vector<2x32xf32>
    %443 = math.tanh %442 : vector<2x32xf32>
    %444 = arith.mulf %439, %443 : vector<2x32xf32>
    %c14_151 = arith.constant 14 : index
    %c0_152 = arith.constant 0 : index
    %c0_153 = arith.constant 0 : index
    %445 = vector.load %arg11[%c14_151, %c0_152, %c0_153] : memref<31x2x128xf32, #tpu.memory_space<vmem>>, vector<1x2x128xf32>
    %446 = vector.shape_cast %445 : vector<1x2x128xf32> to vector<2x128xf32>
    %cst_154 = arith.constant dense<0.000000e+00> : vector<2x128xf32>
    %447 = tpu.matmul %444, %150, %cst_154 {dimension_numbers = #tpu.dot_dimension_numbers<[1], [0], [0], [1], [0, 0, 1, 1], [], []>} : vector<2x32xf32>, vector<32x128xf32>, vector<2x128xf32> -> vector<2x128xf32>
    %448 = arith.addf %446, %447 : vector<2x128xf32>
    %449 = vector.broadcast %159 : vector<1x128xf32> to vector<2x128xf32>
    %450 = arith.mulf %448, %449 : vector<2x128xf32>
    %451 = math.tanh %450 : vector<2x128xf32>
    %452 = vector.broadcast %159 : vector<1x128xf32> to vector<2x128xf32>
    %453 = arith.mulf %451, %452 : vector<2x128xf32>
    %454 = vector.broadcast %162 : vector<1x128xf32> to vector<2x128xf32>
    %455 = arith.addf %453, %454 : vector<2x128xf32>
    %456 = vector.extract_strided_slice %455 {offsets = [0, 0], sizes = [2, 32], strides = [1, 1]} : vector<2x128xf32> to vector<2x32xf32>
    %457 = vector.extract_strided_slice %455 {offsets = [0, 32], sizes = [2, 32], strides = [1, 1]} : vector<2x128xf32> to vector<2x32xf32>
    %458 = vector.extract_strided_slice %455 {offsets = [0, 64], sizes = [2, 32], strides = [1, 1]} : vector<2x128xf32> to vector<2x32xf32>
    %459 = vector.extract_strided_slice %455 {offsets = [0, 96], sizes = [2, 32], strides = [1, 1]} : vector<2x128xf32> to vector<2x32xf32>
    %460 = arith.mulf %457, %442 : vector<2x32xf32>
    %461 = arith.mulf %456, %458 : vector<2x32xf32>
    %462 = arith.addf %460, %461 : vector<2x32xf32>
    %463 = math.tanh %462 : vector<2x32xf32>
    %464 = arith.mulf %459, %463 : vector<2x32xf32>
    %c15_155 = arith.constant 15 : index
    %c0_156 = arith.constant 0 : index
    %c0_157 = arith.constant 0 : index
    %465 = vector.load %arg11[%c15_155, %c0_156, %c0_157] : memref<31x2x128xf32, #tpu.memory_space<vmem>>, vector<1x2x128xf32>
    %466 = vector.shape_cast %465 : vector<1x2x128xf32> to vector<2x128xf32>
    %cst_158 = arith.constant dense<0.000000e+00> : vector<2x128xf32>
    %467 = tpu.matmul %464, %150, %cst_158 {dimension_numbers = #tpu.dot_dimension_numbers<[1], [0], [0], [1], [0, 0, 1, 1], [], []>} : vector<2x32xf32>, vector<32x128xf32>, vector<2x128xf32> -> vector<2x128xf32>
    %468 = arith.addf %466, %467 : vector<2x128xf32>
    %469 = vector.broadcast %159 : vector<1x128xf32> to vector<2x128xf32>
    %470 = arith.mulf %468, %469 : vector<2x128xf32>
    %471 = math.tanh %470 : vector<2x128xf32>
    %472 = vector.broadcast %159 : vector<1x128xf32> to vector<2x128xf32>
    %473 = arith.mulf %471, %472 : vector<2x128xf32>
    %474 = vector.broadcast %162 : vector<1x128xf32> to vector<2x128xf32>
    %475 = arith.addf %473, %474 : vector<2x128xf32>
    %476 = vector.extract_strided_slice %475 {offsets = [0, 0], sizes = [2, 32], strides = [1, 1]} : vector<2x128xf32> to vector<2x32xf32>
    %477 = vector.extract_strided_slice %475 {offsets = [0, 32], sizes = [2, 32], strides = [1, 1]} : vector<2x128xf32> to vector<2x32xf32>
    %478 = vector.extract_strided_slice %475 {offsets = [0, 64], sizes = [2, 32], strides = [1, 1]} : vector<2x128xf32> to vector<2x32xf32>
    %479 = vector.extract_strided_slice %475 {offsets = [0, 96], sizes = [2, 32], strides = [1, 1]} : vector<2x128xf32> to vector<2x32xf32>
    %480 = arith.mulf %477, %462 : vector<2x32xf32>
    %481 = arith.mulf %476, %478 : vector<2x32xf32>
    %482 = arith.addf %480, %481 : vector<2x32xf32>
    %483 = math.tanh %482 : vector<2x32xf32>
    %484 = arith.mulf %479, %483 : vector<2x32xf32>
    %c16_159 = arith.constant 16 : index
    %c0_160 = arith.constant 0 : index
    %c0_161 = arith.constant 0 : index
    %485 = vector.load %arg11[%c16_159, %c0_160, %c0_161] : memref<31x2x128xf32, #tpu.memory_space<vmem>>, vector<1x2x128xf32>
    %486 = vector.shape_cast %485 : vector<1x2x128xf32> to vector<2x128xf32>
    %cst_162 = arith.constant dense<0.000000e+00> : vector<2x128xf32>
    %487 = tpu.matmul %484, %150, %cst_162 {dimension_numbers = #tpu.dot_dimension_numbers<[1], [0], [0], [1], [0, 0, 1, 1], [], []>} : vector<2x32xf32>, vector<32x128xf32>, vector<2x128xf32> -> vector<2x128xf32>
    %488 = arith.addf %486, %487 : vector<2x128xf32>
    %489 = vector.broadcast %159 : vector<1x128xf32> to vector<2x128xf32>
    %490 = arith.mulf %488, %489 : vector<2x128xf32>
    %491 = math.tanh %490 : vector<2x128xf32>
    %492 = vector.broadcast %159 : vector<1x128xf32> to vector<2x128xf32>
    %493 = arith.mulf %491, %492 : vector<2x128xf32>
    %494 = vector.broadcast %162 : vector<1x128xf32> to vector<2x128xf32>
    %495 = arith.addf %493, %494 : vector<2x128xf32>
    %496 = vector.extract_strided_slice %495 {offsets = [0, 0], sizes = [2, 32], strides = [1, 1]} : vector<2x128xf32> to vector<2x32xf32>
    %497 = vector.extract_strided_slice %495 {offsets = [0, 32], sizes = [2, 32], strides = [1, 1]} : vector<2x128xf32> to vector<2x32xf32>
    %498 = vector.extract_strided_slice %495 {offsets = [0, 64], sizes = [2, 32], strides = [1, 1]} : vector<2x128xf32> to vector<2x32xf32>
    %499 = vector.extract_strided_slice %495 {offsets = [0, 96], sizes = [2, 32], strides = [1, 1]} : vector<2x128xf32> to vector<2x32xf32>
    %500 = arith.mulf %497, %482 : vector<2x32xf32>
    %501 = arith.mulf %496, %498 : vector<2x32xf32>
    %502 = arith.addf %500, %501 : vector<2x32xf32>
    %503 = math.tanh %502 : vector<2x32xf32>
    %504 = arith.mulf %499, %503 : vector<2x32xf32>
    %c17_163 = arith.constant 17 : index
    %c0_164 = arith.constant 0 : index
    %c0_165 = arith.constant 0 : index
    %505 = vector.load %arg11[%c17_163, %c0_164, %c0_165] : memref<31x2x128xf32, #tpu.memory_space<vmem>>, vector<1x2x128xf32>
    %506 = vector.shape_cast %505 : vector<1x2x128xf32> to vector<2x128xf32>
    %cst_166 = arith.constant dense<0.000000e+00> : vector<2x128xf32>
    %507 = tpu.matmul %504, %150, %cst_166 {dimension_numbers = #tpu.dot_dimension_numbers<[1], [0], [0], [1], [0, 0, 1, 1], [], []>} : vector<2x32xf32>, vector<32x128xf32>, vector<2x128xf32> -> vector<2x128xf32>
    %508 = arith.addf %506, %507 : vector<2x128xf32>
    %509 = vector.broadcast %159 : vector<1x128xf32> to vector<2x128xf32>
    %510 = arith.mulf %508, %509 : vector<2x128xf32>
    %511 = math.tanh %510 : vector<2x128xf32>
    %512 = vector.broadcast %159 : vector<1x128xf32> to vector<2x128xf32>
    %513 = arith.mulf %511, %512 : vector<2x128xf32>
    %514 = vector.broadcast %162 : vector<1x128xf32> to vector<2x128xf32>
    %515 = arith.addf %513, %514 : vector<2x128xf32>
    %516 = vector.extract_strided_slice %515 {offsets = [0, 0], sizes = [2, 32], strides = [1, 1]} : vector<2x128xf32> to vector<2x32xf32>
    %517 = vector.extract_strided_slice %515 {offsets = [0, 32], sizes = [2, 32], strides = [1, 1]} : vector<2x128xf32> to vector<2x32xf32>
    %518 = vector.extract_strided_slice %515 {offsets = [0, 64], sizes = [2, 32], strides = [1, 1]} : vector<2x128xf32> to vector<2x32xf32>
    %519 = vector.extract_strided_slice %515 {offsets = [0, 96], sizes = [2, 32], strides = [1, 1]} : vector<2x128xf32> to vector<2x32xf32>
    %520 = arith.mulf %517, %502 : vector<2x32xf32>
    %521 = arith.mulf %516, %518 : vector<2x32xf32>
    %522 = arith.addf %520, %521 : vector<2x32xf32>
    %523 = math.tanh %522 : vector<2x32xf32>
    %524 = arith.mulf %519, %523 : vector<2x32xf32>
    %c18_167 = arith.constant 18 : index
    %c0_168 = arith.constant 0 : index
    %c0_169 = arith.constant 0 : index
    %525 = vector.load %arg11[%c18_167, %c0_168, %c0_169] : memref<31x2x128xf32, #tpu.memory_space<vmem>>, vector<1x2x128xf32>
    %526 = vector.shape_cast %525 : vector<1x2x128xf32> to vector<2x128xf32>
    %cst_170 = arith.constant dense<0.000000e+00> : vector<2x128xf32>
    %527 = tpu.matmul %524, %150, %cst_170 {dimension_numbers = #tpu.dot_dimension_numbers<[1], [0], [0], [1], [0, 0, 1, 1], [], []>} : vector<2x32xf32>, vector<32x128xf32>, vector<2x128xf32> -> vector<2x128xf32>
    %528 = arith.addf %526, %527 : vector<2x128xf32>
    %529 = vector.broadcast %159 : vector<1x128xf32> to vector<2x128xf32>
    %530 = arith.mulf %528, %529 : vector<2x128xf32>
    %531 = math.tanh %530 : vector<2x128xf32>
    %532 = vector.broadcast %159 : vector<1x128xf32> to vector<2x128xf32>
    %533 = arith.mulf %531, %532 : vector<2x128xf32>
    %534 = vector.broadcast %162 : vector<1x128xf32> to vector<2x128xf32>
    %535 = arith.addf %533, %534 : vector<2x128xf32>
    %536 = vector.extract_strided_slice %535 {offsets = [0, 0], sizes = [2, 32], strides = [1, 1]} : vector<2x128xf32> to vector<2x32xf32>
    %537 = vector.extract_strided_slice %535 {offsets = [0, 32], sizes = [2, 32], strides = [1, 1]} : vector<2x128xf32> to vector<2x32xf32>
    %538 = vector.extract_strided_slice %535 {offsets = [0, 64], sizes = [2, 32], strides = [1, 1]} : vector<2x128xf32> to vector<2x32xf32>
    %539 = vector.extract_strided_slice %535 {offsets = [0, 96], sizes = [2, 32], strides = [1, 1]} : vector<2x128xf32> to vector<2x32xf32>
    %540 = arith.mulf %537, %522 : vector<2x32xf32>
    %541 = arith.mulf %536, %538 : vector<2x32xf32>
    %542 = arith.addf %540, %541 : vector<2x32xf32>
    %543 = math.tanh %542 : vector<2x32xf32>
    %544 = arith.mulf %539, %543 : vector<2x32xf32>
    %c19_171 = arith.constant 19 : index
    %c0_172 = arith.constant 0 : index
    %c0_173 = arith.constant 0 : index
    %545 = vector.load %arg11[%c19_171, %c0_172, %c0_173] : memref<31x2x128xf32, #tpu.memory_space<vmem>>, vector<1x2x128xf32>
    %546 = vector.shape_cast %545 : vector<1x2x128xf32> to vector<2x128xf32>
    %cst_174 = arith.constant dense<0.000000e+00> : vector<2x128xf32>
    %547 = tpu.matmul %544, %150, %cst_174 {dimension_numbers = #tpu.dot_dimension_numbers<[1], [0], [0], [1], [0, 0, 1, 1], [], []>} : vector<2x32xf32>, vector<32x128xf32>, vector<2x128xf32> -> vector<2x128xf32>
    %548 = arith.addf %546, %547 : vector<2x128xf32>
    %549 = vector.broadcast %159 : vector<1x128xf32> to vector<2x128xf32>
    %550 = arith.mulf %548, %549 : vector<2x128xf32>
    %551 = math.tanh %550 : vector<2x128xf32>
    %552 = vector.broadcast %159 : vector<1x128xf32> to vector<2x128xf32>
    %553 = arith.mulf %551, %552 : vector<2x128xf32>
    %554 = vector.broadcast %162 : vector<1x128xf32> to vector<2x128xf32>
    %555 = arith.addf %553, %554 : vector<2x128xf32>
    %556 = vector.extract_strided_slice %555 {offsets = [0, 0], sizes = [2, 32], strides = [1, 1]} : vector<2x128xf32> to vector<2x32xf32>
    %557 = vector.extract_strided_slice %555 {offsets = [0, 32], sizes = [2, 32], strides = [1, 1]} : vector<2x128xf32> to vector<2x32xf32>
    %558 = vector.extract_strided_slice %555 {offsets = [0, 64], sizes = [2, 32], strides = [1, 1]} : vector<2x128xf32> to vector<2x32xf32>
    %559 = vector.extract_strided_slice %555 {offsets = [0, 96], sizes = [2, 32], strides = [1, 1]} : vector<2x128xf32> to vector<2x32xf32>
    %560 = arith.mulf %557, %542 : vector<2x32xf32>
    %561 = arith.mulf %556, %558 : vector<2x32xf32>
    %562 = arith.addf %560, %561 : vector<2x32xf32>
    %563 = math.tanh %562 : vector<2x32xf32>
    %564 = arith.mulf %559, %563 : vector<2x32xf32>
    %c20_175 = arith.constant 20 : index
    %c0_176 = arith.constant 0 : index
    %c0_177 = arith.constant 0 : index
    %565 = vector.load %arg11[%c20_175, %c0_176, %c0_177] : memref<31x2x128xf32, #tpu.memory_space<vmem>>, vector<1x2x128xf32>
    %566 = vector.shape_cast %565 : vector<1x2x128xf32> to vector<2x128xf32>
    %cst_178 = arith.constant dense<0.000000e+00> : vector<2x128xf32>
    %567 = tpu.matmul %564, %150, %cst_178 {dimension_numbers = #tpu.dot_dimension_numbers<[1], [0], [0], [1], [0, 0, 1, 1], [], []>} : vector<2x32xf32>, vector<32x128xf32>, vector<2x128xf32> -> vector<2x128xf32>
    %568 = arith.addf %566, %567 : vector<2x128xf32>
    %569 = vector.broadcast %159 : vector<1x128xf32> to vector<2x128xf32>
    %570 = arith.mulf %568, %569 : vector<2x128xf32>
    %571 = math.tanh %570 : vector<2x128xf32>
    %572 = vector.broadcast %159 : vector<1x128xf32> to vector<2x128xf32>
    %573 = arith.mulf %571, %572 : vector<2x128xf32>
    %574 = vector.broadcast %162 : vector<1x128xf32> to vector<2x128xf32>
    %575 = arith.addf %573, %574 : vector<2x128xf32>
    %576 = vector.extract_strided_slice %575 {offsets = [0, 0], sizes = [2, 32], strides = [1, 1]} : vector<2x128xf32> to vector<2x32xf32>
    %577 = vector.extract_strided_slice %575 {offsets = [0, 32], sizes = [2, 32], strides = [1, 1]} : vector<2x128xf32> to vector<2x32xf32>
    %578 = vector.extract_strided_slice %575 {offsets = [0, 64], sizes = [2, 32], strides = [1, 1]} : vector<2x128xf32> to vector<2x32xf32>
    %579 = vector.extract_strided_slice %575 {offsets = [0, 96], sizes = [2, 32], strides = [1, 1]} : vector<2x128xf32> to vector<2x32xf32>
    %580 = arith.mulf %577, %562 : vector<2x32xf32>
    %581 = arith.mulf %576, %578 : vector<2x32xf32>
    %582 = arith.addf %580, %581 : vector<2x32xf32>
    %583 = math.tanh %582 : vector<2x32xf32>
    %584 = arith.mulf %579, %583 : vector<2x32xf32>
    %c21_179 = arith.constant 21 : index
    %c0_180 = arith.constant 0 : index
    %c0_181 = arith.constant 0 : index
    %585 = vector.load %arg11[%c21_179, %c0_180, %c0_181] : memref<31x2x128xf32, #tpu.memory_space<vmem>>, vector<1x2x128xf32>
    %586 = vector.shape_cast %585 : vector<1x2x128xf32> to vector<2x128xf32>
    %cst_182 = arith.constant dense<0.000000e+00> : vector<2x128xf32>
    %587 = tpu.matmul %584, %150, %cst_182 {dimension_numbers = #tpu.dot_dimension_numbers<[1], [0], [0], [1], [0, 0, 1, 1], [], []>} : vector<2x32xf32>, vector<32x128xf32>, vector<2x128xf32> -> vector<2x128xf32>
    %588 = arith.addf %586, %587 : vector<2x128xf32>
    %589 = vector.broadcast %159 : vector<1x128xf32> to vector<2x128xf32>
    %590 = arith.mulf %588, %589 : vector<2x128xf32>
    %591 = math.tanh %590 : vector<2x128xf32>
    %592 = vector.broadcast %159 : vector<1x128xf32> to vector<2x128xf32>
    %593 = arith.mulf %591, %592 : vector<2x128xf32>
    %594 = vector.broadcast %162 : vector<1x128xf32> to vector<2x128xf32>
    %595 = arith.addf %593, %594 : vector<2x128xf32>
    %596 = vector.extract_strided_slice %595 {offsets = [0, 0], sizes = [2, 32], strides = [1, 1]} : vector<2x128xf32> to vector<2x32xf32>
    %597 = vector.extract_strided_slice %595 {offsets = [0, 32], sizes = [2, 32], strides = [1, 1]} : vector<2x128xf32> to vector<2x32xf32>
    %598 = vector.extract_strided_slice %595 {offsets = [0, 64], sizes = [2, 32], strides = [1, 1]} : vector<2x128xf32> to vector<2x32xf32>
    %599 = vector.extract_strided_slice %595 {offsets = [0, 96], sizes = [2, 32], strides = [1, 1]} : vector<2x128xf32> to vector<2x32xf32>
    %600 = arith.mulf %597, %582 : vector<2x32xf32>
    %601 = arith.mulf %596, %598 : vector<2x32xf32>
    %602 = arith.addf %600, %601 : vector<2x32xf32>
    %603 = math.tanh %602 : vector<2x32xf32>
    %604 = arith.mulf %599, %603 : vector<2x32xf32>
    %c22_183 = arith.constant 22 : index
    %c0_184 = arith.constant 0 : index
    %c0_185 = arith.constant 0 : index
    %605 = vector.load %arg11[%c22_183, %c0_184, %c0_185] : memref<31x2x128xf32, #tpu.memory_space<vmem>>, vector<1x2x128xf32>
    %606 = vector.shape_cast %605 : vector<1x2x128xf32> to vector<2x128xf32>
    %cst_186 = arith.constant dense<0.000000e+00> : vector<2x128xf32>
    %607 = tpu.matmul %604, %150, %cst_186 {dimension_numbers = #tpu.dot_dimension_numbers<[1], [0], [0], [1], [0, 0, 1, 1], [], []>} : vector<2x32xf32>, vector<32x128xf32>, vector<2x128xf32> -> vector<2x128xf32>
    %608 = arith.addf %606, %607 : vector<2x128xf32>
    %609 = vector.broadcast %159 : vector<1x128xf32> to vector<2x128xf32>
    %610 = arith.mulf %608, %609 : vector<2x128xf32>
    %611 = math.tanh %610 : vector<2x128xf32>
    %612 = vector.broadcast %159 : vector<1x128xf32> to vector<2x128xf32>
    %613 = arith.mulf %611, %612 : vector<2x128xf32>
    %614 = vector.broadcast %162 : vector<1x128xf32> to vector<2x128xf32>
    %615 = arith.addf %613, %614 : vector<2x128xf32>
    %616 = vector.extract_strided_slice %615 {offsets = [0, 0], sizes = [2, 32], strides = [1, 1]} : vector<2x128xf32> to vector<2x32xf32>
    %617 = vector.extract_strided_slice %615 {offsets = [0, 32], sizes = [2, 32], strides = [1, 1]} : vector<2x128xf32> to vector<2x32xf32>
    %618 = vector.extract_strided_slice %615 {offsets = [0, 64], sizes = [2, 32], strides = [1, 1]} : vector<2x128xf32> to vector<2x32xf32>
    %619 = vector.extract_strided_slice %615 {offsets = [0, 96], sizes = [2, 32], strides = [1, 1]} : vector<2x128xf32> to vector<2x32xf32>
    %620 = arith.mulf %617, %602 : vector<2x32xf32>
    %621 = arith.mulf %616, %618 : vector<2x32xf32>
    %622 = arith.addf %620, %621 : vector<2x32xf32>
    %623 = math.tanh %622 : vector<2x32xf32>
    %624 = arith.mulf %619, %623 : vector<2x32xf32>
    %c23_187 = arith.constant 23 : index
    %c0_188 = arith.constant 0 : index
    %c0_189 = arith.constant 0 : index
    %625 = vector.load %arg11[%c23_187, %c0_188, %c0_189] : memref<31x2x128xf32, #tpu.memory_space<vmem>>, vector<1x2x128xf32>
    %626 = vector.shape_cast %625 : vector<1x2x128xf32> to vector<2x128xf32>
    %cst_190 = arith.constant dense<0.000000e+00> : vector<2x128xf32>
    %627 = tpu.matmul %624, %150, %cst_190 {dimension_numbers = #tpu.dot_dimension_numbers<[1], [0], [0], [1], [0, 0, 1, 1], [], []>} : vector<2x32xf32>, vector<32x128xf32>, vector<2x128xf32> -> vector<2x128xf32>
    %628 = arith.addf %626, %627 : vector<2x128xf32>
    %629 = vector.broadcast %159 : vector<1x128xf32> to vector<2x128xf32>
    %630 = arith.mulf %628, %629 : vector<2x128xf32>
    %631 = math.tanh %630 : vector<2x128xf32>
    %632 = vector.broadcast %159 : vector<1x128xf32> to vector<2x128xf32>
    %633 = arith.mulf %631, %632 : vector<2x128xf32>
    %634 = vector.broadcast %162 : vector<1x128xf32> to vector<2x128xf32>
    %635 = arith.addf %633, %634 : vector<2x128xf32>
    %636 = vector.extract_strided_slice %635 {offsets = [0, 0], sizes = [2, 32], strides = [1, 1]} : vector<2x128xf32> to vector<2x32xf32>
    %637 = vector.extract_strided_slice %635 {offsets = [0, 32], sizes = [2, 32], strides = [1, 1]} : vector<2x128xf32> to vector<2x32xf32>
    %638 = vector.extract_strided_slice %635 {offsets = [0, 64], sizes = [2, 32], strides = [1, 1]} : vector<2x128xf32> to vector<2x32xf32>
    %639 = vector.extract_strided_slice %635 {offsets = [0, 96], sizes = [2, 32], strides = [1, 1]} : vector<2x128xf32> to vector<2x32xf32>
    %640 = arith.mulf %637, %622 : vector<2x32xf32>
    %641 = arith.mulf %636, %638 : vector<2x32xf32>
    %642 = arith.addf %640, %641 : vector<2x32xf32>
    %643 = math.tanh %642 : vector<2x32xf32>
    %644 = arith.mulf %639, %643 : vector<2x32xf32>
    %c24_191 = arith.constant 24 : index
    %c0_192 = arith.constant 0 : index
    %c0_193 = arith.constant 0 : index
    %645 = vector.load %arg11[%c24_191, %c0_192, %c0_193] : memref<31x2x128xf32, #tpu.memory_space<vmem>>, vector<1x2x128xf32>
    %646 = vector.shape_cast %645 : vector<1x2x128xf32> to vector<2x128xf32>
    %cst_194 = arith.constant dense<0.000000e+00> : vector<2x128xf32>
    %647 = tpu.matmul %644, %150, %cst_194 {dimension_numbers = #tpu.dot_dimension_numbers<[1], [0], [0], [1], [0, 0, 1, 1], [], []>} : vector<2x32xf32>, vector<32x128xf32>, vector<2x128xf32> -> vector<2x128xf32>
    %648 = arith.addf %646, %647 : vector<2x128xf32>
    %649 = vector.broadcast %159 : vector<1x128xf32> to vector<2x128xf32>
    %650 = arith.mulf %648, %649 : vector<2x128xf32>
    %651 = math.tanh %650 : vector<2x128xf32>
    %652 = vector.broadcast %159 : vector<1x128xf32> to vector<2x128xf32>
    %653 = arith.mulf %651, %652 : vector<2x128xf32>
    %654 = vector.broadcast %162 : vector<1x128xf32> to vector<2x128xf32>
    %655 = arith.addf %653, %654 : vector<2x128xf32>
    %656 = vector.extract_strided_slice %655 {offsets = [0, 0], sizes = [2, 32], strides = [1, 1]} : vector<2x128xf32> to vector<2x32xf32>
    %657 = vector.extract_strided_slice %655 {offsets = [0, 32], sizes = [2, 32], strides = [1, 1]} : vector<2x128xf32> to vector<2x32xf32>
    %658 = vector.extract_strided_slice %655 {offsets = [0, 64], sizes = [2, 32], strides = [1, 1]} : vector<2x128xf32> to vector<2x32xf32>
    %659 = vector.extract_strided_slice %655 {offsets = [0, 96], sizes = [2, 32], strides = [1, 1]} : vector<2x128xf32> to vector<2x32xf32>
    %660 = arith.mulf %657, %642 : vector<2x32xf32>
    %661 = arith.mulf %656, %658 : vector<2x32xf32>
    %662 = arith.addf %660, %661 : vector<2x32xf32>
    %663 = math.tanh %662 : vector<2x32xf32>
    %664 = arith.mulf %659, %663 : vector<2x32xf32>
    %c25_195 = arith.constant 25 : index
    %c0_196 = arith.constant 0 : index
    %c0_197 = arith.constant 0 : index
    %665 = vector.load %arg11[%c25_195, %c0_196, %c0_197] : memref<31x2x128xf32, #tpu.memory_space<vmem>>, vector<1x2x128xf32>
    %666 = vector.shape_cast %665 : vector<1x2x128xf32> to vector<2x128xf32>
    %cst_198 = arith.constant dense<0.000000e+00> : vector<2x128xf32>
    %667 = tpu.matmul %664, %150, %cst_198 {dimension_numbers = #tpu.dot_dimension_numbers<[1], [0], [0], [1], [0, 0, 1, 1], [], []>} : vector<2x32xf32>, vector<32x128xf32>, vector<2x128xf32> -> vector<2x128xf32>
    %668 = arith.addf %666, %667 : vector<2x128xf32>
    %669 = vector.broadcast %159 : vector<1x128xf32> to vector<2x128xf32>
    %670 = arith.mulf %668, %669 : vector<2x128xf32>
    %671 = math.tanh %670 : vector<2x128xf32>
    %672 = vector.broadcast %159 : vector<1x128xf32> to vector<2x128xf32>
    %673 = arith.mulf %671, %672 : vector<2x128xf32>
    %674 = vector.broadcast %162 : vector<1x128xf32> to vector<2x128xf32>
    %675 = arith.addf %673, %674 : vector<2x128xf32>
    %676 = vector.extract_strided_slice %675 {offsets = [0, 0], sizes = [2, 32], strides = [1, 1]} : vector<2x128xf32> to vector<2x32xf32>
    %677 = vector.extract_strided_slice %675 {offsets = [0, 32], sizes = [2, 32], strides = [1, 1]} : vector<2x128xf32> to vector<2x32xf32>
    %678 = vector.extract_strided_slice %675 {offsets = [0, 64], sizes = [2, 32], strides = [1, 1]} : vector<2x128xf32> to vector<2x32xf32>
    %679 = vector.extract_strided_slice %675 {offsets = [0, 96], sizes = [2, 32], strides = [1, 1]} : vector<2x128xf32> to vector<2x32xf32>
    %680 = arith.mulf %677, %662 : vector<2x32xf32>
    %681 = arith.mulf %676, %678 : vector<2x32xf32>
    %682 = arith.addf %680, %681 : vector<2x32xf32>
    %683 = math.tanh %682 : vector<2x32xf32>
    %684 = arith.mulf %679, %683 : vector<2x32xf32>
    %c26_199 = arith.constant 26 : index
    %c0_200 = arith.constant 0 : index
    %c0_201 = arith.constant 0 : index
    %685 = vector.load %arg11[%c26_199, %c0_200, %c0_201] : memref<31x2x128xf32, #tpu.memory_space<vmem>>, vector<1x2x128xf32>
    %686 = vector.shape_cast %685 : vector<1x2x128xf32> to vector<2x128xf32>
    %cst_202 = arith.constant dense<0.000000e+00> : vector<2x128xf32>
    %687 = tpu.matmul %684, %150, %cst_202 {dimension_numbers = #tpu.dot_dimension_numbers<[1], [0], [0], [1], [0, 0, 1, 1], [], []>} : vector<2x32xf32>, vector<32x128xf32>, vector<2x128xf32> -> vector<2x128xf32>
    %688 = arith.addf %686, %687 : vector<2x128xf32>
    %689 = vector.broadcast %159 : vector<1x128xf32> to vector<2x128xf32>
    %690 = arith.mulf %688, %689 : vector<2x128xf32>
    %691 = math.tanh %690 : vector<2x128xf32>
    %692 = vector.broadcast %159 : vector<1x128xf32> to vector<2x128xf32>
    %693 = arith.mulf %691, %692 : vector<2x128xf32>
    %694 = vector.broadcast %162 : vector<1x128xf32> to vector<2x128xf32>
    %695 = arith.addf %693, %694 : vector<2x128xf32>
    %696 = vector.extract_strided_slice %695 {offsets = [0, 0], sizes = [2, 32], strides = [1, 1]} : vector<2x128xf32> to vector<2x32xf32>
    %697 = vector.extract_strided_slice %695 {offsets = [0, 32], sizes = [2, 32], strides = [1, 1]} : vector<2x128xf32> to vector<2x32xf32>
    %698 = vector.extract_strided_slice %695 {offsets = [0, 64], sizes = [2, 32], strides = [1, 1]} : vector<2x128xf32> to vector<2x32xf32>
    %699 = vector.extract_strided_slice %695 {offsets = [0, 96], sizes = [2, 32], strides = [1, 1]} : vector<2x128xf32> to vector<2x32xf32>
    %700 = arith.mulf %697, %682 : vector<2x32xf32>
    %701 = arith.mulf %696, %698 : vector<2x32xf32>
    %702 = arith.addf %700, %701 : vector<2x32xf32>
    %703 = math.tanh %702 : vector<2x32xf32>
    %704 = arith.mulf %699, %703 : vector<2x32xf32>
    %c27_203 = arith.constant 27 : index
    %c0_204 = arith.constant 0 : index
    %c0_205 = arith.constant 0 : index
    %705 = vector.load %arg11[%c27_203, %c0_204, %c0_205] : memref<31x2x128xf32, #tpu.memory_space<vmem>>, vector<1x2x128xf32>
    %706 = vector.shape_cast %705 : vector<1x2x128xf32> to vector<2x128xf32>
    %cst_206 = arith.constant dense<0.000000e+00> : vector<2x128xf32>
    %707 = tpu.matmul %704, %150, %cst_206 {dimension_numbers = #tpu.dot_dimension_numbers<[1], [0], [0], [1], [0, 0, 1, 1], [], []>} : vector<2x32xf32>, vector<32x128xf32>, vector<2x128xf32> -> vector<2x128xf32>
    %708 = arith.addf %706, %707 : vector<2x128xf32>
    %709 = vector.broadcast %159 : vector<1x128xf32> to vector<2x128xf32>
    %710 = arith.mulf %708, %709 : vector<2x128xf32>
    %711 = math.tanh %710 : vector<2x128xf32>
    %712 = vector.broadcast %159 : vector<1x128xf32> to vector<2x128xf32>
    %713 = arith.mulf %711, %712 : vector<2x128xf32>
    %714 = vector.broadcast %162 : vector<1x128xf32> to vector<2x128xf32>
    %715 = arith.addf %713, %714 : vector<2x128xf32>
    %716 = vector.extract_strided_slice %715 {offsets = [0, 0], sizes = [2, 32], strides = [1, 1]} : vector<2x128xf32> to vector<2x32xf32>
    %717 = vector.extract_strided_slice %715 {offsets = [0, 32], sizes = [2, 32], strides = [1, 1]} : vector<2x128xf32> to vector<2x32xf32>
    %718 = vector.extract_strided_slice %715 {offsets = [0, 64], sizes = [2, 32], strides = [1, 1]} : vector<2x128xf32> to vector<2x32xf32>
    %719 = vector.extract_strided_slice %715 {offsets = [0, 96], sizes = [2, 32], strides = [1, 1]} : vector<2x128xf32> to vector<2x32xf32>
    %720 = arith.mulf %717, %702 : vector<2x32xf32>
    %721 = arith.mulf %716, %718 : vector<2x32xf32>
    %722 = arith.addf %720, %721 : vector<2x32xf32>
    %723 = math.tanh %722 : vector<2x32xf32>
    %724 = arith.mulf %719, %723 : vector<2x32xf32>
    %c28_207 = arith.constant 28 : index
    %c0_208 = arith.constant 0 : index
    %c0_209 = arith.constant 0 : index
    %725 = vector.load %arg11[%c28_207, %c0_208, %c0_209] : memref<31x2x128xf32, #tpu.memory_space<vmem>>, vector<1x2x128xf32>
    %726 = vector.shape_cast %725 : vector<1x2x128xf32> to vector<2x128xf32>
    %cst_210 = arith.constant dense<0.000000e+00> : vector<2x128xf32>
    %727 = tpu.matmul %724, %150, %cst_210 {dimension_numbers = #tpu.dot_dimension_numbers<[1], [0], [0], [1], [0, 0, 1, 1], [], []>} : vector<2x32xf32>, vector<32x128xf32>, vector<2x128xf32> -> vector<2x128xf32>
    %728 = arith.addf %726, %727 : vector<2x128xf32>
    %729 = vector.broadcast %159 : vector<1x128xf32> to vector<2x128xf32>
    %730 = arith.mulf %728, %729 : vector<2x128xf32>
    %731 = math.tanh %730 : vector<2x128xf32>
    %732 = vector.broadcast %159 : vector<1x128xf32> to vector<2x128xf32>
    %733 = arith.mulf %731, %732 : vector<2x128xf32>
    %734 = vector.broadcast %162 : vector<1x128xf32> to vector<2x128xf32>
    %735 = arith.addf %733, %734 : vector<2x128xf32>
    %736 = vector.extract_strided_slice %735 {offsets = [0, 0], sizes = [2, 32], strides = [1, 1]} : vector<2x128xf32> to vector<2x32xf32>
    %737 = vector.extract_strided_slice %735 {offsets = [0, 32], sizes = [2, 32], strides = [1, 1]} : vector<2x128xf32> to vector<2x32xf32>
    %738 = vector.extract_strided_slice %735 {offsets = [0, 64], sizes = [2, 32], strides = [1, 1]} : vector<2x128xf32> to vector<2x32xf32>
    %739 = vector.extract_strided_slice %735 {offsets = [0, 96], sizes = [2, 32], strides = [1, 1]} : vector<2x128xf32> to vector<2x32xf32>
    %740 = arith.mulf %737, %722 : vector<2x32xf32>
    %741 = arith.mulf %736, %738 : vector<2x32xf32>
    %742 = arith.addf %740, %741 : vector<2x32xf32>
    %743 = math.tanh %742 : vector<2x32xf32>
    %744 = arith.mulf %739, %743 : vector<2x32xf32>
    %c29_211 = arith.constant 29 : index
    %c0_212 = arith.constant 0 : index
    %c0_213 = arith.constant 0 : index
    %745 = vector.load %arg11[%c29_211, %c0_212, %c0_213] : memref<31x2x128xf32, #tpu.memory_space<vmem>>, vector<1x2x128xf32>
    %746 = vector.shape_cast %745 : vector<1x2x128xf32> to vector<2x128xf32>
    %cst_214 = arith.constant dense<0.000000e+00> : vector<2x128xf32>
    %747 = tpu.matmul %744, %150, %cst_214 {dimension_numbers = #tpu.dot_dimension_numbers<[1], [0], [0], [1], [0, 0, 1, 1], [], []>} : vector<2x32xf32>, vector<32x128xf32>, vector<2x128xf32> -> vector<2x128xf32>
    %748 = arith.addf %746, %747 : vector<2x128xf32>
    %749 = vector.broadcast %159 : vector<1x128xf32> to vector<2x128xf32>
    %750 = arith.mulf %748, %749 : vector<2x128xf32>
    %751 = math.tanh %750 : vector<2x128xf32>
    %752 = vector.broadcast %159 : vector<1x128xf32> to vector<2x128xf32>
    %753 = arith.mulf %751, %752 : vector<2x128xf32>
    %754 = vector.broadcast %162 : vector<1x128xf32> to vector<2x128xf32>
    %755 = arith.addf %753, %754 : vector<2x128xf32>
    %756 = vector.extract_strided_slice %755 {offsets = [0, 0], sizes = [2, 32], strides = [1, 1]} : vector<2x128xf32> to vector<2x32xf32>
    %757 = vector.extract_strided_slice %755 {offsets = [0, 32], sizes = [2, 32], strides = [1, 1]} : vector<2x128xf32> to vector<2x32xf32>
    %758 = vector.extract_strided_slice %755 {offsets = [0, 64], sizes = [2, 32], strides = [1, 1]} : vector<2x128xf32> to vector<2x32xf32>
    %759 = vector.extract_strided_slice %755 {offsets = [0, 96], sizes = [2, 32], strides = [1, 1]} : vector<2x128xf32> to vector<2x32xf32>
    %760 = arith.mulf %757, %742 : vector<2x32xf32>
    %761 = arith.mulf %756, %758 : vector<2x32xf32>
    %762 = arith.addf %760, %761 : vector<2x32xf32>
    %763 = math.tanh %762 : vector<2x32xf32>
    %764 = arith.mulf %759, %763 : vector<2x32xf32>
    %c30_215 = arith.constant 30 : index
    %c0_216 = arith.constant 0 : index
    %c0_217 = arith.constant 0 : index
    %765 = vector.load %arg11[%c30_215, %c0_216, %c0_217] : memref<31x2x128xf32, #tpu.memory_space<vmem>>, vector<1x2x128xf32>
    %766 = vector.shape_cast %765 : vector<1x2x128xf32> to vector<2x128xf32>
    %cst_218 = arith.constant dense<0.000000e+00> : vector<2x128xf32>
    %767 = tpu.matmul %764, %150, %cst_218 {dimension_numbers = #tpu.dot_dimension_numbers<[1], [0], [0], [1], [0, 0, 1, 1], [], []>} : vector<2x32xf32>, vector<32x128xf32>, vector<2x128xf32> -> vector<2x128xf32>
    %768 = arith.addf %766, %767 : vector<2x128xf32>
    %769 = vector.broadcast %159 : vector<1x128xf32> to vector<2x128xf32>
    %770 = arith.mulf %768, %769 : vector<2x128xf32>
    %771 = math.tanh %770 : vector<2x128xf32>
    %772 = vector.broadcast %159 : vector<1x128xf32> to vector<2x128xf32>
    %773 = arith.mulf %771, %772 : vector<2x128xf32>
    %774 = vector.broadcast %162 : vector<1x128xf32> to vector<2x128xf32>
    %775 = arith.addf %773, %774 : vector<2x128xf32>
    %776 = vector.extract_strided_slice %775 {offsets = [0, 0], sizes = [2, 32], strides = [1, 1]} : vector<2x128xf32> to vector<2x32xf32>
    %777 = vector.extract_strided_slice %775 {offsets = [0, 32], sizes = [2, 32], strides = [1, 1]} : vector<2x128xf32> to vector<2x32xf32>
    %778 = vector.extract_strided_slice %775 {offsets = [0, 64], sizes = [2, 32], strides = [1, 1]} : vector<2x128xf32> to vector<2x32xf32>
    %779 = vector.extract_strided_slice %775 {offsets = [0, 96], sizes = [2, 32], strides = [1, 1]} : vector<2x128xf32> to vector<2x32xf32>
    %780 = arith.mulf %777, %762 : vector<2x32xf32>
    %781 = arith.mulf %776, %778 : vector<2x32xf32>
    %782 = arith.addf %780, %781 : vector<2x32xf32>
    %783 = math.tanh %782 : vector<2x32xf32>
    %784 = arith.mulf %779, %783 : vector<2x32xf32>
    %c0_219 = arith.constant 0 : index
    %c0_220 = arith.constant 0 : index
    %785 = vector.load %arg7[%c0_219, %c0_220] : memref<32x2xf32, #tpu.memory_space<vmem>>, vector<32x2xf32>
    %cst_221 = arith.constant dense<0.000000e+00> : vector<2x2xf32>
    %786 = tpu.matmul %784, %785, %cst_221 {dimension_numbers = #tpu.dot_dimension_numbers<[1], [0], [0], [1], [0, 0, 1, 1], [], []>} : vector<2x32xf32>, vector<32x2xf32>, vector<2x2xf32> -> vector<2x2xf32>
    %c0_222 = arith.constant 0 : index
    %c0_223 = arith.constant 0 : index
    %787 = vector.load %arg8[%c0_222, %c0_223] : memref<1x2xf32, #tpu.memory_space<vmem>>, vector<1x2xf32>
    %788 = vector.broadcast %787 : vector<1x2xf32> to vector<2x2xf32>
    %789 = arith.addf %786, %788 : vector<2x2xf32>
    %c0_224 = arith.constant 0 : index
    %c0_225 = arith.constant 0 : index
    %790 = vector.load %arg10[%c0_224, %c0_225] : memref<2x2xf32, #tpu.memory_space<vmem>>, vector<2x2xf32>
    tpu.vector_store %arg10[%c0_224, %c0_225], %789 {strides = array<i32>} : memref<2x2xf32, #tpu.memory_space<vmem>>, vector<2x2xf32>,
    %cst_226 = arith.constant dense<0xFF800000> : vector<2xf32>
    %791 = vector.multi_reduction <maximumf>, %789, %cst_226 [1] : vector<2x2xf32> to vector<2xf32>
    %792 = vector.shape_cast %791 : vector<2xf32> to vector<2x1xf32>
    %793 = vector.broadcast %792 : vector<2x1xf32> to vector<2x2xf32>
    %794 = arith.subf %789, %793 : vector<2x2xf32>
    %795 = math.exp %794 : vector<2x2xf32>
    %cst_227 = arith.constant dense<0.000000e+00> : vector<2xf32>
    %796 = vector.multi_reduction <add>, %795, %cst_227 [1] : vector<2x2xf32> to vector<2xf32>
    %797 = vector.shape_cast %796 : vector<2xf32> to vector<2x1xf32>
    %798 = tpu.reciprocal %797 {approx = true} : vector<2x1xf32> -> vector<2x1xf32>
    %799 = vector.broadcast %798 : vector<2x1xf32> to vector<2x2xf32>
    %800 = arith.mulf %795, %799 : vector<2x2xf32>
    %c0_228 = arith.constant 0 : index
    %c0_229 = arith.constant 0 : index
    %801 = vector.load %arg9[%c0_228, %c0_229] : memref<2x2xf32, #tpu.memory_space<vmem>>, vector<2x2xf32>
    tpu.vector_store %arg9[%c0_228, %c0_229], %800 {strides = array<i32>} : memref<2x2xf32, #tpu.memory_space<vmem>>, vector<2x2xf32>,
    return
  }
  func.func @transform_0(%arg0: i32) -> (i32, i32, i32) {
    %c0_i32 = arith.constant 0 : i32
    %c0_i32_0 = arith.constant 0 : i32
    %c0_i32_1 = arith.constant 0 : i32
    %c0_i32_2 = arith.constant 0 : i32
    return %c0_i32, %c0_i32_0, %c0_i32_1 : i32, i32, i32
  }
  func.func @transform_1(%arg0: i32) -> (i32, i32) {
    %c0_i32 = arith.constant 0 : i32
    %c0_i32_0 = arith.constant 0 : i32
    %c0_i32_1 = arith.constant 0 : i32
    return %c0_i32, %c0_i32_0 : i32, i32
  }
  func.func @transform_2(%arg0: i32) -> (i32, i32) {
    %c0_i32 = arith.constant 0 : i32
    %c0_i32_0 = arith.constant 0 : i32
    %c0_i32_1 = arith.constant 0 : i32
    return %c0_i32, %c0_i32_0 : i32, i32
  }
  func.func @transform_3(%arg0: i32) -> (i32, i32) {
    %c0_i32 = arith.constant 0 : i32
    %c0_i32_0 = arith.constant 0 : i32
    %c0_i32_1 = arith.constant 0 : i32
    return %c0_i32, %c0_i32_0 : i32, i32
  }
  func.func @transform_4(%arg0: i32) -> (i32, i32) {
    %c0_i32 = arith.constant 0 : i32
    %c0_i32_0 = arith.constant 0 : i32
    %c0_i32_1 = arith.constant 0 : i32
    return %c0_i32, %c0_i32_0 : i32, i32
  }
  func.func @transform_5(%arg0: i32) -> (i32, i32) {
    %c0_i32 = arith.constant 0 : i32
    %c0_i32_0 = arith.constant 0 : i32
    %c0_i32_1 = arith.constant 0 : i32
    return %c0_i32, %c0_i32_0 : i32, i32
  }
  func.func @transform_6(%arg0: i32) -> (i32, i32) {
    %c0_i32 = arith.constant 0 : i32
    %c0_i32_0 = arith.constant 0 : i32
    %c0_i32_1 = arith.constant 0 : i32
    return %c0_i32, %c0_i32_0 : i32, i32
  }
  func.func @transform_7(%arg0: i32) -> (i32, i32) {
    %c0_i32 = arith.constant 0 : i32
    %c0_i32_0 = arith.constant 0 : i32
    %c0_i32_1 = arith.constant 0 : i32
    return %c0_i32, %c0_i32_0 : i32, i32
  }
  func.func @transform_8(%arg0: i32) -> (i32, i32) {
    %c0_i32 = arith.constant 0 : i32
    %c0_i32_0 = arith.constant 0 : i32
    %c0_i32_1 = arith.constant 0 : i32
    return %c0_i32, %c0_i32_0 : i32, i32
  }
  func.func @transform_9(%arg0: i32) -> (i32, i32) {
    %c0_i32 = arith.constant 0 : i32
    %c0_i32_0 = arith.constant 0 : i32
    %c0_i32_1 = arith.constant 0 : i32
    return %c0_i32, %c0_i32_0 : i32, i32
  }
}

</mosaic_0001>

<llo_original>
// kernel: tpu_custom_call.1
$region0: #{tpu_custom_call.1}
  #allocation0 [shape = 'u32[]', space=smem, size = 0x4, offset = 0x4, fixed_abs, tag = 'smem constant byte address 0x4 - core index']
  #allocation1 [shape = 'u32[144,128]{1,0:T(1,128)}', space=vmem, size = 0x12000, scoped, tag = 'internal scratch']
  #allocation2 [shape = 'f32[31,2,128]{2,1,0:T(2,128)}', space=vmem, size = 0x7c00, scoped, tag = 'scratch operand']
  %s0 = inlined_call_operand.vmem [shape: f32[4,62,8], index: 0, kind: input, shape index: {}]
  %s1 = inlined_call_operand.vmem [shape: f32[8,8], index: 1, kind: input, shape index: {}]
  %s2 = inlined_call_operand.vmem [shape: f32[1,8], index: 2, kind: input, shape index: {}]
  %s3 = inlined_call_operand.vmem [shape: f32[8,128], index: 3, kind: input, shape index: {}]
  %s4 = inlined_call_operand.vmem [shape: f32[32,128], index: 4, kind: input, shape index: {}]
  %s5 = inlined_call_operand.vmem [shape: f32[1,128], index: 5, kind: input, shape index: {}]
  %s6 = inlined_call_operand.vmem [shape: f32[32,2], index: 6, kind: input, shape index: {}]
  %s7 = inlined_call_operand.vmem [shape: f32[1,2], index: 7, kind: input, shape index: {}]
  %s8 = inlined_call_operand.hbm [shape: f32[2,2], index: 8, kind: output, shape index: {0}]
  %s9 = inlined_call_operand.hbm [shape: f32[2,2], index: 9, kind: output, shape index: {1}]
  %10 = xla_tuple %s8, %s9
  %s11 = sld [smem:[#allocation0]]
  $region50: #{tpu_custom_call.1} parent=0
    _
  %s13 = ssub.s32 1, %s11
  %s14 = scalar_select 0, %s13, %s11
  $region1: #{tpu_custom_call.1} parent=0
    #allocation3 [shape = 'u8[1024]{0}', space=vmem, size = 0x400, scoped, tag = 'output window, operand 0, single buffered']
    #allocation4 [shape = 's32[1]{0}', space=sflag, size = 0x4, scoped, tag = 'scoped memory for tpu_custom_call.1']
    #allocation5 [shape = 'u8[1024]{0}', space=vmem, size = 0x400, scoped, tag = 'output window, operand 1, single buffered']
    #allocation6 [shape = 's32[1]{0}', space=sflag, size = 0x4, scoped, tag = 'scoped memory for tpu_custom_call.1']
    %15 = vsyncpa [#allocation4], 0
    %16 = vsyncpa [#allocation6], 0
    // Predicated region
    $region2: #{tpu_custom_call.1} parent=1 // pred_check
      _
    $region3: #{tpu_custom_call.1} parent=1 // pred_check_branch
      %18 = sbr.rel (0) target = $region5
    $region4: #{tpu_custom_call.1} parent=1 // pred_region
      _
    $region5: #{tpu_custom_call.1} parent=1 // pred_fallthru
      _
    // Predicated region
    $region6: #{tpu_custom_call.1} parent=1 // pred_check
      _
    $region7: #{tpu_custom_call.1} parent=1 // pred_check_branch
      %20 = sbr.rel (0) target = $region9
    $region8: #{tpu_custom_call.1} parent=1 // pred_region
      _
    $region9: #{tpu_custom_call.1} parent=1 // pred_fallthru
      _
    // Predicated region
    $region10: #{tpu_custom_call.1} parent=1 // pred_check
      _
    $region11: #{tpu_custom_call.1} parent=1 // pred_check_branch
      %22 = sbr.rel (0) target = $region13
    $region12: #{tpu_custom_call.1} parent=1 // pred_region
      _
    $region13: #{tpu_custom_call.1} parent=1 // pred_fallthru
      _
    // Predicated region
    $region14: #{tpu_custom_call.1} parent=1 // pred_check
      _
    $region15: #{tpu_custom_call.1} parent=1 // pred_check_branch
      %24 = sbr.rel (0) target = $region17
    $region16: #{tpu_custom_call.1} parent=1 // pred_region
      _
    $region17: #{tpu_custom_call.1} parent=1 // pred_fallthru
      _
    // Predicated region
    $region18: #{tpu_custom_call.1} parent=1 // pred_check
      _
    $region19: #{tpu_custom_call.1} parent=1 // pred_check_branch
      %26 = sbr.rel (0) target = $region21
    $region20: #{tpu_custom_call.1} parent=1 // pred_region
      _
    $region21: #{tpu_custom_call.1} parent=1 // pred_fallthru
      _
    // Predicated region
    $region22: #{tpu_custom_call.1} parent=1 // pred_check
      _
    $region23: #{tpu_custom_call.1} parent=1 // pred_check_branch
      %28 = sbr.rel (0) target = $region25
    $region24: #{tpu_custom_call.1} parent=1 // pred_region
      _
    $region25: #{tpu_custom_call.1} parent=1 // pred_fallthru
      _
    // Predicated region
    $region26: #{tpu_custom_call.1} parent=1 // pred_check
      _
    $region27: #{tpu_custom_call.1} parent=1 // pred_check_branch
      %30 = sbr.rel (0) target = $region29
    $region28: #{tpu_custom_call.1} parent=1 // pred_region
      _
    $region29: #{tpu_custom_call.1} parent=1 // pred_fallthru
      _
    // Predicated region
    $region30: #{tpu_custom_call.1} parent=1 // pred_check
      _
    $region31: #{tpu_custom_call.1} parent=1 // pred_check_branch
      %32 = sbr.rel (0) target = $region33
    $region32: #{tpu_custom_call.1} parent=1 // pred_region
      _
    $region33: #{tpu_custom_call.1} parent=1 // pred_fallthru
      _
    %v33 = vld [vmem:[%s1] sm:$0xff]
    %v34 = vld [vmem:[%s0] sm:$0xff]
    %v35 = vld [vmem:[%s0 + $0x8] sm:$0xff]
    %v36 = vld [vmem:[%s0 + $0x10] sm:$0xff]
    %v37 = vld [vmem:[%s0 + $0x18] sm:$0xff]
    %v38 = vld [vmem:[%s0 + $0x20] sm:$0xff]
    %v39 = vld [vmem:[%s0 + $0x28] sm:$0xff]
    %v40 = vld [vmem:[%s0 + $0x30] sm:$0xff]
    %v41 = vld [vmem:[%s0 + $0x38] sm:$0x3f]
    %vm42 = vcmask 64512
    %v44 = vsel %vm42, %v34, 0
    %v47 = vsel %vm42, %v35, 0
    %v50 = vsel %vm42, %v36, 0
    %v53 = vsel %vm42, %v37, 0
    %v56 = vsel %vm42, %v38, 0
    %v59 = vsel %vm42, %v39, 0
    %v62 = vsel %vm42, %v40, 0
    %v65 = vsel %vm42, %v41, 0
    %67 = vmatprep.subr.mxu0 0.0
    %68 = vmatpush1.msra.mxu0 0.0
    %69 = vmatprep.subr.mxu0 0.0
    %70 = vmatpush1.msra.mxu0 0.0
    %71 = vmatprep.subr.mxu0 0.0
    %72 = vmatpush1.msra.mxu0 0.0
    %73 = vmatprep.subr.mxu0 0.0
    %74 = vmatpush1.msra.mxu0 0.0
    %75 = vmatprep.subr.mxu0 0.0
    %76 = vmatpush1.msra.mxu0 0.0
    %77 = vmatprep.subr.mxu0 0.0
    %78 = vmatpush1.msra.mxu0 0.0
    %79 = vmatprep.subr.mxu0 0.0
    %80 = vmatpush1.msra.mxu0 0.0
    %81 = vmatprep.subr.mxu0 0.0
    %82 = vmatpush1.msra.mxu0 0.0
    %83 = vmatprep.subr.mxu0 0.0
    %84 = vmatpush1.msra.mxu0 0.0
    %85 = vmatprep.subr.mxu0 0.0
    %86 = vmatpush1.msra.mxu0 0.0
    %87 = vmatprep.subr.mxu0 0.0
    %88 = vmatpush1.msra.mxu0 0.0
    %89 = vmatprep.subr.mxu0 0.0
    %90 = vmatpush1.msra.mxu0 0.0
    %91 = vmatprep.subr.mxu0 0.0
    %92 = vmatpush1.msra.mxu0 0.0
    %93 = vmatprep.subr.mxu0 0.0
    %94 = vmatpush1.msra.mxu0 0.0
    %95 = vmatprep.subr.mxu0 0.0
    %96 = vmatpush1.msra.mxu0 0.0
    %97 = vmatprep.subr.mxu0 0.0
    %98 = vmatpush1.msra.mxu0 %v33
    %99 = vmatprep.subr.mxu0 0.0
    %100 = vmatpush2.msra.mxu0 0.0
    %101 = vmatprep.subr.mxu0 0.0
    %102 = vmatpush2.msra.mxu0 0.0
    %103 = vmatprep.subr.mxu0 0.0
    %104 = vmatpush2.msra.mxu0 0.0
    %105 = vmatprep.subr.mxu0 0.0
    %106 = vmatpush2.msra.mxu0 0.0
    %107 = vmatprep.subr.mxu0 0.0
    %108 = vmatpush2.msra.mxu0 0.0
    %109 = vmatprep.subr.mxu0 0.0
    %110 = vmatpush2.msra.mxu0 0.0
    %111 = vmatprep.subr.mxu0 0.0
    %112 = vmatpush2.msra.mxu0 0.0
    %113 = vmatprep.subr.mxu0 0.0
    %114 = vmatpush2.msra.mxu0 0.0
    %115 = vmatprep.subr.mxu0 0.0
    %116 = vmatpush2.msra.mxu0 0.0
    %117 = vmatprep.subr.mxu0 0.0
    %118 = vmatpush2.msra.mxu0 0.0
    %119 = vmatprep.subr.mxu0 0.0
    %120 = vmatpush2.msra.mxu0 0.0
    %121 = vmatprep.subr.mxu0 0.0
    %122 = vmatpush2.msra.mxu0 0.0
    %123 = vmatprep.subr.mxu0 0.0
    %124 = vmatpush2.msra.mxu0 0.0
    %125 = vmatprep.subr.mxu0 0.0
    %126 = vmatpush2.msra.mxu0 0.0
    %127 = vmatprep.subr.mxu0 0.0
    %128 = vmatpush2.msra.mxu0 0.0
    %129 = vmatprep.subr.mxu0 0.0
    %130 = vmatpush2.msra.mxu0 0.0
    %131 = vmatprep.mubr.f32.mxu0 0.0
    %132 = vmatmul.mubr.f32.gmra.mxu0 %v44
    %v133 = vpop.f32.mrf.mxu0
    %v134 = vadd.f32 0.0, %v133
    %v135 = vpop.f32.mrf.mxu0
    %136 = vmatprep.mubr.f32.mxu0 0.0
    %137 = vmatmul.mubr.f32.gmra.mxu0 %v47
    %v138 = vpop.f32.mrf.mxu0
    %v139 = vadd.f32 0.0, %v138
    %v140 = vpop.f32.mrf.mxu0
    %141 = vmatprep.mubr.f32.mxu0 0.0
    %142 = vmatmul.mubr.f32.gmra.mxu0 %v50
    %v143 = vpop.f32.mrf.mxu0
    %v144 = vadd.f32 0.0, %v143
    %v145 = vpop.f32.mrf.mxu0
    %146 = vmatprep.mubr.f32.mxu0 0.0
    %147 = vmatmul.mubr.f32.gmra.mxu0 %v53
    %v148 = vpop.f32.mrf.mxu0
    %v149 = vadd.f32 0.0, %v148
    %v150 = vpop.f32.mrf.mxu0
    %151 = vmatprep.mubr.f32.mxu0 0.0
    %152 = vmatmul.mubr.f32.gmra.mxu0 %v56
    %v153 = vpop.f32.mrf.mxu0
    %v154 = vadd.f32 0.0, %v153
    %v155 = vpop.f32.mrf.mxu0
    %156 = vmatprep.mubr.f32.mxu0 0.0
    %157 = vmatmul.mubr.f32.gmra.mxu0 %v59
    %v158 = vpop.f32.mrf.mxu0
    %v159 = vadd.f32 0.0, %v158
    %v160 = vpop.f32.mrf.mxu0
    %161 = vmatprep.mubr.f32.mxu0 0.0
    %162 = vmatmul.mubr.f32.gmra.mxu0 %v62
    %v163 = vpop.f32.mrf.mxu0
    %v164 = vadd.f32 0.0, %v163
    %v165 = vpop.f32.mrf.mxu0
    %166 = vmatprep.mubr.f32.mxu0 0.0
    %167 = vmatmul.mubr.f32.gmra.mxu0 %v65
    %v168 = vpop.f32.mrf.mxu0
    %v169 = vadd.f32 0.0, %v168
    %v170 = vpop.f32.mrf.mxu0
    %171 = vdwg.mxu0
    %s172 = scalar_lea.vmem %s0, 64
    %v173 = vld [vmem:[%s172] sm:$0xff]
    %v174 = vld [vmem:[%s172 + $0x8] sm:$0xff]
    %v175 = vld [vmem:[%s172 + $0x10] sm:$0xff]
    %v176 = vld [vmem:[%s172 + $0x18] sm:$0xff]
    %v177 = vld [vmem:[%s172 + $0x20] sm:$0xff]
    %v178 = vld [vmem:[%s172 + $0x28] sm:$0xff]
    %v179 = vld [vmem:[%s172 + $0x30] sm:$0xff]
    %v180 = vld [vmem:[%s172 + $0x38] sm:$0x3f]
    %v182 = vsel %vm42, %v173, 0
    %v185 = vsel %vm42, %v174, 0
    %v188 = vsel %vm42, %v175, 0
    %v191 = vsel %vm42, %v176, 0
    %v194 = vsel %vm42, %v177, 0
    %v197 = vsel %vm42, %v178, 0
    %v200 = vsel %vm42, %v179, 0
    %v203 = vsel %vm42, %v180, 0
    %205 = vmatprep.subr.mxu0 0.0
    %206 = vmatpush1.msra.mxu0 0.0
    %207 = vmatprep.subr.mxu0 0.0
    %208 = vmatpush1.msra.mxu0 0.0
    %209 = vmatprep.subr.mxu0 0.0
    %210 = vmatpush1.msra.mxu0 0.0
    %211 = vmatprep.subr.mxu0 0.0
    %212 = vmatpush1.msra.mxu0 0.0
    %213 = vmatprep.subr.mxu0 0.0
    %214 = vmatpush1.msra.mxu0 0.0
    %215 = vmatprep.subr.mxu0 0.0
    %216 = vmatpush1.msra.mxu0 0.0
    %217 = vmatprep.subr.mxu0 0.0
    %218 = vmatpush1.msra.mxu0 0.0
    %219 = vmatprep.subr.mxu0 0.0
    %220 = vmatpush1.msra.mxu0 0.0
    %221 = vmatprep.subr.mxu0 0.0
    %222 = vmatpush1.msra.mxu0 0.0
    %223 = vmatprep.subr.mxu0 0.0
    %224 = vmatpush1.msra.mxu0 0.0
    %225 = vmatprep.subr.mxu0 0.0
    %226 = vmatpush1.msra.mxu0 0.0
    %227 = vmatprep.subr.mxu0 0.0
    %228 = vmatpush1.msra.mxu0 0.0
    %229 = vmatprep.subr.mxu0 0.0
    %230 = vmatpush1.msra.mxu0 0.0
    %231 = vmatprep.subr.mxu0 0.0
    %232 = vmatpush1.msra.mxu0 0.0
    %233 = vmatprep.subr.mxu0 0.0
    %234 = vmatpush1.msra.mxu0 0.0
    %235 = vmatprep.subr.mxu0 0.0
    %236 = vmatpush1.msra.mxu0 %v33
    %237 = vmatprep.subr.mxu0 0.0
    %238 = vmatpush2.msra.mxu0 0.0
    %239 = vmatprep.subr.mxu0 0.0
    %240 = vmatpush2.msra.mxu0 0.0
    %241 = vmatprep.subr.mxu0 0.0
    %242 = vmatpush2.msra.mxu0 0.0
    %243 = vmatprep.subr.mxu0 0.0
    %244 = vmatpush2.msra.mxu0 0.0
    %245 = vmatprep.subr.mxu0 0.0
    %246 = vmatpush2.msra.mxu0 0.0
    %247 = vmatprep.subr.mxu0 0.0
    %248 = vmatpush2.msra.mxu0 0.0
    %249 = vmatprep.subr.mxu0 0.0
    %250 = vmatpush2.msra.mxu0 0.0
    %251 = vmatprep.subr.mxu0 0.0
    %252 = vmatpush2.msra.mxu0 0.0
    %253 = vmatprep.subr.mxu0 0.0
    %254 = vmatpush2.msra.mxu0 0.0
    %255 = vmatprep.subr.mxu0 0.0
    %256 = vmatpush2.msra.mxu0 0.0
    %257 = vmatprep.subr.mxu0 0.0
    %258 = vmatpush2.msra.mxu0 0.0
    %259 = vmatprep.subr.mxu0 0.0
    %260 = vmatpush2.msra.mxu0 0.0
    %261 = vmatprep.subr.mxu0 0.0
    %262 = vmatpush2.msra.mxu0 0.0
    %263 = vmatprep.subr.mxu0 0.0
    %264 = vmatpush2.msra.mxu0 0.0
    %265 = vmatprep.subr.mxu0 0.0
    %266 = vmatpush2.msra.mxu0 0.0
    %267 = vmatprep.subr.mxu0 0.0
    %268 = vmatpush2.msra.mxu0 0.0
    %269 = vmatprep.mubr.f32.mxu0 0.0
    %270 = vmatmul.mubr.f32.gmra.mxu0 %v182
    %v271 = vpop.f32.mrf.mxu0
    %v272 = vadd.f32 0.0, %v271
    %v273 = vpop.f32.mrf.mxu0
    %274 = vmatprep.mubr.f32.mxu0 0.0
    %275 = vmatmul.mubr.f32.gmra.mxu0 %v185
    %v276 = vpop.f32.mrf.mxu0
    %v277 = vadd.f32 0.0, %v276
    %v278 = vpop.f32.mrf.mxu0
    %279 = vmatprep.mubr.f32.mxu0 0.0
    %280 = vmatmul.mubr.f32.gmra.mxu0 %v188
    %v281 = vpop.f32.mrf.mxu0
    %v282 = vadd.f32 0.0, %v281
    %v283 = vpop.f32.mrf.mxu0
    %284 = vmatprep.mubr.f32.mxu0 0.0
    %285 = vmatmul.mubr.f32.gmra.mxu0 %v191
    %v286 = vpop.f32.mrf.mxu0
    %v287 = vadd.f32 0.0, %v286
    %v288 = vpop.f32.mrf.mxu0
    %289 = vmatprep.mubr.f32.mxu0 0.0
    %290 = vmatmul.mubr.f32.gmra.mxu0 %v194
    %v291 = vpop.f32.mrf.mxu0
    %v292 = vadd.f32 0.0, %v291
    %v293 = vpop.f32.mrf.mxu0
    %294 = vmatprep.mubr.f32.mxu0 0.0
    %295 = vmatmul.mubr.f32.gmra.mxu0 %v197
    %v296 = vpop.f32.mrf.mxu0
    %v297 = vadd.f32 0.0, %v296
    %v298 = vpop.f32.mrf.mxu0
    %299 = vmatprep.mubr.f32.mxu0 0.0
    %300 = vmatmul.mubr.f32.gmra.mxu0 %v200
    %v301 = vpop.f32.mrf.mxu0
    %v302 = vadd.f32 0.0, %v301
    %v303 = vpop.f32.mrf.mxu0
    %304 = vmatprep.mubr.f32.mxu0 0.0
    %305 = vmatmul.mubr.f32.gmra.mxu0 %v203
    %v306 = vpop.f32.mrf.mxu0
    %v307 = vadd.f32 0.0, %v306
    %v308 = vpop.f32.mrf.mxu0
    %309 = vdwg.mxu0
    %s310 = scalar_lea.vmem %s0, 128
    %v311 = vld [vmem:[%s310] sm:$0xff]
    %v312 = vld [vmem:[%s310 + $0x8] sm:$0xff]
    %v313 = vld [vmem:[%s310 + $0x10] sm:$0xff]
    %v314 = vld [vmem:[%s310 + $0x18] sm:$0xff]
    %v315 = vld [vmem:[%s310 + $0x20] sm:$0xff]
    %v316 = vld [vmem:[%s310 + $0x28] sm:$0xff]
    %v317 = vld [vmem:[%s310 + $0x30] sm:$0xff]
    %v318 = vld [vmem:[%s310 + $0x38] sm:$0x3f]
    %v320 = vsel %vm42, %v311, 0
    %v323 = vsel %vm42, %v312, 0
    %v326 = vsel %vm42, %v313, 0
    %v329 = vsel %vm42, %v314, 0
    %v332 = vsel %vm42, %v315, 0
    %v335 = vsel %vm42, %v316, 0
    %v338 = vsel %vm42, %v317, 0
    %v341 = vsel %vm42, %v318, 0
    %343 = vmatprep.subr.mxu0 0.0
    %344 = vmatpush1.msra.mxu0 0.0
    %345 = vmatprep.subr.mxu0 0.0
    %346 = vmatpush1.msra.mxu0 0.0
    %347 = vmatprep.subr.mxu0 0.0
    %348 = vmatpush1.msra.mxu0 0.0
    %349 = vmatprep.subr.mxu0 0.0
    %350 = vmatpush1.msra.mxu0 0.0
    %351 = vmatprep.subr.mxu0 0.0
    %352 = vmatpush1.msra.mxu0 0.0
    %353 = vmatprep.subr.mxu0 0.0
    %354 = vmatpush1.msra.mxu0 0.0
    %355 = vmatprep.subr.mxu0 0.0
    %356 = vmatpush1.msra.mxu0 0.0
    %357 = vmatprep.subr.mxu0 0.0
    %358 = vmatpush1.msra.mxu0 0.0
    %359 = vmatprep.subr.mxu0 0.0
    %360 = vmatpush1.msra.mxu0 0.0
    %361 = vmatprep.subr.mxu0 0.0
    %362 = vmatpush1.msra.mxu0 0.0
    %363 = vmatprep.subr.mxu0 0.0
    %364 = vmatpush1.msra.mxu0 0.0
    %365 = vmatprep.subr.mxu0 0.0
    %366 = vmatpush1.msra.mxu0 0.0
    %367 = vmatprep.subr.mxu0 0.0
    %368 = vmatpush1.msra.mxu0 0.0
    %369 = vmatprep.subr.mxu0 0.0
    %370 = vmatpush1.msra.mxu0 0.0
    %371 = vmatprep.subr.mxu0 0.0
    %372 = vmatpush1.msra.mxu0 0.0
    %373 = vmatprep.subr.mxu0 0.0
    %374 = vmatpush1.msra.mxu0 %v33
    %375 = vmatprep.subr.mxu0 0.0
    %376 = vmatpush2.msra.mxu0 0.0
    %377 = vmatprep.subr.mxu0 0.0
    %378 = vmatpush2.msra.mxu0 0.0
    %379 = vmatprep.subr.mxu0 0.0
    %380 = vmatpush2.msra.mxu0 0.0
    %381 = vmatprep.subr.mxu0 0.0
    %382 = vmatpush2.msra.mxu0 0.0
    %383 = vmatprep.subr.mxu0 0.0
    %384 = vmatpush2.msra.mxu0 0.0
    %385 = vmatprep.subr.mxu0 0.0
    %386 = vmatpush2.msra.mxu0 0.0
    %387 = vmatprep.subr.mxu0 0.0
    %388 = vmatpush2.msra.mxu0 0.0
    %389 = vmatprep.subr.mxu0 0.0
    %390 = vmatpush2.msra.mxu0 0.0
    %391 = vmatprep.subr.mxu0 0.0
    %392 = vmatpush2.msra.mxu0 0.0
    %393 = vmatprep.subr.mxu0 0.0
    %394 = vmatpush2.msra.mxu0 0.0
    %395 = vmatprep.subr.mxu0 0.0
    %396 = vmatpush2.msra.mxu0 0.0
    %397 = vmatprep.subr.mxu0 0.0
    %398 = vmatpush2.msra.mxu0 0.0
    %399 = vmatprep.subr.mxu0 0.0
    %400 = vmatpush2.msra.mxu0 0.0
    %401 = vmatprep.subr.mxu0 0.0
    %402 = vmatpush2.msra.mxu0 0.0
    %403 = vmatprep.subr.mxu0 0.0
    %404 = vmatpush2.msra.mxu0 0.0
    %405 = vmatprep.subr.mxu0 0.0
    %406 = vmatpush2.msra.mxu0 0.0
    %407 = vmatprep.mubr.f32.mxu0 0.0
    %408 = vmatmul.mubr.f32.gmra.mxu0 %v320
    %v409 = vpop.f32.mrf.mxu0
    %v410 = vadd.f32 0.0, %v409
    %v411 = vpop.f32.mrf.mxu0
    %412 = vmatprep.mubr.f32.mxu0 0.0
    %413 = vmatmul.mubr.f32.gmra.mxu0 %v323
    %v414 = vpop.f32.mrf.mxu0
    %v415 = vadd.f32 0.0, %v414
    %v416 = vpop.f32.mrf.mxu0
    %417 = vmatprep.mubr.f32.mxu0 0.0
    %418 = vmatmul.mubr.f32.gmra.mxu0 %v326
    %v419 = vpop.f32.mrf.mxu0
    %v420 = vadd.f32 0.0, %v419
    %v421 = vpop.f32.mrf.mxu0
    %422 = vmatprep.mubr.f32.mxu0 0.0
    %423 = vmatmul.mubr.f32.gmra.mxu0 %v329
    %v424 = vpop.f32.mrf.mxu0
    %v425 = vadd.f32 0.0, %v424
    %v426 = vpop.f32.mrf.mxu0
    %427 = vmatprep.mubr.f32.mxu0 0.0
    %428 = vmatmul.mubr.f32.gmra.mxu0 %v332
    %v429 = vpop.f32.mrf.mxu0
    %v430 = vadd.f32 0.0, %v429
    %v431 = vpop.f32.mrf.mxu0
    %432 = vmatprep.mubr.f32.mxu0 0.0
    %433 = vmatmul.mubr.f32.gmra.mxu0 %v335
    %v434 = vpop.f32.mrf.mxu0
    %v435 = vadd.f32 0.0, %v434
    %v436 = vpop.f32.mrf.mxu0
    %437 = vmatprep.mubr.f32.mxu0 0.0
    %438 = vmatmul.mubr.f32.gmra.mxu0 %v338
    %v439 = vpop.f32.mrf.mxu0
    %v440 = vadd.f32 0.0, %v439
    %v441 = vpop.f32.mrf.mxu0
    %442 = vmatprep.mubr.f32.mxu0 0.0
    %443 = vmatmul.mubr.f32.gmra.mxu0 %v341
    %v444 = vpop.f32.mrf.mxu0
    %v445 = vadd.f32 0.0, %v444
    %v446 = vpop.f32.mrf.mxu0
    %447 = vdwg.mxu0
    %s448 = scalar_lea.vmem %s0, 192
    %v449 = vld [vmem:[%s448] sm:$0xff]
    %v450 = vld [vmem:[%s448 + $0x8] sm:$0xff]
    %v451 = vld [vmem:[%s448 + $0x10] sm:$0xff]
    %v452 = vld [vmem:[%s448 + $0x18] sm:$0xff]
    %v453 = vld [vmem:[%s448 + $0x20] sm:$0xff]
    %v454 = vld [vmem:[%s448 + $0x28] sm:$0xff]
    %v455 = vld [vmem:[%s448 + $0x30] sm:$0xff]
    %v456 = vld [vmem:[%s448 + $0x38] sm:$0x3f]
    %v458 = vsel %vm42, %v449, 0
    %v461 = vsel %vm42, %v450, 0
    %v464 = vsel %vm42, %v451, 0
    %v467 = vsel %vm42, %v452, 0
    %v470 = vsel %vm42, %v453, 0
    %v473 = vsel %vm42, %v454, 0
    %v476 = vsel %vm42, %v455, 0
    %v479 = vsel %vm42, %v456, 0
    %481 = vmatprep.subr.mxu0 0.0
    %482 = vmatpush1.msra.mxu0 0.0
    %483 = vmatprep.subr.mxu0 0.0
    %484 = vmatpush1.msra.mxu0 0.0
    %485 = vmatprep.subr.mxu0 0.0
    %486 = vmatpush1.msra.mxu0 0.0
    %487 = vmatprep.subr.mxu0 0.0
    %488 = vmatpush1.msra.mxu0 0.0
    %489 = vmatprep.subr.mxu0 0.0
    %490 = vmatpush1.msra.mxu0 0.0
    %491 = vmatprep.subr.mxu0 0.0
    %492 = vmatpush1.msra.mxu0 0.0
    %493 = vmatprep.subr.mxu0 0.0
    %494 = vmatpush1.msra.mxu0 0.0
    %495 = vmatprep.subr.mxu0 0.0
    %496 = vmatpush1.msra.mxu0 0.0
    %497 = vmatprep.subr.mxu0 0.0
    %498 = vmatpush1.msra.mxu0 0.0
    %499 = vmatprep.subr.mxu0 0.0
    %500 = vmatpush1.msra.mxu0 0.0
    %501 = vmatprep.subr.mxu0 0.0
    %502 = vmatpush1.msra.mxu0 0.0
    %503 = vmatprep.subr.mxu0 0.0
    %504 = vmatpush1.msra.mxu0 0.0
    %505 = vmatprep.subr.mxu0 0.0
    %506 = vmatpush1.msra.mxu0 0.0
    %507 = vmatprep.subr.mxu0 0.0
    %508 = vmatpush1.msra.mxu0 0.0
    %509 = vmatprep.subr.mxu0 0.0
    %510 = vmatpush1.msra.mxu0 0.0
    %511 = vmatprep.subr.mxu0 0.0
    %512 = vmatpush1.msra.mxu0 %v33
    %513 = vmatprep.subr.mxu0 0.0
    %514 = vmatpush2.msra.mxu0 0.0
    %515 = vmatprep.subr.mxu0 0.0
    %516 = vmatpush2.msra.mxu0 0.0
    %517 = vmatprep.subr.mxu0 0.0
    %518 = vmatpush2.msra.mxu0 0.0
    %519 = vmatprep.subr.mxu0 0.0
    %520 = vmatpush2.msra.mxu0 0.0
    %521 = vmatprep.subr.mxu0 0.0
    %522 = vmatpush2.msra.mxu0 0.0
    %523 = vmatprep.subr.mxu0 0.0
    %524 = vmatpush2.msra.mxu0 0.0
    %525 = vmatprep.subr.mxu0 0.0
    %526 = vmatpush2.msra.mxu0 0.0
    %527 = vmatprep.subr.mxu0 0.0
    %528 = vmatpush2.msra.mxu0 0.0
    %529 = vmatprep.subr.mxu0 0.0
    %530 = vmatpush2.msra.mxu0 0.0
    %531 = vmatprep.subr.mxu0 0.0
    %532 = vmatpush2.msra.mxu0 0.0
    %533 = vmatprep.subr.mxu0 0.0
    %534 = vmatpush2.msra.mxu0 0.0
    %535 = vmatprep.subr.mxu0 0.0
    %536 = vmatpush2.msra.mxu0 0.0
    %537 = vmatprep.subr.mxu0 0.0
    %538 = vmatpush2.msra.mxu0 0.0
    %539 = vmatprep.subr.mxu0 0.0
    %540 = vmatpush2.msra.mxu0 0.0
    %541 = vmatprep.subr.mxu0 0.0
    %542 = vmatpush2.msra.mxu0 0.0
    %543 = vmatprep.subr.mxu0 0.0
    %544 = vmatpush2.msra.mxu0 0.0
    %545 = vmatprep.mubr.f32.mxu0 0.0
    %546 = vmatmul.mubr.f32.gmra.mxu0 %v458
    %v547 = vpop.f32.mrf.mxu0
    %v548 = vadd.f32 0.0, %v547
    %v549 = vpop.f32.mrf.mxu0
    %550 = vmatprep.mubr.f32.mxu0 0.0
    %551 = vmatmul.mubr.f32.gmra.mxu0 %v461
    %v552 = vpop.f32.mrf.mxu0
    %v553 = vadd.f32 0.0, %v552
    %v554 = vpop.f32.mrf.mxu0
    %555 = vmatprep.mubr.f32.mxu0 0.0
    %556 = vmatmul.mubr.f32.gmra.mxu0 %v464
    %v557 = vpop.f32.mrf.mxu0
    %v558 = vadd.f32 0.0, %v557
    %v559 = vpop.f32.mrf.mxu0
    %560 = vmatprep.mubr.f32.mxu0 0.0
    %561 = vmatmul.mubr.f32.gmra.mxu0 %v467
    %v562 = vpop.f32.mrf.mxu0
    %v563 = vadd.f32 0.0, %v562
    %v564 = vpop.f32.mrf.mxu0
    %565 = vmatprep.mubr.f32.mxu0 0.0
    %566 = vmatmul.mubr.f32.gmra.mxu0 %v470
    %v567 = vpop.f32.mrf.mxu0
    %v568 = vadd.f32 0.0, %v567
    %v569 = vpop.f32.mrf.mxu0
    %570 = vmatprep.mubr.f32.mxu0 0.0
    %571 = vmatmul.mubr.f32.gmra.mxu0 %v473
    %v572 = vpop.f32.mrf.mxu0
    %v573 = vadd.f32 0.0, %v572
    %v574 = vpop.f32.mrf.mxu0
    %575 = vmatprep.mubr.f32.mxu0 0.0
    %576 = vmatmul.mubr.f32.gmra.mxu0 %v476
    %v577 = vpop.f32.mrf.mxu0
    %v578 = vadd.f32 0.0, %v577
    %v579 = vpop.f32.mrf.mxu0
    %580 = vmatprep.mubr.f32.mxu0 0.0
    %581 = vmatmul.mubr.f32.gmra.mxu0 %v479
    %v582 = vpop.f32.mrf.mxu0
    %v583 = vadd.f32 0.0, %v582
    %v584 = vpop.f32.mrf.mxu0
    %585 = vdwg.mxu0
    %v586 = vmax.f32 %v134, %v272
    %v587 = vmax.f32 %v139, %v277
    %v588 = vmax.f32 %v144, %v282
    %v589 = vmax.f32 %v149, %v287
    %v590 = vmax.f32 %v154, %v292
    %v591 = vmax.f32 %v159, %v297
    %v592 = vmax.f32 %v164, %v302
    %v593 = vmax.f32 %v169, %v307
    %v594 = vmax.f32 %v410, %v548
    %v595 = vmax.f32 %v415, %v553
    %v596 = vmax.f32 %v420, %v558
    %v597 = vmax.f32 %v425, %v563
    %v598 = vmax.f32 %v430, %v568
    %v599 = vmax.f32 %v435, %v573
    %v600 = vmax.f32 %v440, %v578
    %v601 = vmax.f32 %v445, %v583
    %v602 = vmax.f32 %v586, %v594
    %v603 = vmax.f32 %v587, %v595
    %v604 = vmax.f32 %v588, %v596
    %v605 = vmax.f32 %v589, %v597
    %v606 = vmax.f32 %v590, %v598
    %v607 = vmax.f32 %v591, %v599
    %v608 = vmax.f32 %v592, %v600
    %v609 = vmax.f32 %v593, %v601
    %v610 = vld [vmem:[%s2] sm:$0x1]
    %v612 = vlaneseq
    %v613 = vshrl.u32 %v612, 7
    %v614 = vsub.s32 0, %v613
    %v615 = vrot.slane %v610, %v614
    %v617 = vadd.f32 %v602, %v615
    %v618 = vadd.f32 %v603, %v615
    %v619 = vadd.f32 %v604, %v615
    %v620 = vadd.f32 %v605, %v615
    %v621 = vadd.f32 %v606, %v615
    %v622 = vadd.f32 %v607, %v615
    %v623 = vadd.f32 %v608, %v615
    %v624 = vadd.f32 %v609, %v615
    %v625 = vmax.f32 %v617, 0.0
    %v626 = vmax.f32 %v618, 0.0
    %v627 = vmax.f32 %v619, 0.0
    %v628 = vmax.f32 %v620, 0.0
    %v629 = vmax.f32 %v621, 0.0
    %v630 = vmax.f32 %v622, 0.0
    %v631 = vmax.f32 %v623, 0.0
    %v632 = vmax.f32 %v624, 0.0
    %v633 = vld [vmem:[%s3] sm:$0xff]
    %v634 = vld [vmem:[%s5] sm:$0x1]
    %v636 = vlaneseq
    %v637 = vshrl.u32 %v636, 7
    %v638 = vsub.s32 0, %v637
    %v639 = vrot.slane %v634, %v638
    %v642 = vsel %vm42, %v625, 0
    %v645 = vsel %vm42, %v626, 0
    %v648 = vsel %vm42, %v627, 0
    %v651 = vsel %vm42, %v628, 0
    %v654 = vsel %vm42, %v629, 0
    %v657 = vsel %vm42, %v630, 0
    %v660 = vsel %vm42, %v631, 0
    %v663 = vsel %vm42, %v632, 0
    %665 = vmatprep.subr.mxu0 0.0
    %666 = vmatpush1.msra.mxu0 0.0
    %667 = vmatprep.subr.mxu0 0.0
    %668 = vmatpush1.msra.mxu0 0.0
    %669 = vmatprep.subr.mxu0 0.0
    %670 = vmatpush1.msra.mxu0 0.0
    %671 = vmatprep.subr.mxu0 0.0
    %672 = vmatpush1.msra.mxu0 0.0
    %673 = vmatprep.subr.mxu0 0.0
    %674 = vmatpush1.msra.mxu0 0.0
    %675 = vmatprep.subr.mxu0 0.0
    %676 = vmatpush1.msra.mxu0 0.0
    %677 = vmatprep.subr.mxu0 0.0
    %678 = vmatpush1.msra.mxu0 0.0
    %679 = vmatprep.subr.mxu0 0.0
    %680 = vmatpush1.msra.mxu0 0.0
    %681 = vmatprep.subr.mxu0 0.0
    %682 = vmatpush1.msra.mxu0 0.0
    %683 = vmatprep.subr.mxu0 0.0
    %684 = vmatpush1.msra.mxu0 0.0
    %685 = vmatprep.subr.mxu0 0.0
    %686 = vmatpush1.msra.mxu0 0.0
    %687 = vmatprep.subr.mxu0 0.0
    %688 = vmatpush1.msra.mxu0 0.0
    %689 = vmatprep.subr.mxu0 0.0
    %690 = vmatpush1.msra.mxu0 0.0
    %691 = vmatprep.subr.mxu0 0.0
    %692 = vmatpush1.msra.mxu0 0.0
    %693 = vmatprep.subr.mxu0 0.0
    %694 = vmatpush1.msra.mxu0 0.0
    %695 = vmatprep.subr.mxu0 0.0
    %696 = vmatpush1.msra.mxu0 %v633
    %697 = vmatprep.subr.mxu0 0.0
    %698 = vmatpush2.msra.mxu0 0.0
    %699 = vmatprep.subr.mxu0 0.0
    %700 = vmatpush2.msra.mxu0 0.0
    %701 = vmatprep.subr.mxu0 0.0
    %702 = vmatpush2.msra.mxu0 0.0
    %703 = vmatprep.subr.mxu0 0.0
    %704 = vmatpush2.msra.mxu0 0.0
    %705 = vmatprep.subr.mxu0 0.0
    %706 = vmatpush2.msra.mxu0 0.0
    %707 = vmatprep.subr.mxu0 0.0
    %708 = vmatpush2.msra.mxu0 0.0
    %709 = vmatprep.subr.mxu0 0.0
    %710 = vmatpush2.msra.mxu0 0.0
    %711 = vmatprep.subr.mxu0 0.0
    %712 = vmatpush2.msra.mxu0 0.0
    %713 = vmatprep.subr.mxu0 0.0
    %714 = vmatpush2.msra.mxu0 0.0
    %715 = vmatprep.subr.mxu0 0.0
    %716 = vmatpush2.msra.mxu0 0.0
    %717 = vmatprep.subr.mxu0 0.0
    %718 = vmatpush2.msra.mxu0 0.0
    %719 = vmatprep.subr.mxu0 0.0
    %720 = vmatpush2.msra.mxu0 0.0
    %721 = vmatprep.subr.mxu0 0.0
    %722 = vmatpush2.msra.mxu0 0.0
    %723 = vmatprep.subr.mxu0 0.0
    %724 = vmatpush2.msra.mxu0 0.0
    %725 = vmatprep.subr.mxu0 0.0
    %726 = vmatpush2.msra.mxu0 0.0
    %727 = vmatprep.subr.mxu0 0.0
    %728 = vmatpush2.msra.mxu0 0.0
    %729 = vmatprep.mubr.f32.mxu0 0.0
    %730 = vmatmul.mubr.f32.gmra.mxu0 %v642
    %v731 = vpop.f32.mrf.mxu0
    %v732 = vadd.f32 %v639, %v731
    %v733 = vpop.f32.mrf.mxu0
    %734 = vmatprep.mubr.f32.mxu0 0.0
    %735 = vmatmul.mubr.f32.gmra.mxu0 %v645
    %v736 = vpop.f32.mrf.mxu0
    %v737 = vadd.f32 %v639, %v736
    %v738 = vpop.f32.mrf.mxu0
    %739 = vmatprep.mubr.f32.mxu0 0.0
    %740 = vmatmul.mubr.f32.gmra.mxu0 %v648
    %v741 = vpop.f32.mrf.mxu0
    %v742 = vadd.f32 %v639, %v741
    %v743 = vpop.f32.mrf.mxu0
    %744 = vmatprep.mubr.f32.mxu0 0.0
    %745 = vmatmul.mubr.f32.gmra.mxu0 %v651
    %v746 = vpop.f32.mrf.mxu0
    %v747 = vadd.f32 %v639, %v746
    %v748 = vpop.f32.mrf.mxu0
    %749 = vmatprep.mubr.f32.mxu0 0.0
    %750 = vmatmul.mubr.f32.gmra.mxu0 %v654
    %v751 = vpop.f32.mrf.mxu0
    %v752 = vadd.f32 %v639, %v751
    %v753 = vpop.f32.mrf.mxu0
    %754 = vmatprep.mubr.f32.mxu0 0.0
    %755 = vmatmul.mubr.f32.gmra.mxu0 %v657
    %v756 = vpop.f32.mrf.mxu0
    %v757 = vadd.f32 %v639, %v756
    %v758 = vpop.f32.mrf.mxu0
    %759 = vmatprep.mubr.f32.mxu0 0.0
    %760 = vmatmul.mubr.f32.gmra.mxu0 %v660
    %v761 = vpop.f32.mrf.mxu0
    %v762 = vadd.f32 %v639, %v761
    %v763 = vpop.f32.mrf.mxu0
    %764 = vmatprep.mubr.f32.mxu0 0.0
    %765 = vmatmul.mubr.f32.gmra.mxu0 %v663
    %v766 = vpop.f32.mrf.mxu0
    %v767 = vadd.f32 %v639, %v766
    %v768 = vpop.f32.mrf.mxu0
    %769 = vdwg.mxu0
    %770 = vst [vmem:[#allocation2] sm:$0x3] %v732
    %s771 = scalar_lea.vmem [#allocation2], 2
    %772 = vst [vmem:[%s771 - $0x2] sm:$0xc] %v732
    %s773 = scalar_lea.vmem [#allocation2], 4
    %774 = vst [vmem:[%s773 - $0x4] sm:$0x30] %v732
    %s775 = scalar_lea.vmem [#allocation2], 6
    %776 = vst [vmem:[%s775 - $0x6] sm:$0xc0] %v732
    %s777 = scalar_lea.vmem [#allocation2], 8
    %778 = vst [vmem:[%s777] sm:$0x3] %v737
    %s779 = scalar_lea.vmem [#allocation2], 10
    %780 = vst [vmem:[%s779 - $0x2] sm:$0xc] %v737
    %s781 = scalar_lea.vmem [#allocation2], 12
    %782 = vst [vmem:[%s781 - $0x4] sm:$0x30] %v737
    %s783 = scalar_lea.vmem [#allocation2], 14
    %784 = vst [vmem:[%s783 - $0x6] sm:$0xc0] %v737
    %s785 = scalar_lea.vmem [#allocation2], 16
    %786 = vst [vmem:[%s785] sm:$0x3] %v742
    %s787 = scalar_lea.vmem [#allocation2], 18
    %788 = vst [vmem:[%s787 - $0x2] sm:$0xc] %v742
    %s789 = scalar_lea.vmem [#allocation2], 20
    %790 = vst [vmem:[%s789 - $0x4] sm:$0x30] %v742
    %s791 = scalar_lea.vmem [#allocation2], 22
    %792 = vst [vmem:[%s791 - $0x6] sm:$0xc0] %v742
    %s793 = scalar_lea.vmem [#allocation2], 24
    %794 = vst [vmem:[%s793] sm:$0x3] %v747
    %s795 = scalar_lea.vmem [#allocation2], 26
    %796 = vst [vmem:[%s795 - $0x2] sm:$0xc] %v747
    %s797 = scalar_lea.vmem [#allocation2], 28
    %798 = vst [vmem:[%s797 - $0x4] sm:$0x30] %v747
    %s799 = scalar_lea.vmem [#allocation2], 30
    %800 = vst [vmem:[%s799 - $0x6] sm:$0xc0] %v747
    %s801 = scalar_lea.vmem [#allocation2], 32
    %802 = vst [vmem:[%s801] sm:$0x3] %v752
    %s803 = scalar_lea.vmem [#allocation2], 34
    %804 = vst [vmem:[%s803 - $0x2] sm:$0xc] %v752
    %s805 = scalar_lea.vmem [#allocation2], 36
    %806 = vst [vmem:[%s805 - $0x4] sm:$0x30] %v752
    %s807 = scalar_lea.vmem [#allocation2], 38
    %808 = vst [vmem:[%s807 - $0x6] sm:$0xc0] %v752
    %s809 = scalar_lea.vmem [#allocation2], 40
    %810 = vst [vmem:[%s809] sm:$0x3] %v757
    %s811 = scalar_lea.vmem [#allocation2], 42
    %812 = vst [vmem:[%s811 - $0x2] sm:$0xc] %v757
    %s813 = scalar_lea.vmem [#allocation2], 44
    %814 = vst [vmem:[%s813 - $0x4] sm:$0x30] %v757
    %s815 = scalar_lea.vmem [#allocation2], 46
    %816 = vst [vmem:[%s815 - $0x6] sm:$0xc0] %v757
    %s817 = scalar_lea.vmem [#allocation2], 48
    %818 = vst [vmem:[%s817] sm:$0x3] %v762
    %s819 = scalar_lea.vmem [#allocation2], 50
    %820 = vst [vmem:[%s819 - $0x2] sm:$0xc] %v762
    %s821 = scalar_lea.vmem [#allocation2], 52
    %822 = vst [vmem:[%s821 - $0x4] sm:$0x30] %v762
    %s823 = scalar_lea.vmem [#allocation2], 54
    %824 = vst [vmem:[%s823 - $0x6] sm:$0xc0] %v762
    %s825 = scalar_lea.vmem [#allocation2], 56
    %826 = vst [vmem:[%s825] sm:$0x3] %v767
    %s827 = scalar_lea.vmem [#allocation2], 58
    %828 = vst [vmem:[%s827 - $0x2] sm:$0xc] %v767
    %s829 = scalar_lea.vmem [#allocation2], 60
    %830 = vst [vmem:[%s829 - $0x4] sm:$0x30] %v767
    %v831 = vld [vmem:[%s4] sm:$0xff]
    %v832 = vld [vmem:[%s4 + $0x8] sm:$0xff]
    %v833 = vld [vmem:[%s4 + $0x10] sm:$0xff]
    %v834 = vld [vmem:[%s4 + $0x18] sm:$0xff]
    %v835 = vlaneseq
    %v836 = vand.u32 %v835, 127
    %vm837 = vcmp.ge.s32.totalorder %v836, 64
    %vm838 = vcmp.lt.s32.totalorder %v836, 96
    %vm839 = vmand %vm837, %vm838
    %v840 = vsel %vm839, 1.0, 0.5
    %v841 = vsel %vm839, 0.0, 0.5
    %v842 = vld [vmem:[#allocation2] sm:$0x3]
    %vm843 = vcmask 261120
    %v845 = vsel %vm843, 0.0, 0
    %847 = vmatprep.subr.mxu0 0.0
    %848 = vmatpush1.msra.mxu0 0.0
    %849 = vmatprep.subr.mxu0 0.0
    %850 = vmatpush1.msra.mxu0 0.0
    %851 = vmatprep.subr.mxu0 0.0
    %852 = vmatpush1.msra.mxu0 0.0
    %853 = vmatprep.subr.mxu0 0.0
    %854 = vmatpush1.msra.mxu0 0.0
    %855 = vmatprep.subr.mxu0 0.0
    %856 = vmatpush1.msra.mxu0 0.0
    %857 = vmatprep.subr.mxu0 0.0
    %858 = vmatpush1.msra.mxu0 0.0
    %859 = vmatprep.subr.mxu0 0.0
    %860 = vmatpush1.msra.mxu0 0.0
    %861 = vmatprep.subr.mxu0 0.0
    %862 = vmatpush1.msra.mxu0 0.0
    %863 = vmatprep.subr.mxu0 0.0
    %864 = vmatpush1.msra.mxu0 0.0
    %865 = vmatprep.subr.mxu0 0.0
    %866 = vmatpush1.msra.mxu0 0.0
    %867 = vmatprep.subr.mxu0 0.0
    %868 = vmatpush1.msra.mxu0 0.0
    %869 = vmatprep.subr.mxu0 0.0
    %870 = vmatpush1.msra.mxu0 0.0
    %871 = vmatprep.subr.mxu0 0.0
    %872 = vmatpush1.msra.mxu0 %v834
    %873 = vmatprep.subr.mxu0 0.0
    %874 = vmatpush1.msra.mxu0 %v833
    %875 = vmatprep.subr.mxu0 0.0
    %876 = vmatpush1.msra.mxu0 %v832
    %877 = vmatprep.subr.mxu0 0.0
    %878 = vmatpush1.msra.mxu0 %v831
    %879 = vmatprep.subr.mxu0 0.0
    %880 = vmatpush2.msra.mxu0 0.0
    %881 = vmatprep.subr.mxu0 0.0
    %882 = vmatpush2.msra.mxu0 0.0
    %883 = vmatprep.subr.mxu0 0.0
    %884 = vmatpush2.msra.mxu0 0.0
    %885 = vmatprep.subr.mxu0 0.0
    %886 = vmatpush2.msra.mxu0 0.0
    %887 = vmatprep.subr.mxu0 0.0
    %888 = vmatpush2.msra.mxu0 0.0
    %889 = vmatprep.subr.mxu0 0.0
    %890 = vmatpush2.msra.mxu0 0.0
    %891 = vmatprep.subr.mxu0 0.0
    %892 = vmatpush2.msra.mxu0 0.0
    %893 = vmatprep.subr.mxu0 0.0
    %894 = vmatpush2.msra.mxu0 0.0
    %895 = vmatprep.subr.mxu0 0.0
    %896 = vmatpush2.msra.mxu0 0.0
    %897 = vmatprep.subr.mxu0 0.0
    %898 = vmatpush2.msra.mxu0 0.0
    %899 = vmatprep.subr.mxu0 0.0
    %900 = vmatpush2.msra.mxu0 0.0
    %901 = vmatprep.subr.mxu0 0.0
    %902 = vmatpush2.msra.mxu0 0.0
    %903 = vmatprep.subr.mxu0 0.0
    %904 = vmatpush2.msra.mxu0 0.0
    %905 = vmatprep.subr.mxu0 0.0
    %906 = vmatpush2.msra.mxu0 0.0
    %907 = vmatprep.subr.mxu0 0.0
    %908 = vmatpush2.msra.mxu0 0.0
    %909 = vmatprep.subr.mxu0 0.0
    %910 = vmatpush2.msra.mxu0 0.0
    %911 = vmatprep.mubr.f32.mxu0 0.0
    %912 = vmatmul.mubr.f32.gmra.mxu0 %v845
    %v913 = vpop.f32.mrf.mxu0
    %v914 = vadd.f32 0.0, %v913
    %v915 = vpop.f32.mrf.mxu0
    %916 = vdwg.mxu0
    %v917 = vadd.f32 %v842, %v914
    %v918 = vmul.f32 %v917, %v840
    %v919 = vtanh.pop %v918
    %v920 = vmul.f32 %v919, %v840
    %v921 = vadd.f32 %v920, %v841
    %v922 = vmul.f32 %v921, 0.0
    %924 = vrot.lane.b32.xlu0 %v921, 64
    %v925 = vpop.permute.xlu0 %924
    %v927 = vmul.f32 %v921, %v925
    %929 = vrot.lane.b32.xlu0 %v927, 32
    %v930 = vpop.permute.xlu0 %929
    %v932 = vadd.f32 %v922, %v930
    %v933 = vtanh.pop %v932
    %935 = vrot.lane.b32.xlu0 %v933, 64
    %v936 = vpop.permute.xlu0 %935
    %v938 = vmul.f32 %v921, %v936
    %v939 = vld [vmem:[%s771] sm:$0x3]
    %941 = vrot.lane.b32.xlu0 %v938, 32
    %v942 = vpop.permute.xlu0 %941
    %v943 = vsel %vm843, %v942, 0
    %945 = vmatprep.subr.mxu0 0.0
    %946 = vmatpush1.msra.mxu0 0.0
    %947 = vmatprep.subr.mxu0 0.0
    %948 = vmatpush1.msra.mxu0 0.0
    %949 = vmatprep.subr.mxu0 0.0
    %950 = vmatpush1.msra.mxu0 0.0
    %951 = vmatprep.subr.mxu0 0.0
    %952 = vmatpush1.msra.mxu0 0.0
    %953 = vmatprep.subr.mxu0 0.0
    %954 = vmatpush1.msra.mxu0 0.0
    %955 = vmatprep.subr.mxu0 0.0
    %956 = vmatpush1.msra.mxu0 0.0
    %957 = vmatprep.subr.mxu0 0.0
    %958 = vmatpush1.msra.mxu0 0.0
    %959 = vmatprep.subr.mxu0 0.0
    %960 = vmatpush1.msra.mxu0 0.0
    %961 = vmatprep.subr.mxu0 0.0
    %962 = vmatpush1.msra.mxu0 0.0
    %963 = vmatprep.subr.mxu0 0.0
    %964 = vmatpush1.msra.mxu0 0.0
    %965 = vmatprep.subr.mxu0 0.0
    %966 = vmatpush1.msra.mxu0 0.0
    %967 = vmatprep.subr.mxu0 0.0
    %968 = vmatpush1.msra.mxu0 0.0
    %969 = vmatprep.subr.mxu0 0.0
    %970 = vmatpush1.msra.mxu0 %v834
    %971 = vmatprep.subr.mxu0 0.0
    %972 = vmatpush1.msra.mxu0 %v833
    %973 = vmatprep.subr.mxu0 0.0
    %974 = vmatpush1.msra.mxu0 %v832
    %975 = vmatprep.subr.mxu0 0.0
    %976 = vmatpush1.msra.mxu0 %v831
    %977 = vmatprep.subr.mxu0 0.0
    %978 = vmatpush2.msra.mxu0 0.0
    %979 = vmatprep.subr.mxu0 0.0
    %980 = vmatpush2.msra.mxu0 0.0
    %981 = vmatprep.subr.mxu0 0.0
    %982 = vmatpush2.msra.mxu0 0.0
    %983 = vmatprep.subr.mxu0 0.0
    %984 = vmatpush2.msra.mxu0 0.0
    %985 = vmatprep.subr.mxu0 0.0
    %986 = vmatpush2.msra.mxu0 0.0
    %987 = vmatprep.subr.mxu0 0.0
    %988 = vmatpush2.msra.mxu0 0.0
    %989 = vmatprep.subr.mxu0 0.0
    %990 = vmatpush2.msra.mxu0 0.0
    %991 = vmatprep.subr.mxu0 0.0
    %992 = vmatpush2.msra.mxu0 0.0
    %993 = vmatprep.subr.mxu0 0.0
    %994 = vmatpush2.msra.mxu0 0.0
    %995 = vmatprep.subr.mxu0 0.0
    %996 = vmatpush2.msra.mxu0 0.0
    %997 = vmatprep.subr.mxu0 0.0
    %998 = vmatpush2.msra.mxu0 0.0
    %999 = vmatprep.subr.mxu0 0.0
    %1000 = vmatpush2.msra.mxu0 0.0
    %1001 = vmatprep.subr.mxu0 0.0
    %1002 = vmatpush2.msra.mxu0 0.0
    %1003 = vmatprep.subr.mxu0 0.0
    %1004 = vmatpush2.msra.mxu0 0.0
    %1005 = vmatprep.subr.mxu0 0.0
    %1006 = vmatpush2.msra.mxu0 0.0
    %1007 = vmatprep.subr.mxu0 0.0
    %1008 = vmatpush2.msra.mxu0 0.0
    %1009 = vmatprep.mubr.f32.mxu0 0.0
    %1010 = vmatmul.mubr.f32.gmra.mxu0 %v943
    %v1011 = vpop.f32.mrf.mxu0
    %v1012 = vadd.f32 0.0, %v1011
    %v1013 = vpop.f32.mrf.mxu0
    %1014 = vdwg.mxu0
    %v1015 = vadd.f32 %v939, %v1012
    %v1016 = vmul.f32 %v1015, %v840
    %v1017 = vtanh.pop %v1016
    %v1018 = vmul.f32 %v1017, %v840
    %v1019 = vadd.f32 %v1018, %v841
    %v1020 = vmul.f32 %v1019, %v932
    %1022 = vrot.lane.b32.xlu0 %v1019, 64
    %v1023 = vpop.permute.xlu0 %1022
    %v1025 = vmul.f32 %v1019, %v1023
    %1027 = vrot.lane.b32.xlu0 %v1025, 32
    %v1028 = vpop.permute.xlu0 %1027
    %v1030 = vadd.f32 %v1020, %v1028
    %v1031 = vtanh.pop %v1030
    %1033 = vrot.lane.b32.xlu0 %v1031, 64
    %v1034 = vpop.permute.xlu0 %1033
    %v1036 = vmul.f32 %v1019, %v1034
    %v1037 = vld [vmem:[%s773] sm:$0x3]
    %1039 = vrot.lane.b32.xlu0 %v1036, 32
    %v1040 = vpop.permute.xlu0 %1039
    %v1041 = vsel %vm843, %v1040, 0
    %1043 = vmatprep.subr.mxu0 0.0
    %1044 = vmatpush1.msra.mxu0 0.0
    %1045 = vmatprep.subr.mxu0 0.0
    %1046 = vmatpush1.msra.mxu0 0.0
    %1047 = vmatprep.subr.mxu0 0.0
    %1048 = vmatpush1.msra.mxu0 0.0
    %1049 = vmatprep.subr.mxu0 0.0
    %1050 = vmatpush1.msra.mxu0 0.0
    %1051 = vmatprep.subr.mxu0 0.0
    %1052 = vmatpush1.msra.mxu0 0.0
    %1053 = vmatprep.subr.mxu0 0.0
    %1054 = vmatpush1.msra.mxu0 0.0
    %1055 = vmatprep.subr.mxu0 0.0
    %1056 = vmatpush1.msra.mxu0 0.0
    %1057 = vmatprep.subr.mxu0 0.0
    %1058 = vmatpush1.msra.mxu0 0.0
    %1059 = vmatprep.subr.mxu0 0.0
    %1060 = vmatpush1.msra.mxu0 0.0
    %1061 = vmatprep.subr.mxu0 0.0
    %1062 = vmatpush1.msra.mxu0 0.0
    %1063 = vmatprep.subr.mxu0 0.0
    %1064 = vmatpush1.msra.mxu0 0.0
    %1065 = vmatprep.subr.mxu0 0.0
    %1066 = vmatpush1.msra.mxu0 0.0
    %1067 = vmatprep.subr.mxu0 0.0
    %1068 = vmatpush1.msra.mxu0 %v834
    %1069 = vmatprep.subr.mxu0 0.0
    %1070 = vmatpush1.msra.mxu0 %v833
    %1071 = vmatprep.subr.mxu0 0.0
    %1072 = vmatpush1.msra.mxu0 %v832
    %1073 = vmatprep.subr.mxu0 0.0
    %1074 = vmatpush1.msra.mxu0 %v831
    %1075 = vmatprep.subr.mxu0 0.0
    %1076 = vmatpush2.msra.mxu0 0.0
    %1077 = vmatprep.subr.mxu0 0.0
    %1078 = vmatpush2.msra.mxu0 0.0
    %1079 = vmatprep.subr.mxu0 0.0
    %1080 = vmatpush2.msra.mxu0 0.0
    %1081 = vmatprep.subr.mxu0 0.0
    %1082 = vmatpush2.msra.mxu0 0.0
    %1083 = vmatprep.subr.mxu0 0.0
    %1084 = vmatpush2.msra.mxu0 0.0
    %1085 = vmatprep.subr.mxu0 0.0
    %1086 = vmatpush2.msra.mxu0 0.0
    %1087 = vmatprep.subr.mxu0 0.0
    %1088 = vmatpush2.msra.mxu0 0.0
    %1089 = vmatprep.subr.mxu0 0.0
    %1090 = vmatpush2.msra.mxu0 0.0
    %1091 = vmatprep.subr.mxu0 0.0
    %1092 = vmatpush2.msra.mxu0 0.0
    %1093 = vmatprep.subr.mxu0 0.0
    %1094 = vmatpush2.msra.mxu0 0.0
    %1095 = vmatprep.subr.mxu0 0.0
    %1096 = vmatpush2.msra.mxu0 0.0
    %1097 = vmatprep.subr.mxu0 0.0
    %1098 = vmatpush2.msra.mxu0 0.0
    %1099 = vmatprep.subr.mxu0 0.0
    %1100 = vmatpush2.msra.mxu0 0.0
    %1101 = vmatprep.subr.mxu0 0.0
    %1102 = vmatpush2.msra.mxu0 0.0
    %1103 = vmatprep.subr.mxu0 0.0
    %1104 = vmatpush2.msra.mxu0 0.0
    %1105 = vmatprep.subr.mxu0 0.0
    %1106 = vmatpush2.msra.mxu0 0.0
    %1107 = vmatprep.mubr.f32.mxu0 0.0
    %1108 = vmatmul.mubr.f32.gmra.mxu0 %v1041
    %v1109 = vpop.f32.mrf.mxu0
    %v1110 = vadd.f32 0.0, %v1109
    %v1111 = vpop.f32.mrf.mxu0
    %1112 = vdwg.mxu0
    %v1113 = vadd.f32 %v1037, %v1110
    %v1114 = vmul.f32 %v1113, %v840
    %v1115 = vtanh.pop %v1114
    %v1116 = vmul.f32 %v1115, %v840
    %v1117 = vadd.f32 %v1116, %v841
    %v1118 = vmul.f32 %v1117, %v1030
    %1120 = vrot.lane.b32.xlu0 %v1117, 64
    %v1121 = vpop.permute.xlu0 %1120
    %v1123 = vmul.f32 %v1117, %v1121
    %1125 = vrot.lane.b32.xlu0 %v1123, 32
    %v1126 = vpop.permute.xlu0 %1125
    %v1128 = vadd.f32 %v1118, %v1126
    %v1129 = vtanh.pop %v1128
    %1131 = vrot.lane.b32.xlu0 %v1129, 64
    %v1132 = vpop.permute.xlu0 %1131
    %v1134 = vmul.f32 %v1117, %v1132
    %v1135 = vld [vmem:[%s775] sm:$0x3]
    %1137 = vrot.lane.b32.xlu0 %v1134, 32
    %v1138 = vpop.permute.xlu0 %1137
    %v1139 = vsel %vm843, %v1138, 0
    %1141 = vmatprep.subr.mxu0 0.0
    %1142 = vmatpush1.msra.mxu0 0.0
    %1143 = vmatprep.subr.mxu0 0.0
    %1144 = vmatpush1.msra.mxu0 0.0
    %1145 = vmatprep.subr.mxu0 0.0
    %1146 = vmatpush1.msra.mxu0 0.0
    %1147 = vmatprep.subr.mxu0 0.0
    %1148 = vmatpush1.msra.mxu0 0.0
    %1149 = vmatprep.subr.mxu0 0.0
    %1150 = vmatpush1.msra.mxu0 0.0
    %1151 = vmatprep.subr.mxu0 0.0
    %1152 = vmatpush1.msra.mxu0 0.0
    %1153 = vmatprep.subr.mxu0 0.0
    %1154 = vmatpush1.msra.mxu0 0.0
    %1155 = vmatprep.subr.mxu0 0.0
    %1156 = vmatpush1.msra.mxu0 0.0
    %1157 = vmatprep.subr.mxu0 0.0
    %1158 = vmatpush1.msra.mxu0 0.0
    %1159 = vmatprep.subr.mxu0 0.0
    %1160 = vmatpush1.msra.mxu0 0.0
    %1161 = vmatprep.subr.mxu0 0.0
    %1162 = vmatpush1.msra.mxu0 0.0
    %1163 = vmatprep.subr.mxu0 0.0
    %1164 = vmatpush1.msra.mxu0 0.0
    %1165 = vmatprep.subr.mxu0 0.0
    %1166 = vmatpush1.msra.mxu0 %v834
    %1167 = vmatprep.subr.mxu0 0.0
    %1168 = vmatpush1.msra.mxu0 %v833
    %1169 = vmatprep.subr.mxu0 0.0
    %1170 = vmatpush1.msra.mxu0 %v832
    %1171 = vmatprep.subr.mxu0 0.0
    %1172 = vmatpush1.msra.mxu0 %v831
    %1173 = vmatprep.subr.mxu0 0.0
    %1174 = vmatpush2.msra.mxu0 0.0
    %1175 = vmatprep.subr.mxu0 0.0
    %1176 = vmatpush2.msra.mxu0 0.0
    %1177 = vmatprep.subr.mxu0 0.0
    %1178 = vmatpush2.msra.mxu0 0.0
    %1179 = vmatprep.subr.mxu0 0.0
    %1180 = vmatpush2.msra.mxu0 0.0
    %1181 = vmatprep.subr.mxu0 0.0
    %1182 = vmatpush2.msra.mxu0 0.0
    %1183 = vmatprep.subr.mxu0 0.0
    %1184 = vmatpush2.msra.mxu0 0.0
    %1185 = vmatprep.subr.mxu0 0.0
    %1186 = vmatpush2.msra.mxu0 0.0
    %1187 = vmatprep.subr.mxu0 0.0
    %1188 = vmatpush2.msra.mxu0 0.0
    %1189 = vmatprep.subr.mxu0 0.0
    %1190 = vmatpush2.msra.mxu0 0.0
    %1191 = vmatprep.subr.mxu0 0.0
    %1192 = vmatpush2.msra.mxu0 0.0
    %1193 = vmatprep.subr.mxu0 0.0
    %1194 = vmatpush2.msra.mxu0 0.0
    %1195 = vmatprep.subr.mxu0 0.0
    %1196 = vmatpush2.msra.mxu0 0.0
    %1197 = vmatprep.subr.mxu0 0.0
    %1198 = vmatpush2.msra.mxu0 0.0
    %1199 = vmatprep.subr.mxu0 0.0
    %1200 = vmatpush2.msra.mxu0 0.0
    %1201 = vmatprep.subr.mxu0 0.0
    %1202 = vmatpush2.msra.mxu0 0.0
    %1203 = vmatprep.subr.mxu0 0.0
    %1204 = vmatpush2.msra.mxu0 0.0
    %1205 = vmatprep.mubr.f32.mxu0 0.0
    %1206 = vmatmul.mubr.f32.gmra.mxu0 %v1139
    %v1207 = vpop.f32.mrf.mxu0
    %v1208 = vadd.f32 0.0, %v1207
    %v1209 = vpop.f32.mrf.mxu0
    %1210 = vdwg.mxu0
    %v1211 = vadd.f32 %v1135, %v1208
    %v1212 = vmul.f32 %v1211, %v840
    %v1213 = vtanh.pop %v1212
    %v1214 = vmul.f32 %v1213, %v840
    %v1215 = vadd.f32 %v1214, %v841
    %v1216 = vmul.f32 %v1215, %v1128
    %1218 = vrot.lane.b32.xlu0 %v1215, 64
    %v1219 = vpop.permute.xlu0 %1218
    %v1221 = vmul.f32 %v1215, %v1219
    %1223 = vrot.lane.b32.xlu0 %v1221, 32
    %v1224 = vpop.permute.xlu0 %1223
    %v1226 = vadd.f32 %v1216, %v1224
    %v1227 = vtanh.pop %v1226
    %1229 = vrot.lane.b32.xlu0 %v1227, 64
    %v1230 = vpop.permute.xlu0 %1229
    %v1232 = vmul.f32 %v1215, %v1230
    %v1233 = vld [vmem:[%s777] sm:$0x3]
    %1235 = vrot.lane.b32.xlu0 %v1232, 32
    %v1236 = vpop.permute.xlu0 %1235
    %v1237 = vsel %vm843, %v1236, 0
    %1239 = vmatprep.subr.mxu0 0.0
    %1240 = vmatpush1.msra.mxu0 0.0
    %1241 = vmatprep.subr.mxu0 0.0
    %1242 = vmatpush1.msra.mxu0 0.0
    %1243 = vmatprep.subr.mxu0 0.0
    %1244 = vmatpush1.msra.mxu0 0.0
    %1245 = vmatprep.subr.mxu0 0.0
    %1246 = vmatpush1.msra.mxu0 0.0
    %1247 = vmatprep.subr.mxu0 0.0
    %1248 = vmatpush1.msra.mxu0 0.0
    %1249 = vmatprep.subr.mxu0 0.0
    %1250 = vmatpush1.msra.mxu0 0.0
    %1251 = vmatprep.subr.mxu0 0.0
    %1252 = vmatpush1.msra.mxu0 0.0
    %1253 = vmatprep.subr.mxu0 0.0
    %1254 = vmatpush1.msra.mxu0 0.0
    %1255 = vmatprep.subr.mxu0 0.0
    %1256 = vmatpush1.msra.mxu0 0.0
    %1257 = vmatprep.subr.mxu0 0.0
    %1258 = vmatpush1.msra.mxu0 0.0
    %1259 = vmatprep.subr.mxu0 0.0
    %1260 = vmatpush1.msra.mxu0 0.0
    %1261 = vmatprep.subr.mxu0 0.0
    %1262 = vmatpush1.msra.mxu0 0.0
    %1263 = vmatprep.subr.mxu0 0.0
    %1264 = vmatpush1.msra.mxu0 %v834
    %1265 = vmatprep.subr.mxu0 0.0
    %1266 = vmatpush1.msra.mxu0 %v833
    %1267 = vmatprep.subr.mxu0 0.0
    %1268 = vmatpush1.msra.mxu0 %v832
    %1269 = vmatprep.subr.mxu0 0.0
    %1270 = vmatpush1.msra.mxu0 %v831
    %1271 = vmatprep.subr.mxu0 0.0
    %1272 = vmatpush2.msra.mxu0 0.0
    %1273 = vmatprep.subr.mxu0 0.0
    %1274 = vmatpush2.msra.mxu0 0.0
    %1275 = vmatprep.subr.mxu0 0.0
    %1276 = vmatpush2.msra.mxu0 0.0
    %1277 = vmatprep.subr.mxu0 0.0
    %1278 = vmatpush2.msra.mxu0 0.0
    %1279 = vmatprep.subr.mxu0 0.0
    %1280 = vmatpush2.msra.mxu0 0.0
    %1281 = vmatprep.subr.mxu0 0.0
    %1282 = vmatpush2.msra.mxu0 0.0
    %1283 = vmatprep.subr.mxu0 0.0
    %1284 = vmatpush2.msra.mxu0 0.0
    %1285 = vmatprep.subr.mxu0 0.0
    %1286 = vmatpush2.msra.mxu0 0.0
    %1287 = vmatprep.subr.mxu0 0.0
    %1288 = vmatpush2.msra.mxu0 0.0
    %1289 = vmatprep.subr.mxu0 0.0
    %1290 = vmatpush2.msra.mxu0 0.0
    %1291 = vmatprep.subr.mxu0 0.0
    %1292 = vmatpush2.msra.mxu0 0.0
    %1293 = vmatprep.subr.mxu0 0.0
    %1294 = vmatpush2.msra.mxu0 0.0
    %1295 = vmatprep.subr.mxu0 0.0
    %1296 = vmatpush2.msra.mxu0 0.0
    %1297 = vmatprep.subr.mxu0 0.0
    %1298 = vmatpush2.msra.mxu0 0.0
    %1299 = vmatprep.subr.mxu0 0.0
    %1300 = vmatpush2.msra.mxu0 0.0
    %1301 = vmatprep.subr.mxu0 0.0
    %1302 = vmatpush2.msra.mxu0 0.0
    %1303 = vmatprep.mubr.f32.mxu0 0.0
    %1304 = vmatmul.mubr.f32.gmra.mxu0 %v1237
    %v1305 = vpop.f32.mrf.mxu0
    %v1306 = vadd.f32 0.0, %v1305
    %v1307 = vpop.f32.mrf.mxu0
    %1308 = vdwg.mxu0
    %v1309 = vadd.f32 %v1233, %v1306
    %v1310 = vmul.f32 %v1309, %v840
    %v1311 = vtanh.pop %v1310
    %v1312 = vmul.f32 %v1311, %v840
    %v1313 = vadd.f32 %v1312, %v841
    %v1314 = vmul.f32 %v1313, %v1226
    %1316 = vrot.lane.b32.xlu0 %v1313, 64
    %v1317 = vpop.permute.xlu0 %1316
    %v1319 = vmul.f32 %v1313, %v1317
    %1321 = vrot.lane.b32.xlu0 %v1319, 32
    %v1322 = vpop.permute.xlu0 %1321
    %v1324 = vadd.f32 %v1314, %v1322
    %v1325 = vtanh.pop %v1324
    %1327 = vrot.lane.b32.xlu0 %v1325, 64
    %v1328 = vpop.permute.xlu0 %1327
    %v1330 = vmul.f32 %v1313, %v1328
    %v1331 = vld [vmem:[%s779] sm:$0x3]
    %1333 = vrot.lane.b32.xlu0 %v1330, 32
    %v1334 = vpop.permute.xlu0 %1333
    %v1335 = vsel %vm843, %v1334, 0
    %1337 = vmatprep.subr.mxu0 0.0
    %1338 = vmatpush1.msra.mxu0 0.0
    %1339 = vmatprep.subr.mxu0 0.0
    %1340 = vmatpush1.msra.mxu0 0.0
    %1341 = vmatprep.subr.mxu0 0.0
    %1342 = vmatpush1.msra.mxu0 0.0
    %1343 = vmatprep.subr.mxu0 0.0
    %1344 = vmatpush1.msra.mxu0 0.0
    %1345 = vmatprep.subr.mxu0 0.0
    %1346 = vmatpush1.msra.mxu0 0.0
    %1347 = vmatprep.subr.mxu0 0.0
    %1348 = vmatpush1.msra.mxu0 0.0
    %1349 = vmatprep.subr.mxu0 0.0
    %1350 = vmatpush1.msra.mxu0 0.0
    %1351 = vmatprep.subr.mxu0 0.0
    %1352 = vmatpush1.msra.mxu0 0.0
    %1353 = vmatprep.subr.mxu0 0.0
    %1354 = vmatpush1.msra.mxu0 0.0
    %1355 = vmatprep.subr.mxu0 0.0
    %1356 = vmatpush1.msra.mxu0 0.0
    %1357 = vmatprep.subr.mxu0 0.0
    %1358 = vmatpush1.msra.mxu0 0.0
    %1359 = vmatprep.subr.mxu0 0.0
    %1360 = vmatpush1.msra.mxu0 0.0
    %1361 = vmatprep.subr.mxu0 0.0
    %1362 = vmatpush1.msra.mxu0 %v834
    %1363 = vmatprep.subr.mxu0 0.0
    %1364 = vmatpush1.msra.mxu0 %v833
    %1365 = vmatprep.subr.mxu0 0.0
    %1366 = vmatpush1.msra.mxu0 %v832
    %1367 = vmatprep.subr.mxu0 0.0
    %1368 = vmatpush1.msra.mxu0 %v831
    %1369 = vmatprep.subr.mxu0 0.0
    %1370 = vmatpush2.msra.mxu0 0.0
    %1371 = vmatprep.subr.mxu0 0.0
    %1372 = vmatpush2.msra.mxu0 0.0
    %1373 = vmatprep.subr.mxu0 0.0
    %1374 = vmatpush2.msra.mxu0 0.0
    %1375 = vmatprep.subr.mxu0 0.0
    %1376 = vmatpush2.msra.mxu0 0.0
    %1377 = vmatprep.subr.mxu0 0.0
    %1378 = vmatpush2.msra.mxu0 0.0
    %1379 = vmatprep.subr.mxu0 0.0
    %1380 = vmatpush2.msra.mxu0 0.0
    %1381 = vmatprep.subr.mxu0 0.0
    %1382 = vmatpush2.msra.mxu0 0.0
    %1383 = vmatprep.subr.mxu0 0.0
    %1384 = vmatpush2.msra.mxu0 0.0
    %1385 = vmatprep.subr.mxu0 0.0
    %1386 = vmatpush2.msra.mxu0 0.0
    %1387 = vmatprep.subr.mxu0 0.0
    %1388 = vmatpush2.msra.mxu0 0.0
    %1389 = vmatprep.subr.mxu0 0.0
    %1390 = vmatpush2.msra.mxu0 0.0
    %1391 = vmatprep.subr.mxu0 0.0
    %1392 = vmatpush2.msra.mxu0 0.0
    %1393 = vmatprep.subr.mxu0 0.0
    %1394 = vmatpush2.msra.mxu0 0.0
    %1395 = vmatprep.subr.mxu0 0.0
    %1396 = vmatpush2.msra.mxu0 0.0
    %1397 = vmatprep.subr.mxu0 0.0
    %1398 = vmatpush2.msra.mxu0 0.0
    %1399 = vmatprep.subr.mxu0 0.0
    %1400 = vmatpush2.msra.mxu0 0.0
    %1401 = vmatprep.mubr.f32.mxu0 0.0
    %1402 = vmatmul.mubr.f32.gmra.mxu0 %v1335
    %v1403 = vpop.f32.mrf.mxu0
    %v1404 = vadd.f32 0.0, %v1403
    %v1405 = vpop.f32.mrf.mxu0
    %1406 = vdwg.mxu0
    %v1407 = vadd.f32 %v1331, %v1404
    %v1408 = vmul.f32 %v1407, %v840
    %v1409 = vtanh.pop %v1408
    %v1410 = vmul.f32 %v1409, %v840
    %v1411 = vadd.f32 %v1410, %v841
    %v1412 = vmul.f32 %v1411, %v1324
    %1414 = vrot.lane.b32.xlu0 %v1411, 64
    %v1415 = vpop.permute.xlu0 %1414
    %v1417 = vmul.f32 %v1411, %v1415
    %1419 = vrot.lane.b32.xlu0 %v1417, 32
    %v1420 = vpop.permute.xlu0 %1419
    %v1422 = vadd.f32 %v1412, %v1420
    %v1423 = vtanh.pop %v1422
    %1425 = vrot.lane.b32.xlu0 %v1423, 64
    %v1426 = vpop.permute.xlu0 %1425
    %v1428 = vmul.f32 %v1411, %v1426
    %v1429 = vld [vmem:[%s781] sm:$0x3]
    %1431 = vrot.lane.b32.xlu0 %v1428, 32
    %v1432 = vpop.permute.xlu0 %1431
    %v1433 = vsel %vm843, %v1432, 0
    %1435 = vmatprep.subr.mxu0 0.0
    %1436 = vmatpush1.msra.mxu0 0.0
    %1437 = vmatprep.subr.mxu0 0.0
    %1438 = vmatpush1.msra.mxu0 0.0
    %1439 = vmatprep.subr.mxu0 0.0
    %1440 = vmatpush1.msra.mxu0 0.0
    %1441 = vmatprep.subr.mxu0 0.0
    %1442 = vmatpush1.msra.mxu0 0.0
    %1443 = vmatprep.subr.mxu0 0.0
    %1444 = vmatpush1.msra.mxu0 0.0
    %1445 = vmatprep.subr.mxu0 0.0
    %1446 = vmatpush1.msra.mxu0 0.0
    %1447 = vmatprep.subr.mxu0 0.0
    %1448 = vmatpush1.msra.mxu0 0.0
    %1449 = vmatprep.subr.mxu0 0.0
    %1450 = vmatpush1.msra.mxu0 0.0
    %1451 = vmatprep.subr.mxu0 0.0
    %1452 = vmatpush1.msra.mxu0 0.0
    %1453 = vmatprep.subr.mxu0 0.0
    %1454 = vmatpush1.msra.mxu0 0.0
    %1455 = vmatprep.subr.mxu0 0.0
    %1456 = vmatpush1.msra.mxu0 0.0
    %1457 = vmatprep.subr.mxu0 0.0
    %1458 = vmatpush1.msra.mxu0 0.0
    %1459 = vmatprep.subr.mxu0 0.0
    %1460 = vmatpush1.msra.mxu0 %v834
    %1461 = vmatprep.subr.mxu0 0.0
    %1462 = vmatpush1.msra.mxu0 %v833
    %1463 = vmatprep.subr.mxu0 0.0
    %1464 = vmatpush1.msra.mxu0 %v832
    %1465 = vmatprep.subr.mxu0 0.0
    %1466 = vmatpush1.msra.mxu0 %v831
    %1467 = vmatprep.subr.mxu0 0.0
    %1468 = vmatpush2.msra.mxu0 0.0
    %1469 = vmatprep.subr.mxu0 0.0
    %1470 = vmatpush2.msra.mxu0 0.0
    %1471 = vmatprep.subr.mxu0 0.0
    %1472 = vmatpush2.msra.mxu0 0.0
    %1473 = vmatprep.subr.mxu0 0.0
    %1474 = vmatpush2.msra.mxu0 0.0
    %1475 = vmatprep.subr.mxu0 0.0
    %1476 = vmatpush2.msra.mxu0 0.0
    %1477 = vmatprep.subr.mxu0 0.0
    %1478 = vmatpush2.msra.mxu0 0.0
    %1479 = vmatprep.subr.mxu0 0.0
    %1480 = vmatpush2.msra.mxu0 0.0
    %1481 = vmatprep.subr.mxu0 0.0
    %1482 = vmatpush2.msra.mxu0 0.0
    %1483 = vmatprep.subr.mxu0 0.0
    %1484 = vmatpush2.msra.mxu0 0.0
    %1485 = vmatprep.subr.mxu0 0.0
    %1486 = vmatpush2.msra.mxu0 0.0
    %1487 = vmatprep.subr.mxu0 0.0
    %1488 = vmatpush2.msra.mxu0 0.0
    %1489 = vmatprep.subr.mxu0 0.0
    %1490 = vmatpush2.msra.mxu0 0.0
    %1491 = vmatprep.subr.mxu0 0.0
    %1492 = vmatpush2.msra.mxu0 0.0
    %1493 = vmatprep.subr.mxu0 0.0
    %1494 = vmatpush2.msra.mxu0 0.0
    %1495 = vmatprep.subr.mxu0 0.0
    %1496 = vmatpush2.msra.mxu0 0.0
    %1497 = vmatprep.subr.mxu0 0.0
    %1498 = vmatpush2.msra.mxu0 0.0
    %1499 = vmatprep.mubr.f32.mxu0 0.0
    %1500 = vmatmul.mubr.f32.gmra.mxu0 %v1433
    %v1501 = vpop.f32.mrf.mxu0
    %v1502 = vadd.f32 0.0, %v1501
    %v1503 = vpop.f32.mrf.mxu0
    %1504 = vdwg.mxu0
    %v1505 = vadd.f32 %v1429, %v1502
    %v1506 = vmul.f32 %v1505, %v840
    %v1507 = vtanh.pop %v1506
    %v1508 = vmul.f32 %v1507, %v840
    %v1509 = vadd.f32 %v1508, %v841
    %v1510 = vmul.f32 %v1509, %v1422
    %1512 = vrot.lane.b32.xlu0 %v1509, 64
    %v1513 = vpop.permute.xlu0 %1512
    %v1515 = vmul.f32 %v1509, %v1513
    %1517 = vrot.lane.b32.xlu0 %v1515, 32
    %v1518 = vpop.permute.xlu0 %1517
    %v1520 = vadd.f32 %v1510, %v1518
    %v1521 = vtanh.pop %v1520
    %1523 = vrot.lane.b32.xlu0 %v1521, 64
    %v1524 = vpop.permute.xlu0 %1523
    %v1526 = vmul.f32 %v1509, %v1524
    %v1527 = vld [vmem:[%s783] sm:$0x3]
    %1529 = vrot.lane.b32.xlu0 %v1526, 32
    %v1530 = vpop.permute.xlu0 %1529
    %v1531 = vsel %vm843, %v1530, 0
    %1533 = vmatprep.subr.mxu0 0.0
    %1534 = vmatpush1.msra.mxu0 0.0
    %1535 = vmatprep.subr.mxu0 0.0
    %1536 = vmatpush1.msra.mxu0 0.0
    %1537 = vmatprep.subr.mxu0 0.0
    %1538 = vmatpush1.msra.mxu0 0.0
    %1539 = vmatprep.subr.mxu0 0.0
    %1540 = vmatpush1.msra.mxu0 0.0
    %1541 = vmatprep.subr.mxu0 0.0
    %1542 = vmatpush1.msra.mxu0 0.0
    %1543 = vmatprep.subr.mxu0 0.0
    %1544 = vmatpush1.msra.mxu0 0.0
    %1545 = vmatprep.subr.mxu0 0.0
    %1546 = vmatpush1.msra.mxu0 0.0
    %1547 = vmatprep.subr.mxu0 0.0
    %1548 = vmatpush1.msra.mxu0 0.0
    %1549 = vmatprep.subr.mxu0 0.0
    %1550 = vmatpush1.msra.mxu0 0.0
    %1551 = vmatprep.subr.mxu0 0.0
    %1552 = vmatpush1.msra.mxu0 0.0
    %1553 = vmatprep.subr.mxu0 0.0
    %1554 = vmatpush1.msra.mxu0 0.0
    %1555 = vmatprep.subr.mxu0 0.0
    %1556 = vmatpush1.msra.mxu0 0.0
    %1557 = vmatprep.subr.mxu0 0.0
    %1558 = vmatpush1.msra.mxu0 %v834
    %1559 = vmatprep.subr.mxu0 0.0
    %1560 = vmatpush1.msra.mxu0 %v833
    %1561 = vmatprep.subr.mxu0 0.0
    %1562 = vmatpush1.msra.mxu0 %v832
    %1563 = vmatprep.subr.mxu0 0.0
    %1564 = vmatpush1.msra.mxu0 %v831
    %1565 = vmatprep.subr.mxu0 0.0
    %1566 = vmatpush2.msra.mxu0 0.0
    %1567 = vmatprep.subr.mxu0 0.0
    %1568 = vmatpush2.msra.mxu0 0.0
    %1569 = vmatprep.subr.mxu0 0.0
    %1570 = vmatpush2.msra.mxu0 0.0
    %1571 = vmatprep.subr.mxu0 0.0
    %1572 = vmatpush2.msra.mxu0 0.0
    %1573 = vmatprep.subr.mxu0 0.0
    %1574 = vmatpush2.msra.mxu0 0.0
    %1575 = vmatprep.subr.mxu0 0.0
    %1576 = vmatpush2.msra.mxu0 0.0
    %1577 = vmatprep.subr.mxu0 0.0
    %1578 = vmatpush2.msra.mxu0 0.0
    %1579 = vmatprep.subr.mxu0 0.0
    %1580 = vmatpush2.msra.mxu0 0.0
    %1581 = vmatprep.subr.mxu0 0.0
    %1582 = vmatpush2.msra.mxu0 0.0
    %1583 = vmatprep.subr.mxu0 0.0
    %1584 = vmatpush2.msra.mxu0 0.0
    %1585 = vmatprep.subr.mxu0 0.0
    %1586 = vmatpush2.msra.mxu0 0.0
    %1587 = vmatprep.subr.mxu0 0.0
    %1588 = vmatpush2.msra.mxu0 0.0
    %1589 = vmatprep.subr.mxu0 0.0
    %1590 = vmatpush2.msra.mxu0 0.0
    %1591 = vmatprep.subr.mxu0 0.0
    %1592 = vmatpush2.msra.mxu0 0.0
    %1593 = vmatprep.subr.mxu0 0.0
    %1594 = vmatpush2.msra.mxu0 0.0
    %1595 = vmatprep.subr.mxu0 0.0
    %1596 = vmatpush2.msra.mxu0 0.0
    %1597 = vmatprep.mubr.f32.mxu0 0.0
    %1598 = vmatmul.mubr.f32.gmra.mxu0 %v1531
    %v1599 = vpop.f32.mrf.mxu0
    %v1600 = vadd.f32 0.0, %v1599
    %v1601 = vpop.f32.mrf.mxu0
    %1602 = vdwg.mxu0
    %v1603 = vadd.f32 %v1527, %v1600
    %v1604 = vmul.f32 %v1603, %v840
    %v1605 = vtanh.pop %v1604
    %v1606 = vmul.f32 %v1605, %v840
    %v1607 = vadd.f32 %v1606, %v841
    %v1608 = vmul.f32 %v1607, %v1520
    %1610 = vrot.lane.b32.xlu0 %v1607, 64
    %v1611 = vpop.permute.xlu0 %1610
    %v1613 = vmul.f32 %v1607, %v1611
    %1615 = vrot.lane.b32.xlu0 %v1613, 32
    %v1616 = vpop.permute.xlu0 %1615
    %v1618 = vadd.f32 %v1608, %v1616
    %v1619 = vtanh.pop %v1618
    %1621 = vrot.lane.b32.xlu0 %v1619, 64
    %v1622 = vpop.permute.xlu0 %1621
    %v1624 = vmul.f32 %v1607, %v1622
    %v1625 = vld [vmem:[%s785] sm:$0x3]
    %1627 = vrot.lane.b32.xlu0 %v1624, 32
    %v1628 = vpop.permute.xlu0 %1627
    %v1629 = vsel %vm843, %v1628, 0
    %1631 = vmatprep.subr.mxu0 0.0
    %1632 = vmatpush1.msra.mxu0 0.0
    %1633 = vmatprep.subr.mxu0 0.0
    %1634 = vmatpush1.msra.mxu0 0.0
    %1635 = vmatprep.subr.mxu0 0.0
    %1636 = vmatpush1.msra.mxu0 0.0
    %1637 = vmatprep.subr.mxu0 0.0
    %1638 = vmatpush1.msra.mxu0 0.0
    %1639 = vmatprep.subr.mxu0 0.0
    %1640 = vmatpush1.msra.mxu0 0.0
    %1641 = vmatprep.subr.mxu0 0.0
    %1642 = vmatpush1.msra.mxu0 0.0
    %1643 = vmatprep.subr.mxu0 0.0
    %1644 = vmatpush1.msra.mxu0 0.0
    %1645 = vmatprep.subr.mxu0 0.0
    %1646 = vmatpush1.msra.mxu0 0.0
    %1647 = vmatprep.subr.mxu0 0.0
    %1648 = vmatpush1.msra.mxu0 0.0
    %1649 = vmatprep.subr.mxu0 0.0
    %1650 = vmatpush1.msra.mxu0 0.0
    %1651 = vmatprep.subr.mxu0 0.0
    %1652 = vmatpush1.msra.mxu0 0.0
    %1653 = vmatprep.subr.mxu0 0.0
    %1654 = vmatpush1.msra.mxu0 0.0
    %1655 = vmatprep.subr.mxu0 0.0
    %1656 = vmatpush1.msra.mxu0 %v834
    %1657 = vmatprep.subr.mxu0 0.0
    %1658 = vmatpush1.msra.mxu0 %v833
    %1659 = vmatprep.subr.mxu0 0.0
    %1660 = vmatpush1.msra.mxu0 %v832
    %1661 = vmatprep.subr.mxu0 0.0
    %1662 = vmatpush1.msra.mxu0 %v831
    %1663 = vmatprep.subr.mxu0 0.0
    %1664 = vmatpush2.msra.mxu0 0.0
    %1665 = vmatprep.subr.mxu0 0.0
    %1666 = vmatpush2.msra.mxu0 0.0
    %1667 = vmatprep.subr.mxu0 0.0
    %1668 = vmatpush2.msra.mxu0 0.0
    %1669 = vmatprep.subr.mxu0 0.0
    %1670 = vmatpush2.msra.mxu0 0.0
    %1671 = vmatprep.subr.mxu0 0.0
    %1672 = vmatpush2.msra.mxu0 0.0
    %1673 = vmatprep.subr.mxu0 0.0
    %1674 = vmatpush2.msra.mxu0 0.0
    %1675 = vmatprep.subr.mxu0 0.0
    %1676 = vmatpush2.msra.mxu0 0.0
    %1677 = vmatprep.subr.mxu0 0.0
    %1678 = vmatpush2.msra.mxu0 0.0
    %1679 = vmatprep.subr.mxu0 0.0
    %1680 = vmatpush2.msra.mxu0 0.0
    %1681 = vmatprep.subr.mxu0 0.0
    %1682 = vmatpush2.msra.mxu0 0.0
    %1683 = vmatprep.subr.mxu0 0.0
    %1684 = vmatpush2.msra.mxu0 0.0
    %1685 = vmatprep.subr.mxu0 0.0
    %1686 = vmatpush2.msra.mxu0 0.0
    %1687 = vmatprep.subr.mxu0 0.0
    %1688 = vmatpush2.msra.mxu0 0.0
    %1689 = vmatprep.subr.mxu0 0.0
    %1690 = vmatpush2.msra.mxu0 0.0
    %1691 = vmatprep.subr.mxu0 0.0
    %1692 = vmatpush2.msra.mxu0 0.0
    %1693 = vmatprep.subr.mxu0 0.0
    %1694 = vmatpush2.msra.mxu0 0.0
    %1695 = vmatprep.mubr.f32.mxu0 0.0
    %1696 = vmatmul.mubr.f32.gmra.mxu0 %v1629
    %v1697 = vpop.f32.mrf.mxu0
    %v1698 = vadd.f32 0.0, %v1697
    %v1699 = vpop.f32.mrf.mxu0
    %1700 = vdwg.mxu0
    %v1701 = vadd.f32 %v1625, %v1698
    %v1702 = vmul.f32 %v1701, %v840
    %v1703 = vtanh.pop %v1702
    %v1704 = vmul.f32 %v1703, %v840
    %v1705 = vadd.f32 %v1704, %v841
    %v1706 = vmul.f32 %v1705, %v1618
    %1708 = vrot.lane.b32.xlu0 %v1705, 64
    %v1709 = vpop.permute.xlu0 %1708
    %v1711 = vmul.f32 %v1705, %v1709
    %1713 = vrot.lane.b32.xlu0 %v1711, 32
    %v1714 = vpop.permute.xlu0 %1713
    %v1716 = vadd.f32 %v1706, %v1714
    %v1717 = vtanh.pop %v1716
    %1719 = vrot.lane.b32.xlu0 %v1717, 64
    %v1720 = vpop.permute.xlu0 %1719
    %v1722 = vmul.f32 %v1705, %v1720
    %v1723 = vld [vmem:[%s787] sm:$0x3]
    %1725 = vrot.lane.b32.xlu0 %v1722, 32
    %v1726 = vpop.permute.xlu0 %1725
    %v1727 = vsel %vm843, %v1726, 0
    %1729 = vmatprep.subr.mxu0 0.0
    %1730 = vmatpush1.msra.mxu0 0.0
    %1731 = vmatprep.subr.mxu0 0.0
    %1732 = vmatpush1.msra.mxu0 0.0
    %1733 = vmatprep.subr.mxu0 0.0
    %1734 = vmatpush1.msra.mxu0 0.0
    %1735 = vmatprep.subr.mxu0 0.0
    %1736 = vmatpush1.msra.mxu0 0.0
    %1737 = vmatprep.subr.mxu0 0.0
    %1738 = vmatpush1.msra.mxu0 0.0
    %1739 = vmatprep.subr.mxu0 0.0
    %1740 = vmatpush1.msra.mxu0 0.0
    %1741 = vmatprep.subr.mxu0 0.0
    %1742 = vmatpush1.msra.mxu0 0.0
    %1743 = vmatprep.subr.mxu0 0.0
    %1744 = vmatpush1.msra.mxu0 0.0
    %1745 = vmatprep.subr.mxu0 0.0
    %1746 = vmatpush1.msra.mxu0 0.0
    %1747 = vmatprep.subr.mxu0 0.0
    %1748 = vmatpush1.msra.mxu0 0.0
    %1749 = vmatprep.subr.mxu0 0.0
    %1750 = vmatpush1.msra.mxu0 0.0
    %1751 = vmatprep.subr.mxu0 0.0
    %1752 = vmatpush1.msra.mxu0 0.0
    %1753 = vmatprep.subr.mxu0 0.0
    %1754 = vmatpush1.msra.mxu0 %v834
    %1755 = vmatprep.subr.mxu0 0.0
    %1756 = vmatpush1.msra.mxu0 %v833
    %1757 = vmatprep.subr.mxu0 0.0
    %1758 = vmatpush1.msra.mxu0 %v832
    %1759 = vmatprep.subr.mxu0 0.0
    %1760 = vmatpush1.msra.mxu0 %v831
    %1761 = vmatprep.subr.mxu0 0.0
    %1762 = vmatpush2.msra.mxu0 0.0
    %1763 = vmatprep.subr.mxu0 0.0
    %1764 = vmatpush2.msra.mxu0 0.0
    %1765 = vmatprep.subr.mxu0 0.0
    %1766 = vmatpush2.msra.mxu0 0.0
    %1767 = vmatprep.subr.mxu0 0.0
    %1768 = vmatpush2.msra.mxu0 0.0
    %1769 = vmatprep.subr.mxu0 0.0
    %1770 = vmatpush2.msra.mxu0 0.0
    %1771 = vmatprep.subr.mxu0 0.0
    %1772 = vmatpush2.msra.mxu0 0.0
    %1773 = vmatprep.subr.mxu0 0.0
    %1774 = vmatpush2.msra.mxu0 0.0
    %1775 = vmatprep.subr.mxu0 0.0
    %1776 = vmatpush2.msra.mxu0 0.0
    %1777 = vmatprep.subr.mxu0 0.0
    %1778 = vmatpush2.msra.mxu0 0.0
    %1779 = vmatprep.subr.mxu0 0.0
    %1780 = vmatpush2.msra.mxu0 0.0
    %1781 = vmatprep.subr.mxu0 0.0
    %1782 = vmatpush2.msra.mxu0 0.0
    %1783 = vmatprep.subr.mxu0 0.0
    %1784 = vmatpush2.msra.mxu0 0.0
    %1785 = vmatprep.subr.mxu0 0.0
    %1786 = vmatpush2.msra.mxu0 0.0
    %1787 = vmatprep.subr.mxu0 0.0
    %1788 = vmatpush2.msra.mxu0 0.0
    %1789 = vmatprep.subr.mxu0 0.0
    %1790 = vmatpush2.msra.mxu0 0.0
    %1791 = vmatprep.subr.mxu0 0.0
    %1792 = vmatpush2.msra.mxu0 0.0
    %1793 = vmatprep.mubr.f32.mxu0 0.0
    %1794 = vmatmul.mubr.f32.gmra.mxu0 %v1727
    %v1795 = vpop.f32.mrf.mxu0
    %v1796 = vadd.f32 0.0, %v1795
    %v1797 = vpop.f32.mrf.mxu0
    %1798 = vdwg.mxu0
    %v1799 = vadd.f32 %v1723, %v1796
    %v1800 = vmul.f32 %v1799, %v840
    %v1801 = vtanh.pop %v1800
    %v1802 = vmul.f32 %v1801, %v840
    %v1803 = vadd.f32 %v1802, %v841
    %v1804 = vmul.f32 %v1803, %v1716
    %1806 = vrot.lane.b32.xlu0 %v1803, 64
    %v1807 = vpop.permute.xlu0 %1806
    %v1809 = vmul.f32 %v1803, %v1807
    %1811 = vrot.lane.b32.xlu0 %v1809, 32
    %v1812 = vpop.permute.xlu0 %1811
    %v1814 = vadd.f32 %v1804, %v1812
    %v1815 = vtanh.pop %v1814
    %1817 = vrot.lane.b32.xlu0 %v1815, 64
    %v1818 = vpop.permute.xlu0 %1817
    %v1820 = vmul.f32 %v1803, %v1818
    %v1821 = vld [vmem:[%s789] sm:$0x3]
    %1823 = vrot.lane.b32.xlu0 %v1820, 32
    %v1824 = vpop.permute.xlu0 %1823
    %v1825 = vsel %vm843, %v1824, 0
    %1827 = vmatprep.subr.mxu0 0.0
    %1828 = vmatpush1.msra.mxu0 0.0
    %1829 = vmatprep.subr.mxu0 0.0
    %1830 = vmatpush1.msra.mxu0 0.0
    %1831 = vmatprep.subr.mxu0 0.0
    %1832 = vmatpush1.msra.mxu0 0.0
    %1833 = vmatprep.subr.mxu0 0.0
    %1834 = vmatpush1.msra.mxu0 0.0
    %1835 = vmatprep.subr.mxu0 0.0
    %1836 = vmatpush1.msra.mxu0 0.0
    %1837 = vmatprep.subr.mxu0 0.0
    %1838 = vmatpush1.msra.mxu0 0.0
    %1839 = vmatprep.subr.mxu0 0.0
    %1840 = vmatpush1.msra.mxu0 0.0
    %1841 = vmatprep.subr.mxu0 0.0
    %1842 = vmatpush1.msra.mxu0 0.0
    %1843 = vmatprep.subr.mxu0 0.0
    %1844 = vmatpush1.msra.mxu0 0.0
    %1845 = vmatprep.subr.mxu0 0.0
    %1846 = vmatpush1.msra.mxu0 0.0
    %1847 = vmatprep.subr.mxu0 0.0
    %1848 = vmatpush1.msra.mxu0 0.0
    %1849 = vmatprep.subr.mxu0 0.0
    %1850 = vmatpush1.msra.mxu0 0.0
    %1851 = vmatprep.subr.mxu0 0.0
    %1852 = vmatpush1.msra.mxu0 %v834
    %1853 = vmatprep.subr.mxu0 0.0
    %1854 = vmatpush1.msra.mxu0 %v833
    %1855 = vmatprep.subr.mxu0 0.0
    %1856 = vmatpush1.msra.mxu0 %v832
    %1857 = vmatprep.subr.mxu0 0.0
    %1858 = vmatpush1.msra.mxu0 %v831
    %1859 = vmatprep.subr.mxu0 0.0
    %1860 = vmatpush2.msra.mxu0 0.0
    %1861 = vmatprep.subr.mxu0 0.0
    %1862 = vmatpush2.msra.mxu0 0.0
    %1863 = vmatprep.subr.mxu0 0.0
    %1864 = vmatpush2.msra.mxu0 0.0
    %1865 = vmatprep.subr.mxu0 0.0
    %1866 = vmatpush2.msra.mxu0 0.0
    %1867 = vmatprep.subr.mxu0 0.0
    %1868 = vmatpush2.msra.mxu0 0.0
    %1869 = vmatprep.subr.mxu0 0.0
    %1870 = vmatpush2.msra.mxu0 0.0
    %1871 = vmatprep.subr.mxu0 0.0
    %1872 = vmatpush2.msra.mxu0 0.0
    %1873 = vmatprep.subr.mxu0 0.0
    %1874 = vmatpush2.msra.mxu0 0.0
    %1875 = vmatprep.subr.mxu0 0.0
    %1876 = vmatpush2.msra.mxu0 0.0
    %1877 = vmatprep.subr.mxu0 0.0
    %1878 = vmatpush2.msra.mxu0 0.0
    %1879 = vmatprep.subr.mxu0 0.0
    %1880 = vmatpush2.msra.mxu0 0.0
    %1881 = vmatprep.subr.mxu0 0.0
    %1882 = vmatpush2.msra.mxu0 0.0
    %1883 = vmatprep.subr.mxu0 0.0
    %1884 = vmatpush2.msra.mxu0 0.0
    %1885 = vmatprep.subr.mxu0 0.0
    %1886 = vmatpush2.msra.mxu0 0.0
    %1887 = vmatprep.subr.mxu0 0.0
    %1888 = vmatpush2.msra.mxu0 0.0
    %1889 = vmatprep.subr.mxu0 0.0
    %1890 = vmatpush2.msra.mxu0 0.0
    %1891 = vmatprep.mubr.f32.mxu0 0.0
    %1892 = vmatmul.mubr.f32.gmra.mxu0 %v1825
    %v1893 = vpop.f32.mrf.mxu0
    %v1894 = vadd.f32 0.0, %v1893
    %v1895 = vpop.f32.mrf.mxu0
    %1896 = vdwg.mxu0
    %v1897 = vadd.f32 %v1821, %v1894
    %v1898 = vmul.f32 %v1897, %v840
    %v1899 = vtanh.pop %v1898
    %v1900 = vmul.f32 %v1899, %v840
    %v1901 = vadd.f32 %v1900, %v841
    %v1902 = vmul.f32 %v1901, %v1814
    %1904 = vrot.lane.b32.xlu0 %v1901, 64
    %v1905 = vpop.permute.xlu0 %1904
    %v1907 = vmul.f32 %v1901, %v1905
    %1909 = vrot.lane.b32.xlu0 %v1907, 32
    %v1910 = vpop.permute.xlu0 %1909
    %v1912 = vadd.f32 %v1902, %v1910
    %v1913 = vtanh.pop %v1912
    %1915 = vrot.lane.b32.xlu0 %v1913, 64
    %v1916 = vpop.permute.xlu0 %1915
    %v1918 = vmul.f32 %v1901, %v1916
    %v1919 = vld [vmem:[%s791] sm:$0x3]
    %1921 = vrot.lane.b32.xlu0 %v1918, 32
    %v1922 = vpop.permute.xlu0 %1921
    %v1923 = vsel %vm843, %v1922, 0
    %1925 = vmatprep.subr.mxu0 0.0
    %1926 = vmatpush1.msra.mxu0 0.0
    %1927 = vmatprep.subr.mxu0 0.0
    %1928 = vmatpush1.msra.mxu0 0.0
    %1929 = vmatprep.subr.mxu0 0.0
    %1930 = vmatpush1.msra.mxu0 0.0
    %1931 = vmatprep.subr.mxu0 0.0
    %1932 = vmatpush1.msra.mxu0 0.0
    %1933 = vmatprep.subr.mxu0 0.0
    %1934 = vmatpush1.msra.mxu0 0.0
    %1935 = vmatprep.subr.mxu0 0.0
    %1936 = vmatpush1.msra.mxu0 0.0
    %1937 = vmatprep.subr.mxu0 0.0
    %1938 = vmatpush1.msra.mxu0 0.0
    %1939 = vmatprep.subr.mxu0 0.0
    %1940 = vmatpush1.msra.mxu0 0.0
    %1941 = vmatprep.subr.mxu0 0.0
    %1942 = vmatpush1.msra.mxu0 0.0
    %1943 = vmatprep.subr.mxu0 0.0
    %1944 = vmatpush1.msra.mxu0 0.0
    %1945 = vmatprep.subr.mxu0 0.0
    %1946 = vmatpush1.msra.mxu0 0.0
    %1947 = vmatprep.subr.mxu0 0.0
    %1948 = vmatpush1.msra.mxu0 0.0
    %1949 = vmatprep.subr.mxu0 0.0
    %1950 = vmatpush1.msra.mxu0 %v834
    %1951 = vmatprep.subr.mxu0 0.0
    %1952 = vmatpush1.msra.mxu0 %v833
    %1953 = vmatprep.subr.mxu0 0.0
    %1954 = vmatpush1.msra.mxu0 %v832
    %1955 = vmatprep.subr.mxu0 0.0
    %1956 = vmatpush1.msra.mxu0 %v831
    %1957 = vmatprep.subr.mxu0 0.0
    %1958 = vmatpush2.msra.mxu0 0.0
    %1959 = vmatprep.subr.mxu0 0.0
    %1960 = vmatpush2.msra.mxu0 0.0
    %1961 = vmatprep.subr.mxu0 0.0
    %1962 = vmatpush2.msra.mxu0 0.0
    %1963 = vmatprep.subr.mxu0 0.0
    %1964 = vmatpush2.msra.mxu0 0.0
    %1965 = vmatprep.subr.mxu0 0.0
    %1966 = vmatpush2.msra.mxu0 0.0
    %1967 = vmatprep.subr.mxu0 0.0
    %1968 = vmatpush2.msra.mxu0 0.0
    %1969 = vmatprep.subr.mxu0 0.0
    %1970 = vmatpush2.msra.mxu0 0.0
    %1971 = vmatprep.subr.mxu0 0.0
    %1972 = vmatpush2.msra.mxu0 0.0
    %1973 = vmatprep.subr.mxu0 0.0
    %1974 = vmatpush2.msra.mxu0 0.0
    %1975 = vmatprep.subr.mxu0 0.0
    %1976 = vmatpush2.msra.mxu0 0.0
    %1977 = vmatprep.subr.mxu0 0.0
    %1978 = vmatpush2.msra.mxu0 0.0
    %1979 = vmatprep.subr.mxu0 0.0
    %1980 = vmatpush2.msra.mxu0 0.0
    %1981 = vmatprep.subr.mxu0 0.0
    %1982 = vmatpush2.msra.mxu0 0.0
    %1983 = vmatprep.subr.mxu0 0.0
    %1984 = vmatpush2.msra.mxu0 0.0
    %1985 = vmatprep.subr.mxu0 0.0
    %1986 = vmatpush2.msra.mxu0 0.0
    %1987 = vmatprep.subr.mxu0 0.0
    %1988 = vmatpush2.msra.mxu0 0.0
    %1989 = vmatprep.mubr.f32.mxu0 0.0
    %1990 = vmatmul.mubr.f32.gmra.mxu0 %v1923
    %v1991 = vpop.f32.mrf.mxu0
    %v1992 = vadd.f32 0.0, %v1991
    %v1993 = vpop.f32.mrf.mxu0
    %1994 = vdwg.mxu0
    %v1995 = vadd.f32 %v1919, %v1992
    %v1996 = vmul.f32 %v1995, %v840
    %v1997 = vtanh.pop %v1996
    %v1998 = vmul.f32 %v1997, %v840
    %v1999 = vadd.f32 %v1998, %v841
    %v2000 = vmul.f32 %v1999, %v1912
    %2002 = vrot.lane.b32.xlu0 %v1999, 64
    %v2003 = vpop.permute.xlu0 %2002
    %v2005 = vmul.f32 %v1999, %v2003
    %2007 = vrot.lane.b32.xlu0 %v2005, 32
    %v2008 = vpop.permute.xlu0 %2007
    %v2010 = vadd.f32 %v2000, %v2008
    %v2011 = vtanh.pop %v2010
    %2013 = vrot.lane.b32.xlu0 %v2011, 64
    %v2014 = vpop.permute.xlu0 %2013
    %v2016 = vmul.f32 %v1999, %v2014
    %v2017 = vld [vmem:[%s793] sm:$0x3]
    %2019 = vrot.lane.b32.xlu0 %v2016, 32
    %v2020 = vpop.permute.xlu0 %2019
    %v2021 = vsel %vm843, %v2020, 0
    %2023 = vmatprep.subr.mxu0 0.0
    %2024 = vmatpush1.msra.mxu0 0.0
    %2025 = vmatprep.subr.mxu0 0.0
    %2026 = vmatpush1.msra.mxu0 0.0
    %2027 = vmatprep.subr.mxu0 0.0
    %2028 = vmatpush1.msra.mxu0 0.0
    %2029 = vmatprep.subr.mxu0 0.0
    %2030 = vmatpush1.msra.mxu0 0.0
    %2031 = vmatprep.subr.mxu0 0.0
    %2032 = vmatpush1.msra.mxu0 0.0
    %2033 = vmatprep.subr.mxu0 0.0
    %2034 = vmatpush1.msra.mxu0 0.0
    %2035 = vmatprep.subr.mxu0 0.0
    %2036 = vmatpush1.msra.mxu0 0.0
    %2037 = vmatprep.subr.mxu0 0.0
    %2038 = vmatpush1.msra.mxu0 0.0
    %2039 = vmatprep.subr.mxu0 0.0
    %2040 = vmatpush1.msra.mxu0 0.0
    %2041 = vmatprep.subr.mxu0 0.0
    %2042 = vmatpush1.msra.mxu0 0.0
    %2043 = vmatprep.subr.mxu0 0.0
    %2044 = vmatpush1.msra.mxu0 0.0
    %2045 = vmatprep.subr.mxu0 0.0
    %2046 = vmatpush1.msra.mxu0 0.0
    %2047 = vmatprep.subr.mxu0 0.0
    %2048 = vmatpush1.msra.mxu0 %v834
    %2049 = vmatprep.subr.mxu0 0.0
    %2050 = vmatpush1.msra.mxu0 %v833
    %2051 = vmatprep.subr.mxu0 0.0
    %2052 = vmatpush1.msra.mxu0 %v832
    %2053 = vmatprep.subr.mxu0 0.0
    %2054 = vmatpush1.msra.mxu0 %v831
    %2055 = vmatprep.subr.mxu0 0.0
    %2056 = vmatpush2.msra.mxu0 0.0
    %2057 = vmatprep.subr.mxu0 0.0
    %2058 = vmatpush2.msra.mxu0 0.0
    %2059 = vmatprep.subr.mxu0 0.0
    %2060 = vmatpush2.msra.mxu0 0.0
    %2061 = vmatprep.subr.mxu0 0.0
    %2062 = vmatpush2.msra.mxu0 0.0
    %2063 = vmatprep.subr.mxu0 0.0
    %2064 = vmatpush2.msra.mxu0 0.0
    %2065 = vmatprep.subr.mxu0 0.0
    %2066 = vmatpush2.msra.mxu0 0.0
    %2067 = vmatprep.subr.mxu0 0.0
    %2068 = vmatpush2.msra.mxu0 0.0
    %2069 = vmatprep.subr.mxu0 0.0
    %2070 = vmatpush2.msra.mxu0 0.0
    %2071 = vmatprep.subr.mxu0 0.0
    %2072 = vmatpush2.msra.mxu0 0.0
    %2073 = vmatprep.subr.mxu0 0.0
    %2074 = vmatpush2.msra.mxu0 0.0
    %2075 = vmatprep.subr.mxu0 0.0
    %2076 = vmatpush2.msra.mxu0 0.0
    %2077 = vmatprep.subr.mxu0 0.0
    %2078 = vmatpush2.msra.mxu0 0.0
    %2079 = vmatprep.subr.mxu0 0.0
    %2080 = vmatpush2.msra.mxu0 0.0
    %2081 = vmatprep.subr.mxu0 0.0
    %2082 = vmatpush2.msra.mxu0 0.0
    %2083 = vmatprep.subr.mxu0 0.0
    %2084 = vmatpush2.msra.mxu0 0.0
    %2085 = vmatprep.subr.mxu0 0.0
    %2086 = vmatpush2.msra.mxu0 0.0
    %2087 = vmatprep.mubr.f32.mxu0 0.0
    %2088 = vmatmul.mubr.f32.gmra.mxu0 %v2021
    %v2089 = vpop.f32.mrf.mxu0
    %v2090 = vadd.f32 0.0, %v2089
    %v2091 = vpop.f32.mrf.mxu0
    %2092 = vdwg.mxu0
    %v2093 = vadd.f32 %v2017, %v2090
    %v2094 = vmul.f32 %v2093, %v840
    %v2095 = vtanh.pop %v2094
    %v2096 = vmul.f32 %v2095, %v840
    %v2097 = vadd.f32 %v2096, %v841
    %v2098 = vmul.f32 %v2097, %v2010
    %2100 = vrot.lane.b32.xlu0 %v2097, 64
    %v2101 = vpop.permute.xlu0 %2100
    %v2103 = vmul.f32 %v2097, %v2101
    %2105 = vrot.lane.b32.xlu0 %v2103, 32
    %v2106 = vpop.permute.xlu0 %2105
    %v2108 = vadd.f32 %v2098, %v2106
    %v2109 = vtanh.pop %v2108
    %2111 = vrot.lane.b32.xlu0 %v2109, 64
    %v2112 = vpop.permute.xlu0 %2111
    %v2114 = vmul.f32 %v2097, %v2112
    %v2115 = vld [vmem:[%s795] sm:$0x3]
    %2117 = vrot.lane.b32.xlu0 %v2114, 32
    %v2118 = vpop.permute.xlu0 %2117
    %v2119 = vsel %vm843, %v2118, 0
    %2121 = vmatprep.subr.mxu0 0.0
    %2122 = vmatpush1.msra.mxu0 0.0
    %2123 = vmatprep.subr.mxu0 0.0
    %2124 = vmatpush1.msra.mxu0 0.0
    %2125 = vmatprep.subr.mxu0 0.0
    %2126 = vmatpush1.msra.mxu0 0.0
    %2127 = vmatprep.subr.mxu0 0.0
    %2128 = vmatpush1.msra.mxu0 0.0
    %2129 = vmatprep.subr.mxu0 0.0
    %2130 = vmatpush1.msra.mxu0 0.0
    %2131 = vmatprep.subr.mxu0 0.0
    %2132 = vmatpush1.msra.mxu0 0.0
    %2133 = vmatprep.subr.mxu0 0.0
    %2134 = vmatpush1.msra.mxu0 0.0
    %2135 = vmatprep.subr.mxu0 0.0
    %2136 = vmatpush1.msra.mxu0 0.0
    %2137 = vmatprep.subr.mxu0 0.0
    %2138 = vmatpush1.msra.mxu0 0.0
    %2139 = vmatprep.subr.mxu0 0.0
    %2140 = vmatpush1.msra.mxu0 0.0
    %2141 = vmatprep.subr.mxu0 0.0
    %2142 = vmatpush1.msra.mxu0 0.0
    %2143 = vmatprep.subr.mxu0 0.0
    %2144 = vmatpush1.msra.mxu0 0.0
    %2145 = vmatprep.subr.mxu0 0.0
    %2146 = vmatpush1.msra.mxu0 %v834
    %2147 = vmatprep.subr.mxu0 0.0
    %2148 = vmatpush1.msra.mxu0 %v833
    %2149 = vmatprep.subr.mxu0 0.0
    %2150 = vmatpush1.msra.mxu0 %v832
    %2151 = vmatprep.subr.mxu0 0.0
    %2152 = vmatpush1.msra.mxu0 %v831
    %2153 = vmatprep.subr.mxu0 0.0
    %2154 = vmatpush2.msra.mxu0 0.0
    %2155 = vmatprep.subr.mxu0 0.0
    %2156 = vmatpush2.msra.mxu0 0.0
    %2157 = vmatprep.subr.mxu0 0.0
    %2158 = vmatpush2.msra.mxu0 0.0
    %2159 = vmatprep.subr.mxu0 0.0
    %2160 = vmatpush2.msra.mxu0 0.0
    %2161 = vmatprep.subr.mxu0 0.0
    %2162 = vmatpush2.msra.mxu0 0.0
    %2163 = vmatprep.subr.mxu0 0.0
    %2164 = vmatpush2.msra.mxu0 0.0
    %2165 = vmatprep.subr.mxu0 0.0
    %2166 = vmatpush2.msra.mxu0 0.0
    %2167 = vmatprep.subr.mxu0 0.0
    %2168 = vmatpush2.msra.mxu0 0.0
    %2169 = vmatprep.subr.mxu0 0.0
    %2170 = vmatpush2.msra.mxu0 0.0
    %2171 = vmatprep.subr.mxu0 0.0
    %2172 = vmatpush2.msra.mxu0 0.0
    %2173 = vmatprep.subr.mxu0 0.0
    %2174 = vmatpush2.msra.mxu0 0.0
    %2175 = vmatprep.subr.mxu0 0.0
    %2176 = vmatpush2.msra.mxu0 0.0
    %2177 = vmatprep.subr.mxu0 0.0
    %2178 = vmatpush2.msra.mxu0 0.0
    %2179 = vmatprep.subr.mxu0 0.0
    %2180 = vmatpush2.msra.mxu0 0.0
    %2181 = vmatprep.subr.mxu0 0.0
    %2182 = vmatpush2.msra.mxu0 0.0
    %2183 = vmatprep.subr.mxu0 0.0
    %2184 = vmatpush2.msra.mxu0 0.0
    %2185 = vmatprep.mubr.f32.mxu0 0.0
    %2186 = vmatmul.mubr.f32.gmra.mxu0 %v2119
    %v2187 = vpop.f32.mrf.mxu0
    %v2188 = vadd.f32 0.0, %v2187
    %v2189 = vpop.f32.mrf.mxu0
    %2190 = vdwg.mxu0
    %v2191 = vadd.f32 %v2115, %v2188
    %v2192 = vmul.f32 %v2191, %v840
    %v2193 = vtanh.pop %v2192
    %v2194 = vmul.f32 %v2193, %v840
    %v2195 = vadd.f32 %v2194, %v841
    %v2196 = vmul.f32 %v2195, %v2108
    %2198 = vrot.lane.b32.xlu0 %v2195, 64
    %v2199 = vpop.permute.xlu0 %2198
    %v2201 = vmul.f32 %v2195, %v2199
    %2203 = vrot.lane.b32.xlu0 %v2201, 32
    %v2204 = vpop.permute.xlu0 %2203
    %v2206 = vadd.f32 %v2196, %v2204
    %v2207 = vtanh.pop %v2206
    %2209 = vrot.lane.b32.xlu0 %v2207, 64
    %v2210 = vpop.permute.xlu0 %2209
    %v2212 = vmul.f32 %v2195, %v2210
    %v2213 = vld [vmem:[%s797] sm:$0x3]
    %2215 = vrot.lane.b32.xlu0 %v2212, 32
    %v2216 = vpop.permute.xlu0 %2215
    %v2217 = vsel %vm843, %v2216, 0
    %2219 = vmatprep.subr.mxu0 0.0
    %2220 = vmatpush1.msra.mxu0 0.0
    %2221 = vmatprep.subr.mxu0 0.0
    %2222 = vmatpush1.msra.mxu0 0.0
    %2223 = vmatprep.subr.mxu0 0.0
    %2224 = vmatpush1.msra.mxu0 0.0
    %2225 = vmatprep.subr.mxu0 0.0
    %2226 = vmatpush1.msra.mxu0 0.0
    %2227 = vmatprep.subr.mxu0 0.0
    %2228 = vmatpush1.msra.mxu0 0.0
    %2229 = vmatprep.subr.mxu0 0.0
    %2230 = vmatpush1.msra.mxu0 0.0
    %2231 = vmatprep.subr.mxu0 0.0
    %2232 = vmatpush1.msra.mxu0 0.0
    %2233 = vmatprep.subr.mxu0 0.0
    %2234 = vmatpush1.msra.mxu0 0.0
    %2235 = vmatprep.subr.mxu0 0.0
    %2236 = vmatpush1.msra.mxu0 0.0
    %2237 = vmatprep.subr.mxu0 0.0
    %2238 = vmatpush1.msra.mxu0 0.0
    %2239 = vmatprep.subr.mxu0 0.0
    %2240 = vmatpush1.msra.mxu0 0.0
    %2241 = vmatprep.subr.mxu0 0.0
    %2242 = vmatpush1.msra.mxu0 0.0
    %2243 = vmatprep.subr.mxu0 0.0
    %2244 = vmatpush1.msra.mxu0 %v834
    %2245 = vmatprep.subr.mxu0 0.0
    %2246 = vmatpush1.msra.mxu0 %v833
    %2247 = vmatprep.subr.mxu0 0.0
    %2248 = vmatpush1.msra.mxu0 %v832
    %2249 = vmatprep.subr.mxu0 0.0
    %2250 = vmatpush1.msra.mxu0 %v831
    %2251 = vmatprep.subr.mxu0 0.0
    %2252 = vmatpush2.msra.mxu0 0.0
    %2253 = vmatprep.subr.mxu0 0.0
    %2254 = vmatpush2.msra.mxu0 0.0
    %2255 = vmatprep.subr.mxu0 0.0
    %2256 = vmatpush2.msra.mxu0 0.0
    %2257 = vmatprep.subr.mxu0 0.0
    %2258 = vmatpush2.msra.mxu0 0.0
    %2259 = vmatprep.subr.mxu0 0.0
    %2260 = vmatpush2.msra.mxu0 0.0
    %2261 = vmatprep.subr.mxu0 0.0
    %2262 = vmatpush2.msra.mxu0 0.0
    %2263 = vmatprep.subr.mxu0 0.0
    %2264 = vmatpush2.msra.mxu0 0.0
    %2265 = vmatprep.subr.mxu0 0.0
    %2266 = vmatpush2.msra.mxu0 0.0
    %2267 = vmatprep.subr.mxu0 0.0
    %2268 = vmatpush2.msra.mxu0 0.0
    %2269 = vmatprep.subr.mxu0 0.0
    %2270 = vmatpush2.msra.mxu0 0.0
    %2271 = vmatprep.subr.mxu0 0.0
    %2272 = vmatpush2.msra.mxu0 0.0
    %2273 = vmatprep.subr.mxu0 0.0
    %2274 = vmatpush2.msra.mxu0 0.0
    %2275 = vmatprep.subr.mxu0 0.0
    %2276 = vmatpush2.msra.mxu0 0.0
    %2277 = vmatprep.subr.mxu0 0.0
    %2278 = vmatpush2.msra.mxu0 0.0
    %2279 = vmatprep.subr.mxu0 0.0
    %2280 = vmatpush2.msra.mxu0 0.0
    %2281 = vmatprep.subr.mxu0 0.0
    %2282 = vmatpush2.msra.mxu0 0.0
    %2283 = vmatprep.mubr.f32.mxu0 0.0
    %2284 = vmatmul.mubr.f32.gmra.mxu0 %v2217
    %v2285 = vpop.f32.mrf.mxu0
    %v2286 = vadd.f32 0.0, %v2285
    %v2287 = vpop.f32.mrf.mxu0
    %2288 = vdwg.mxu0
    %v2289 = vadd.f32 %v2213, %v2286
    %v2290 = vmul.f32 %v2289, %v840
    %v2291 = vtanh.pop %v2290
    %v2292 = vmul.f32 %v2291, %v840
    %v2293 = vadd.f32 %v2292, %v841
    %v2294 = vmul.f32 %v2293, %v2206
    %2296 = vrot.lane.b32.xlu0 %v2293, 64
    %v2297 = vpop.permute.xlu0 %2296
    %v2299 = vmul.f32 %v2293, %v2297
    %2301 = vrot.lane.b32.xlu0 %v2299, 32
    %v2302 = vpop.permute.xlu0 %2301
    %v2304 = vadd.f32 %v2294, %v2302
    %v2305 = vtanh.pop %v2304
    %2307 = vrot.lane.b32.xlu0 %v2305, 64
    %v2308 = vpop.permute.xlu0 %2307
    %v2310 = vmul.f32 %v2293, %v2308
    %v2311 = vld [vmem:[%s799] sm:$0x3]
    %2313 = vrot.lane.b32.xlu0 %v2310, 32
    %v2314 = vpop.permute.xlu0 %2313
    %v2315 = vsel %vm843, %v2314, 0
    %2317 = vmatprep.subr.mxu0 0.0
    %2318 = vmatpush1.msra.mxu0 0.0
    %2319 = vmatprep.subr.mxu0 0.0
    %2320 = vmatpush1.msra.mxu0 0.0
    %2321 = vmatprep.subr.mxu0 0.0
    %2322 = vmatpush1.msra.mxu0 0.0
    %2323 = vmatprep.subr.mxu0 0.0
    %2324 = vmatpush1.msra.mxu0 0.0
    %2325 = vmatprep.subr.mxu0 0.0
    %2326 = vmatpush1.msra.mxu0 0.0
    %2327 = vmatprep.subr.mxu0 0.0
    %2328 = vmatpush1.msra.mxu0 0.0
    %2329 = vmatprep.subr.mxu0 0.0
    %2330 = vmatpush1.msra.mxu0 0.0
    %2331 = vmatprep.subr.mxu0 0.0
    %2332 = vmatpush1.msra.mxu0 0.0
    %2333 = vmatprep.subr.mxu0 0.0
    %2334 = vmatpush1.msra.mxu0 0.0
    %2335 = vmatprep.subr.mxu0 0.0
    %2336 = vmatpush1.msra.mxu0 0.0
    %2337 = vmatprep.subr.mxu0 0.0
    %2338 = vmatpush1.msra.mxu0 0.0
    %2339 = vmatprep.subr.mxu0 0.0
    %2340 = vmatpush1.msra.mxu0 0.0
    %2341 = vmatprep.subr.mxu0 0.0
    %2342 = vmatpush1.msra.mxu0 %v834
    %2343 = vmatprep.subr.mxu0 0.0
    %2344 = vmatpush1.msra.mxu0 %v833
    %2345 = vmatprep.subr.mxu0 0.0
    %2346 = vmatpush1.msra.mxu0 %v832
    %2347 = vmatprep.subr.mxu0 0.0
    %2348 = vmatpush1.msra.mxu0 %v831
    %2349 = vmatprep.subr.mxu0 0.0
    %2350 = vmatpush2.msra.mxu0 0.0
    %2351 = vmatprep.subr.mxu0 0.0
    %2352 = vmatpush2.msra.mxu0 0.0
    %2353 = vmatprep.subr.mxu0 0.0
    %2354 = vmatpush2.msra.mxu0 0.0
    %2355 = vmatprep.subr.mxu0 0.0
    %2356 = vmatpush2.msra.mxu0 0.0
    %2357 = vmatprep.subr.mxu0 0.0
    %2358 = vmatpush2.msra.mxu0 0.0
    %2359 = vmatprep.subr.mxu0 0.0
    %2360 = vmatpush2.msra.mxu0 0.0
    %2361 = vmatprep.subr.mxu0 0.0
    %2362 = vmatpush2.msra.mxu0 0.0
    %2363 = vmatprep.subr.mxu0 0.0
    %2364 = vmatpush2.msra.mxu0 0.0
    %2365 = vmatprep.subr.mxu0 0.0
    %2366 = vmatpush2.msra.mxu0 0.0
    %2367 = vmatprep.subr.mxu0 0.0
    %2368 = vmatpush2.msra.mxu0 0.0
    %2369 = vmatprep.subr.mxu0 0.0
    %2370 = vmatpush2.msra.mxu0 0.0
    %2371 = vmatprep.subr.mxu0 0.0
    %2372 = vmatpush2.msra.mxu0 0.0
    %2373 = vmatprep.subr.mxu0 0.0
    %2374 = vmatpush2.msra.mxu0 0.0
    %2375 = vmatprep.subr.mxu0 0.0
    %2376 = vmatpush2.msra.mxu0 0.0
    %2377 = vmatprep.subr.mxu0 0.0
    %2378 = vmatpush2.msra.mxu0 0.0
    %2379 = vmatprep.subr.mxu0 0.0
    %2380 = vmatpush2.msra.mxu0 0.0
    %2381 = vmatprep.mubr.f32.mxu0 0.0
    %2382 = vmatmul.mubr.f32.gmra.mxu0 %v2315
    %v2383 = vpop.f32.mrf.mxu0
    %v2384 = vadd.f32 0.0, %v2383
    %v2385 = vpop.f32.mrf.mxu0
    %2386 = vdwg.mxu0
    %v2387 = vadd.f32 %v2311, %v2384
    %v2388 = vmul.f32 %v2387, %v840
    %v2389 = vtanh.pop %v2388
    %v2390 = vmul.f32 %v2389, %v840
    %v2391 = vadd.f32 %v2390, %v841
    %v2392 = vmul.f32 %v2391, %v2304
    %2394 = vrot.lane.b32.xlu0 %v2391, 64
    %v2395 = vpop.permute.xlu0 %2394
    %v2397 = vmul.f32 %v2391, %v2395
    %2399 = vrot.lane.b32.xlu0 %v2397, 32
    %v2400 = vpop.permute.xlu0 %2399
    %v2402 = vadd.f32 %v2392, %v2400
    %v2403 = vtanh.pop %v2402
    %2405 = vrot.lane.b32.xlu0 %v2403, 64
    %v2406 = vpop.permute.xlu0 %2405
    %v2408 = vmul.f32 %v2391, %v2406
    %v2409 = vld [vmem:[%s801] sm:$0x3]
    %2411 = vrot.lane.b32.xlu0 %v2408, 32
    %v2412 = vpop.permute.xlu0 %2411
    %v2413 = vsel %vm843, %v2412, 0
    %2415 = vmatprep.subr.mxu0 0.0
    %2416 = vmatpush1.msra.mxu0 0.0
    %2417 = vmatprep.subr.mxu0 0.0
    %2418 = vmatpush1.msra.mxu0 0.0
    %2419 = vmatprep.subr.mxu0 0.0
    %2420 = vmatpush1.msra.mxu0 0.0
    %2421 = vmatprep.subr.mxu0 0.0
    %2422 = vmatpush1.msra.mxu0 0.0
    %2423 = vmatprep.subr.mxu0 0.0
    %2424 = vmatpush1.msra.mxu0 0.0
    %2425 = vmatprep.subr.mxu0 0.0
    %2426 = vmatpush1.msra.mxu0 0.0
    %2427 = vmatprep.subr.mxu0 0.0
    %2428 = vmatpush1.msra.mxu0 0.0
    %2429 = vmatprep.subr.mxu0 0.0
    %2430 = vmatpush1.msra.mxu0 0.0
    %2431 = vmatprep.subr.mxu0 0.0
    %2432 = vmatpush1.msra.mxu0 0.0
    %2433 = vmatprep.subr.mxu0 0.0
    %2434 = vmatpush1.msra.mxu0 0.0
    %2435 = vmatprep.subr.mxu0 0.0
    %2436 = vmatpush1.msra.mxu0 0.0
    %2437 = vmatprep.subr.mxu0 0.0
    %2438 = vmatpush1.msra.mxu0 0.0
    %2439 = vmatprep.subr.mxu0 0.0
    %2440 = vmatpush1.msra.mxu0 %v834
    %2441 = vmatprep.subr.mxu0 0.0
    %2442 = vmatpush1.msra.mxu0 %v833
    %2443 = vmatprep.subr.mxu0 0.0
    %2444 = vmatpush1.msra.mxu0 %v832
    %2445 = vmatprep.subr.mxu0 0.0
    %2446 = vmatpush1.msra.mxu0 %v831
    %2447 = vmatprep.subr.mxu0 0.0
    %2448 = vmatpush2.msra.mxu0 0.0
    %2449 = vmatprep.subr.mxu0 0.0
    %2450 = vmatpush2.msra.mxu0 0.0
    %2451 = vmatprep.subr.mxu0 0.0
    %2452 = vmatpush2.msra.mxu0 0.0
    %2453 = vmatprep.subr.mxu0 0.0
    %2454 = vmatpush2.msra.mxu0 0.0
    %2455 = vmatprep.subr.mxu0 0.0
    %2456 = vmatpush2.msra.mxu0 0.0
    %2457 = vmatprep.subr.mxu0 0.0
    %2458 = vmatpush2.msra.mxu0 0.0
    %2459 = vmatprep.subr.mxu0 0.0
    %2460 = vmatpush2.msra.mxu0 0.0
    %2461 = vmatprep.subr.mxu0 0.0
    %2462 = vmatpush2.msra.mxu0 0.0
    %2463 = vmatprep.subr.mxu0 0.0
    %2464 = vmatpush2.msra.mxu0 0.0
    %2465 = vmatprep.subr.mxu0 0.0
    %2466 = vmatpush2.msra.mxu0 0.0
    %2467 = vmatprep.subr.mxu0 0.0
    %2468 = vmatpush2.msra.mxu0 0.0
    %2469 = vmatprep.subr.mxu0 0.0
    %2470 = vmatpush2.msra.mxu0 0.0
    %2471 = vmatprep.subr.mxu0 0.0
    %2472 = vmatpush2.msra.mxu0 0.0
    %2473 = vmatprep.subr.mxu0 0.0
    %2474 = vmatpush2.msra.mxu0 0.0
    %2475 = vmatprep.subr.mxu0 0.0
    %2476 = vmatpush2.msra.mxu0 0.0
    %2477 = vmatprep.subr.mxu0 0.0
    %2478 = vmatpush2.msra.mxu0 0.0
    %2479 = vmatprep.mubr.f32.mxu0 0.0
    %2480 = vmatmul.mubr.f32.gmra.mxu0 %v2413
    %v2481 = vpop.f32.mrf.mxu0
    %v2482 = vadd.f32 0.0, %v2481
    %v2483 = vpop.f32.mrf.mxu0
    %2484 = vdwg.mxu0
    %v2485 = vadd.f32 %v2409, %v2482
    %v2486 = vmul.f32 %v2485, %v840
    %v2487 = vtanh.pop %v2486
    %v2488 = vmul.f32 %v2487, %v840
    %v2489 = vadd.f32 %v2488, %v841
    %v2490 = vmul.f32 %v2489, %v2402
    %2492 = vrot.lane.b32.xlu0 %v2489, 64
    %v2493 = vpop.permute.xlu0 %2492
    %v2495 = vmul.f32 %v2489, %v2493
    %2497 = vrot.lane.b32.xlu0 %v2495, 32
    %v2498 = vpop.permute.xlu0 %2497
    %v2500 = vadd.f32 %v2490, %v2498
    %v2501 = vtanh.pop %v2500
    %2503 = vrot.lane.b32.xlu0 %v2501, 64
    %v2504 = vpop.permute.xlu0 %2503
    %v2506 = vmul.f32 %v2489, %v2504
    %v2507 = vld [vmem:[%s803] sm:$0x3]
    %2509 = vrot.lane.b32.xlu0 %v2506, 32
    %v2510 = vpop.permute.xlu0 %2509
    %v2511 = vsel %vm843, %v2510, 0
    %2513 = vmatprep.subr.mxu0 0.0
    %2514 = vmatpush1.msra.mxu0 0.0
    %2515 = vmatprep.subr.mxu0 0.0
    %2516 = vmatpush1.msra.mxu0 0.0
    %2517 = vmatprep.subr.mxu0 0.0
    %2518 = vmatpush1.msra.mxu0 0.0
    %2519 = vmatprep.subr.mxu0 0.0
    %2520 = vmatpush1.msra.mxu0 0.0
    %2521 = vmatprep.subr.mxu0 0.0
    %2522 = vmatpush1.msra.mxu0 0.0
    %2523 = vmatprep.subr.mxu0 0.0
    %2524 = vmatpush1.msra.mxu0 0.0
    %2525 = vmatprep.subr.mxu0 0.0
    %2526 = vmatpush1.msra.mxu0 0.0
    %2527 = vmatprep.subr.mxu0 0.0
    %2528 = vmatpush1.msra.mxu0 0.0
    %2529 = vmatprep.subr.mxu0 0.0
    %2530 = vmatpush1.msra.mxu0 0.0
    %2531 = vmatprep.subr.mxu0 0.0
    %2532 = vmatpush1.msra.mxu0 0.0
    %2533 = vmatprep.subr.mxu0 0.0
    %2534 = vmatpush1.msra.mxu0 0.0
    %2535 = vmatprep.subr.mxu0 0.0
    %2536 = vmatpush1.msra.mxu0 0.0
    %2537 = vmatprep.subr.mxu0 0.0
    %2538 = vmatpush1.msra.mxu0 %v834
    %2539 = vmatprep.subr.mxu0 0.0
    %2540 = vmatpush1.msra.mxu0 %v833
    %2541 = vmatprep.subr.mxu0 0.0
    %2542 = vmatpush1.msra.mxu0 %v832
    %2543 = vmatprep.subr.mxu0 0.0
    %2544 = vmatpush1.msra.mxu0 %v831
    %2545 = vmatprep.subr.mxu0 0.0
    %2546 = vmatpush2.msra.mxu0 0.0
    %2547 = vmatprep.subr.mxu0 0.0
    %2548 = vmatpush2.msra.mxu0 0.0
    %2549 = vmatprep.subr.mxu0 0.0
    %2550 = vmatpush2.msra.mxu0 0.0
    %2551 = vmatprep.subr.mxu0 0.0
    %2552 = vmatpush2.msra.mxu0 0.0
    %2553 = vmatprep.subr.mxu0 0.0
    %2554 = vmatpush2.msra.mxu0 0.0
    %2555 = vmatprep.subr.mxu0 0.0
    %2556 = vmatpush2.msra.mxu0 0.0
    %2557 = vmatprep.subr.mxu0 0.0
    %2558 = vmatpush2.msra.mxu0 0.0
    %2559 = vmatprep.subr.mxu0 0.0
    %2560 = vmatpush2.msra.mxu0 0.0
    %2561 = vmatprep.subr.mxu0 0.0
    %2562 = vmatpush2.msra.mxu0 0.0
    %2563 = vmatprep.subr.mxu0 0.0
    %2564 = vmatpush2.msra.mxu0 0.0
    %2565 = vmatprep.subr.mxu0 0.0
    %2566 = vmatpush2.msra.mxu0 0.0
    %2567 = vmatprep.subr.mxu0 0.0
    %2568 = vmatpush2.msra.mxu0 0.0
    %2569 = vmatprep.subr.mxu0 0.0
    %2570 = vmatpush2.msra.mxu0 0.0
    %2571 = vmatprep.subr.mxu0 0.0
    %2572 = vmatpush2.msra.mxu0 0.0
    %2573 = vmatprep.subr.mxu0 0.0
    %2574 = vmatpush2.msra.mxu0 0.0
    %2575 = vmatprep.subr.mxu0 0.0
    %2576 = vmatpush2.msra.mxu0 0.0
    %2577 = vmatprep.mubr.f32.mxu0 0.0
    %2578 = vmatmul.mubr.f32.gmra.mxu0 %v2511
    %v2579 = vpop.f32.mrf.mxu0
    %v2580 = vadd.f32 0.0, %v2579
    %v2581 = vpop.f32.mrf.mxu0
    %2582 = vdwg.mxu0
    %v2583 = vadd.f32 %v2507, %v2580
    %v2584 = vmul.f32 %v2583, %v840
    %v2585 = vtanh.pop %v2584
    %v2586 = vmul.f32 %v2585, %v840
    %v2587 = vadd.f32 %v2586, %v841
    %v2588 = vmul.f32 %v2587, %v2500
    %2590 = vrot.lane.b32.xlu0 %v2587, 64
    %v2591 = vpop.permute.xlu0 %2590
    %v2593 = vmul.f32 %v2587, %v2591
    %2595 = vrot.lane.b32.xlu0 %v2593, 32
    %v2596 = vpop.permute.xlu0 %2595
    %v2598 = vadd.f32 %v2588, %v2596
    %v2599 = vtanh.pop %v2598
    %2601 = vrot.lane.b32.xlu0 %v2599, 64
    %v2602 = vpop.permute.xlu0 %2601
    %v2604 = vmul.f32 %v2587, %v2602
    %v2605 = vld [vmem:[%s805] sm:$0x3]
    %2607 = vrot.lane.b32.xlu0 %v2604, 32
    %v2608 = vpop.permute.xlu0 %2607
    %v2609 = vsel %vm843, %v2608, 0
    %2611 = vmatprep.subr.mxu0 0.0
    %2612 = vmatpush1.msra.mxu0 0.0
    %2613 = vmatprep.subr.mxu0 0.0
    %2614 = vmatpush1.msra.mxu0 0.0
    %2615 = vmatprep.subr.mxu0 0.0
    %2616 = vmatpush1.msra.mxu0 0.0
    %2617 = vmatprep.subr.mxu0 0.0
    %2618 = vmatpush1.msra.mxu0 0.0
    %2619 = vmatprep.subr.mxu0 0.0
    %2620 = vmatpush1.msra.mxu0 0.0
    %2621 = vmatprep.subr.mxu0 0.0
    %2622 = vmatpush1.msra.mxu0 0.0
    %2623 = vmatprep.subr.mxu0 0.0
    %2624 = vmatpush1.msra.mxu0 0.0
    %2625 = vmatprep.subr.mxu0 0.0
    %2626 = vmatpush1.msra.mxu0 0.0
    %2627 = vmatprep.subr.mxu0 0.0
    %2628 = vmatpush1.msra.mxu0 0.0
    %2629 = vmatprep.subr.mxu0 0.0
    %2630 = vmatpush1.msra.mxu0 0.0
    %2631 = vmatprep.subr.mxu0 0.0
    %2632 = vmatpush1.msra.mxu0 0.0
    %2633 = vmatprep.subr.mxu0 0.0
    %2634 = vmatpush1.msra.mxu0 0.0
    %2635 = vmatprep.subr.mxu0 0.0
    %2636 = vmatpush1.msra.mxu0 %v834
    %2637 = vmatprep.subr.mxu0 0.0
    %2638 = vmatpush1.msra.mxu0 %v833
    %2639 = vmatprep.subr.mxu0 0.0
    %2640 = vmatpush1.msra.mxu0 %v832
    %2641 = vmatprep.subr.mxu0 0.0
    %2642 = vmatpush1.msra.mxu0 %v831
    %2643 = vmatprep.subr.mxu0 0.0
    %2644 = vmatpush2.msra.mxu0 0.0
    %2645 = vmatprep.subr.mxu0 0.0
    %2646 = vmatpush2.msra.mxu0 0.0
    %2647 = vmatprep.subr.mxu0 0.0
    %2648 = vmatpush2.msra.mxu0 0.0
    %2649 = vmatprep.subr.mxu0 0.0
    %2650 = vmatpush2.msra.mxu0 0.0
    %2651 = vmatprep.subr.mxu0 0.0
    %2652 = vmatpush2.msra.mxu0 0.0
    %2653 = vmatprep.subr.mxu0 0.0
    %2654 = vmatpush2.msra.mxu0 0.0
    %2655 = vmatprep.subr.mxu0 0.0
    %2656 = vmatpush2.msra.mxu0 0.0
    %2657 = vmatprep.subr.mxu0 0.0
    %2658 = vmatpush2.msra.mxu0 0.0
    %2659 = vmatprep.subr.mxu0 0.0
    %2660 = vmatpush2.msra.mxu0 0.0
    %2661 = vmatprep.subr.mxu0 0.0
    %2662 = vmatpush2.msra.mxu0 0.0
    %2663 = vmatprep.subr.mxu0 0.0
    %2664 = vmatpush2.msra.mxu0 0.0
    %2665 = vmatprep.subr.mxu0 0.0
    %2666 = vmatpush2.msra.mxu0 0.0
    %2667 = vmatprep.subr.mxu0 0.0
    %2668 = vmatpush2.msra.mxu0 0.0
    %2669 = vmatprep.subr.mxu0 0.0
    %2670 = vmatpush2.msra.mxu0 0.0
    %2671 = vmatprep.subr.mxu0 0.0
    %2672 = vmatpush2.msra.mxu0 0.0
    %2673 = vmatprep.subr.mxu0 0.0
    %2674 = vmatpush2.msra.mxu0 0.0
    %2675 = vmatprep.mubr.f32.mxu0 0.0
    %2676 = vmatmul.mubr.f32.gmra.mxu0 %v2609
    %v2677 = vpop.f32.mrf.mxu0
    %v2678 = vadd.f32 0.0, %v2677
    %v2679 = vpop.f32.mrf.mxu0
    %2680 = vdwg.mxu0
    %v2681 = vadd.f32 %v2605, %v2678
    %v2682 = vmul.f32 %v2681, %v840
    %v2683 = vtanh.pop %v2682
    %v2684 = vmul.f32 %v2683, %v840
    %v2685 = vadd.f32 %v2684, %v841
    %v2686 = vmul.f32 %v2685, %v2598
    %2688 = vrot.lane.b32.xlu0 %v2685, 64
    %v2689 = vpop.permute.xlu0 %2688
    %v2691 = vmul.f32 %v2685, %v2689
    %2693 = vrot.lane.b32.xlu0 %v2691, 32
    %v2694 = vpop.permute.xlu0 %2693
    %v2696 = vadd.f32 %v2686, %v2694
    %v2697 = vtanh.pop %v2696
    %2699 = vrot.lane.b32.xlu0 %v2697, 64
    %v2700 = vpop.permute.xlu0 %2699
    %v2702 = vmul.f32 %v2685, %v2700
    %v2703 = vld [vmem:[%s807] sm:$0x3]
    %2705 = vrot.lane.b32.xlu0 %v2702, 32
    %v2706 = vpop.permute.xlu0 %2705
    %v2707 = vsel %vm843, %v2706, 0
    %2709 = vmatprep.subr.mxu0 0.0
    %2710 = vmatpush1.msra.mxu0 0.0
    %2711 = vmatprep.subr.mxu0 0.0
    %2712 = vmatpush1.msra.mxu0 0.0
    %2713 = vmatprep.subr.mxu0 0.0
    %2714 = vmatpush1.msra.mxu0 0.0
    %2715 = vmatprep.subr.mxu0 0.0
    %2716 = vmatpush1.msra.mxu0 0.0
    %2717 = vmatprep.subr.mxu0 0.0
    %2718 = vmatpush1.msra.mxu0 0.0
    %2719 = vmatprep.subr.mxu0 0.0
    %2720 = vmatpush1.msra.mxu0 0.0
    %2721 = vmatprep.subr.mxu0 0.0
    %2722 = vmatpush1.msra.mxu0 0.0
    %2723 = vmatprep.subr.mxu0 0.0
    %2724 = vmatpush1.msra.mxu0 0.0
    %2725 = vmatprep.subr.mxu0 0.0
    %2726 = vmatpush1.msra.mxu0 0.0
    %2727 = vmatprep.subr.mxu0 0.0
    %2728 = vmatpush1.msra.mxu0 0.0
    %2729 = vmatprep.subr.mxu0 0.0
    %2730 = vmatpush1.msra.mxu0 0.0
    %2731 = vmatprep.subr.mxu0 0.0
    %2732 = vmatpush1.msra.mxu0 0.0
    %2733 = vmatprep.subr.mxu0 0.0
    %2734 = vmatpush1.msra.mxu0 %v834
    %2735 = vmatprep.subr.mxu0 0.0
    %2736 = vmatpush1.msra.mxu0 %v833
    %2737 = vmatprep.subr.mxu0 0.0
    %2738 = vmatpush1.msra.mxu0 %v832
    %2739 = vmatprep.subr.mxu0 0.0
    %2740 = vmatpush1.msra.mxu0 %v831
    %2741 = vmatprep.subr.mxu0 0.0
    %2742 = vmatpush2.msra.mxu0 0.0
    %2743 = vmatprep.subr.mxu0 0.0
    %2744 = vmatpush2.msra.mxu0 0.0
    %2745 = vmatprep.subr.mxu0 0.0
    %2746 = vmatpush2.msra.mxu0 0.0
    %2747 = vmatprep.subr.mxu0 0.0
    %2748 = vmatpush2.msra.mxu0 0.0
    %2749 = vmatprep.subr.mxu0 0.0
    %2750 = vmatpush2.msra.mxu0 0.0
    %2751 = vmatprep.subr.mxu0 0.0
    %2752 = vmatpush2.msra.mxu0 0.0
    %2753 = vmatprep.subr.mxu0 0.0
    %2754 = vmatpush2.msra.mxu0 0.0
    %2755 = vmatprep.subr.mxu0 0.0
    %2756 = vmatpush2.msra.mxu0 0.0
    %2757 = vmatprep.subr.mxu0 0.0
    %2758 = vmatpush2.msra.mxu0 0.0
    %2759 = vmatprep.subr.mxu0 0.0
    %2760 = vmatpush2.msra.mxu0 0.0
    %2761 = vmatprep.subr.mxu0 0.0
    %2762 = vmatpush2.msra.mxu0 0.0
    %2763 = vmatprep.subr.mxu0 0.0
    %2764 = vmatpush2.msra.mxu0 0.0
    %2765 = vmatprep.subr.mxu0 0.0
    %2766 = vmatpush2.msra.mxu0 0.0
    %2767 = vmatprep.subr.mxu0 0.0
    %2768 = vmatpush2.msra.mxu0 0.0
    %2769 = vmatprep.subr.mxu0 0.0
    %2770 = vmatpush2.msra.mxu0 0.0
    %2771 = vmatprep.subr.mxu0 0.0
    %2772 = vmatpush2.msra.mxu0 0.0
    %2773 = vmatprep.mubr.f32.mxu0 0.0
    %2774 = vmatmul.mubr.f32.gmra.mxu0 %v2707
    %v2775 = vpop.f32.mrf.mxu0
    %v2776 = vadd.f32 0.0, %v2775
    %v2777 = vpop.f32.mrf.mxu0
    %2778 = vdwg.mxu0
    %v2779 = vadd.f32 %v2703, %v2776
    %v2780 = vmul.f32 %v2779, %v840
    %v2781 = vtanh.pop %v2780
    %v2782 = vmul.f32 %v2781, %v840
    %v2783 = vadd.f32 %v2782, %v841
    %v2784 = vmul.f32 %v2783, %v2696
    %2786 = vrot.lane.b32.xlu0 %v2783, 64
    %v2787 = vpop.permute.xlu0 %2786
    %v2789 = vmul.f32 %v2783, %v2787
    %2791 = vrot.lane.b32.xlu0 %v2789, 32
    %v2792 = vpop.permute.xlu0 %2791
    %v2794 = vadd.f32 %v2784, %v2792
    %v2795 = vtanh.pop %v2794
    %2797 = vrot.lane.b32.xlu0 %v2795, 64
    %v2798 = vpop.permute.xlu0 %2797
    %v2800 = vmul.f32 %v2783, %v2798
    %v2801 = vld [vmem:[%s809] sm:$0x3]
    %2803 = vrot.lane.b32.xlu0 %v2800, 32
    %v2804 = vpop.permute.xlu0 %2803
    %v2805 = vsel %vm843, %v2804, 0
    %2807 = vmatprep.subr.mxu0 0.0
    %2808 = vmatpush1.msra.mxu0 0.0
    %2809 = vmatprep.subr.mxu0 0.0
    %2810 = vmatpush1.msra.mxu0 0.0
    %2811 = vmatprep.subr.mxu0 0.0
    %2812 = vmatpush1.msra.mxu0 0.0
    %2813 = vmatprep.subr.mxu0 0.0
    %2814 = vmatpush1.msra.mxu0 0.0
    %2815 = vmatprep.subr.mxu0 0.0
    %2816 = vmatpush1.msra.mxu0 0.0
    %2817 = vmatprep.subr.mxu0 0.0
    %2818 = vmatpush1.msra.mxu0 0.0
    %2819 = vmatprep.subr.mxu0 0.0
    %2820 = vmatpush1.msra.mxu0 0.0
    %2821 = vmatprep.subr.mxu0 0.0
    %2822 = vmatpush1.msra.mxu0 0.0
    %2823 = vmatprep.subr.mxu0 0.0
    %2824 = vmatpush1.msra.mxu0 0.0
    %2825 = vmatprep.subr.mxu0 0.0
    %2826 = vmatpush1.msra.mxu0 0.0
    %2827 = vmatprep.subr.mxu0 0.0
    %2828 = vmatpush1.msra.mxu0 0.0
    %2829 = vmatprep.subr.mxu0 0.0
    %2830 = vmatpush1.msra.mxu0 0.0
    %2831 = vmatprep.subr.mxu0 0.0
    %2832 = vmatpush1.msra.mxu0 %v834
    %2833 = vmatprep.subr.mxu0 0.0
    %2834 = vmatpush1.msra.mxu0 %v833
    %2835 = vmatprep.subr.mxu0 0.0
    %2836 = vmatpush1.msra.mxu0 %v832
    %2837 = vmatprep.subr.mxu0 0.0
    %2838 = vmatpush1.msra.mxu0 %v831
    %2839 = vmatprep.subr.mxu0 0.0
    %2840 = vmatpush2.msra.mxu0 0.0
    %2841 = vmatprep.subr.mxu0 0.0
    %2842 = vmatpush2.msra.mxu0 0.0
    %2843 = vmatprep.subr.mxu0 0.0
    %2844 = vmatpush2.msra.mxu0 0.0
    %2845 = vmatprep.subr.mxu0 0.0
    %2846 = vmatpush2.msra.mxu0 0.0
    %2847 = vmatprep.subr.mxu0 0.0
    %2848 = vmatpush2.msra.mxu0 0.0
    %2849 = vmatprep.subr.mxu0 0.0
    %2850 = vmatpush2.msra.mxu0 0.0
    %2851 = vmatprep.subr.mxu0 0.0
    %2852 = vmatpush2.msra.mxu0 0.0
    %2853 = vmatprep.subr.mxu0 0.0
    %2854 = vmatpush2.msra.mxu0 0.0
    %2855 = vmatprep.subr.mxu0 0.0
    %2856 = vmatpush2.msra.mxu0 0.0
    %2857 = vmatprep.subr.mxu0 0.0
    %2858 = vmatpush2.msra.mxu0 0.0
    %2859 = vmatprep.subr.mxu0 0.0
    %2860 = vmatpush2.msra.mxu0 0.0
    %2861 = vmatprep.subr.mxu0 0.0
    %2862 = vmatpush2.msra.mxu0 0.0
    %2863 = vmatprep.subr.mxu0 0.0
    %2864 = vmatpush2.msra.mxu0 0.0
    %2865 = vmatprep.subr.mxu0 0.0
    %2866 = vmatpush2.msra.mxu0 0.0
    %2867 = vmatprep.subr.mxu0 0.0
    %2868 = vmatpush2.msra.mxu0 0.0
    %2869 = vmatprep.subr.mxu0 0.0
    %2870 = vmatpush2.msra.mxu0 0.0
    %2871 = vmatprep.mubr.f32.mxu0 0.0
    %2872 = vmatmul.mubr.f32.gmra.mxu0 %v2805
    %v2873 = vpop.f32.mrf.mxu0
    %v2874 = vadd.f32 0.0, %v2873
    %v2875 = vpop.f32.mrf.mxu0
    %2876 = vdwg.mxu0
    %v2877 = vadd.f32 %v2801, %v2874
    %v2878 = vmul.f32 %v2877, %v840
    %v2879 = vtanh.pop %v2878
    %v2880 = vmul.f32 %v2879, %v840
    %v2881 = vadd.f32 %v2880, %v841
    %v2882 = vmul.f32 %v2881, %v2794
    %2884 = vrot.lane.b32.xlu0 %v2881, 64
    %v2885 = vpop.permute.xlu0 %2884
    %v2887 = vmul.f32 %v2881, %v2885
    %2889 = vrot.lane.b32.xlu0 %v2887, 32
    %v2890 = vpop.permute.xlu0 %2889
    %v2892 = vadd.f32 %v2882, %v2890
    %v2893 = vtanh.pop %v2892
    %2895 = vrot.lane.b32.xlu0 %v2893, 64
    %v2896 = vpop.permute.xlu0 %2895
    %v2898 = vmul.f32 %v2881, %v2896
    %v2899 = vld [vmem:[%s811] sm:$0x3]
    %2901 = vrot.lane.b32.xlu0 %v2898, 32
    %v2902 = vpop.permute.xlu0 %2901
    %v2903 = vsel %vm843, %v2902, 0
    %2905 = vmatprep.subr.mxu0 0.0
    %2906 = vmatpush1.msra.mxu0 0.0
    %2907 = vmatprep.subr.mxu0 0.0
    %2908 = vmatpush1.msra.mxu0 0.0
    %2909 = vmatprep.subr.mxu0 0.0
    %2910 = vmatpush1.msra.mxu0 0.0
    %2911 = vmatprep.subr.mxu0 0.0
    %2912 = vmatpush1.msra.mxu0 0.0
    %2913 = vmatprep.subr.mxu0 0.0
    %2914 = vmatpush1.msra.mxu0 0.0
    %2915 = vmatprep.subr.mxu0 0.0
    %2916 = vmatpush1.msra.mxu0 0.0
    %2917 = vmatprep.subr.mxu0 0.0
    %2918 = vmatpush1.msra.mxu0 0.0
    %2919 = vmatprep.subr.mxu0 0.0
    %2920 = vmatpush1.msra.mxu0 0.0
    %2921 = vmatprep.subr.mxu0 0.0
    %2922 = vmatpush1.msra.mxu0 0.0
    %2923 = vmatprep.subr.mxu0 0.0
    %2924 = vmatpush1.msra.mxu0 0.0
    %2925 = vmatprep.subr.mxu0 0.0
    %2926 = vmatpush1.msra.mxu0 0.0
    %2927 = vmatprep.subr.mxu0 0.0
    %2928 = vmatpush1.msra.mxu0 0.0
    %2929 = vmatprep.subr.mxu0 0.0
    %2930 = vmatpush1.msra.mxu0 %v834
    %2931 = vmatprep.subr.mxu0 0.0
    %2932 = vmatpush1.msra.mxu0 %v833
    %2933 = vmatprep.subr.mxu0 0.0
    %2934 = vmatpush1.msra.mxu0 %v832
    %2935 = vmatprep.subr.mxu0 0.0
    %2936 = vmatpush1.msra.mxu0 %v831
    %2937 = vmatprep.subr.mxu0 0.0
    %2938 = vmatpush2.msra.mxu0 0.0
    %2939 = vmatprep.subr.mxu0 0.0
    %2940 = vmatpush2.msra.mxu0 0.0
    %2941 = vmatprep.subr.mxu0 0.0
    %2942 = vmatpush2.msra.mxu0 0.0
    %2943 = vmatprep.subr.mxu0 0.0
    %2944 = vmatpush2.msra.mxu0 0.0
    %2945 = vmatprep.subr.mxu0 0.0
    %2946 = vmatpush2.msra.mxu0 0.0
    %2947 = vmatprep.subr.mxu0 0.0
    %2948 = vmatpush2.msra.mxu0 0.0
    %2949 = vmatprep.subr.mxu0 0.0
    %2950 = vmatpush2.msra.mxu0 0.0
    %2951 = vmatprep.subr.mxu0 0.0
    %2952 = vmatpush2.msra.mxu0 0.0
    %2953 = vmatprep.subr.mxu0 0.0
    %2954 = vmatpush2.msra.mxu0 0.0
    %2955 = vmatprep.subr.mxu0 0.0
    %2956 = vmatpush2.msra.mxu0 0.0
    %2957 = vmatprep.subr.mxu0 0.0
    %2958 = vmatpush2.msra.mxu0 0.0
    %2959 = vmatprep.subr.mxu0 0.0
    %2960 = vmatpush2.msra.mxu0 0.0
    %2961 = vmatprep.subr.mxu0 0.0
    %2962 = vmatpush2.msra.mxu0 0.0
    %2963 = vmatprep.subr.mxu0 0.0
    %2964 = vmatpush2.msra.mxu0 0.0
    %2965 = vmatprep.subr.mxu0 0.0
    %2966 = vmatpush2.msra.mxu0 0.0
    %2967 = vmatprep.subr.mxu0 0.0
    %2968 = vmatpush2.msra.mxu0 0.0
    %2969 = vmatprep.mubr.f32.mxu0 0.0
    %2970 = vmatmul.mubr.f32.gmra.mxu0 %v2903
    %v2971 = vpop.f32.mrf.mxu0
    %v2972 = vadd.f32 0.0, %v2971
    %v2973 = vpop.f32.mrf.mxu0
    %2974 = vdwg.mxu0
    %v2975 = vadd.f32 %v2899, %v2972
    %v2976 = vmul.f32 %v2975, %v840
    %v2977 = vtanh.pop %v2976
    %v2978 = vmul.f32 %v2977, %v840
    %v2979 = vadd.f32 %v2978, %v841
    %v2980 = vmul.f32 %v2979, %v2892
    %2982 = vrot.lane.b32.xlu0 %v2979, 64
    %v2983 = vpop.permute.xlu0 %2982
    %v2985 = vmul.f32 %v2979, %v2983
    %2987 = vrot.lane.b32.xlu0 %v2985, 32
    %v2988 = vpop.permute.xlu0 %2987
    %v2990 = vadd.f32 %v2980, %v2988
    %v2991 = vtanh.pop %v2990
    %2993 = vrot.lane.b32.xlu0 %v2991, 64
    %v2994 = vpop.permute.xlu0 %2993
    %v2996 = vmul.f32 %v2979, %v2994
    %v2997 = vld [vmem:[%s813] sm:$0x3]
    %2999 = vrot.lane.b32.xlu0 %v2996, 32
    %v3000 = vpop.permute.xlu0 %2999
    %v3001 = vsel %vm843, %v3000, 0
    %3003 = vmatprep.subr.mxu0 0.0
    %3004 = vmatpush1.msra.mxu0 0.0
    %3005 = vmatprep.subr.mxu0 0.0
    %3006 = vmatpush1.msra.mxu0 0.0
    %3007 = vmatprep.subr.mxu0 0.0
    %3008 = vmatpush1.msra.mxu0 0.0
    %3009 = vmatprep.subr.mxu0 0.0
    %3010 = vmatpush1.msra.mxu0 0.0
    %3011 = vmatprep.subr.mxu0 0.0
    %3012 = vmatpush1.msra.mxu0 0.0
    %3013 = vmatprep.subr.mxu0 0.0
    %3014 = vmatpush1.msra.mxu0 0.0
    %3015 = vmatprep.subr.mxu0 0.0
    %3016 = vmatpush1.msra.mxu0 0.0
    %3017 = vmatprep.subr.mxu0 0.0
    %3018 = vmatpush1.msra.mxu0 0.0
    %3019 = vmatprep.subr.mxu0 0.0
    %3020 = vmatpush1.msra.mxu0 0.0
    %3021 = vmatprep.subr.mxu0 0.0
    %3022 = vmatpush1.msra.mxu0 0.0
    %3023 = vmatprep.subr.mxu0 0.0
    %3024 = vmatpush1.msra.mxu0 0.0
    %3025 = vmatprep.subr.mxu0 0.0
    %3026 = vmatpush1.msra.mxu0 0.0
    %3027 = vmatprep.subr.mxu0 0.0
    %3028 = vmatpush1.msra.mxu0 %v834
    %3029 = vmatprep.subr.mxu0 0.0
    %3030 = vmatpush1.msra.mxu0 %v833
    %3031 = vmatprep.subr.mxu0 0.0
    %3032 = vmatpush1.msra.mxu0 %v832
    %3033 = vmatprep.subr.mxu0 0.0
    %3034 = vmatpush1.msra.mxu0 %v831
    %3035 = vmatprep.subr.mxu0 0.0
    %3036 = vmatpush2.msra.mxu0 0.0
    %3037 = vmatprep.subr.mxu0 0.0
    %3038 = vmatpush2.msra.mxu0 0.0
    %3039 = vmatprep.subr.mxu0 0.0
    %3040 = vmatpush2.msra.mxu0 0.0
    %3041 = vmatprep.subr.mxu0 0.0
    %3042 = vmatpush2.msra.mxu0 0.0
    %3043 = vmatprep.subr.mxu0 0.0
    %3044 = vmatpush2.msra.mxu0 0.0
    %3045 = vmatprep.subr.mxu0 0.0
    %3046 = vmatpush2.msra.mxu0 0.0
    %3047 = vmatprep.subr.mxu0 0.0
    %3048 = vmatpush2.msra.mxu0 0.0
    %3049 = vmatprep.subr.mxu0 0.0
    %3050 = vmatpush2.msra.mxu0 0.0
    %3051 = vmatprep.subr.mxu0 0.0
    %3052 = vmatpush2.msra.mxu0 0.0
    %3053 = vmatprep.subr.mxu0 0.0
    %3054 = vmatpush2.msra.mxu0 0.0
    %3055 = vmatprep.subr.mxu0 0.0
    %3056 = vmatpush2.msra.mxu0 0.0
    %3057 = vmatprep.subr.mxu0 0.0
    %3058 = vmatpush2.msra.mxu0 0.0
    %3059 = vmatprep.subr.mxu0 0.0
    %3060 = vmatpush2.msra.mxu0 0.0
    %3061 = vmatprep.subr.mxu0 0.0
    %3062 = vmatpush2.msra.mxu0 0.0
    %3063 = vmatprep.subr.mxu0 0.0
    %3064 = vmatpush2.msra.mxu0 0.0
    %3065 = vmatprep.subr.mxu0 0.0
    %3066 = vmatpush2.msra.mxu0 0.0
    %3067 = vmatprep.mubr.f32.mxu0 0.0
    %3068 = vmatmul.mubr.f32.gmra.mxu0 %v3001
    %v3069 = vpop.f32.mrf.mxu0
    %v3070 = vadd.f32 0.0, %v3069
    %v3071 = vpop.f32.mrf.mxu0
    %3072 = vdwg.mxu0
    %v3073 = vadd.f32 %v2997, %v3070
    %v3074 = vmul.f32 %v3073, %v840
    %v3075 = vtanh.pop %v3074
    %v3076 = vmul.f32 %v3075, %v840
    %v3077 = vadd.f32 %v3076, %v841
    %v3078 = vmul.f32 %v3077, %v2990
    %3080 = vrot.lane.b32.xlu0 %v3077, 64
    %v3081 = vpop.permute.xlu0 %3080
    %v3083 = vmul.f32 %v3077, %v3081
    %3085 = vrot.lane.b32.xlu0 %v3083, 32
    %v3086 = vpop.permute.xlu0 %3085
    %v3088 = vadd.f32 %v3078, %v3086
    %v3089 = vtanh.pop %v3088
    %3091 = vrot.lane.b32.xlu0 %v3089, 64
    %v3092 = vpop.permute.xlu0 %3091
    %v3094 = vmul.f32 %v3077, %v3092
    %v3095 = vld [vmem:[%s815] sm:$0x3]
    %3097 = vrot.lane.b32.xlu0 %v3094, 32
    %v3098 = vpop.permute.xlu0 %3097
    %v3099 = vsel %vm843, %v3098, 0
    %3101 = vmatprep.subr.mxu0 0.0
    %3102 = vmatpush1.msra.mxu0 0.0
    %3103 = vmatprep.subr.mxu0 0.0
    %3104 = vmatpush1.msra.mxu0 0.0
    %3105 = vmatprep.subr.mxu0 0.0
    %3106 = vmatpush1.msra.mxu0 0.0
    %3107 = vmatprep.subr.mxu0 0.0
    %3108 = vmatpush1.msra.mxu0 0.0
    %3109 = vmatprep.subr.mxu0 0.0
    %3110 = vmatpush1.msra.mxu0 0.0
    %3111 = vmatprep.subr.mxu0 0.0
    %3112 = vmatpush1.msra.mxu0 0.0
    %3113 = vmatprep.subr.mxu0 0.0
    %3114 = vmatpush1.msra.mxu0 0.0
    %3115 = vmatprep.subr.mxu0 0.0
    %3116 = vmatpush1.msra.mxu0 0.0
    %3117 = vmatprep.subr.mxu0 0.0
    %3118 = vmatpush1.msra.mxu0 0.0
    %3119 = vmatprep.subr.mxu0 0.0
    %3120 = vmatpush1.msra.mxu0 0.0
    %3121 = vmatprep.subr.mxu0 0.0
    %3122 = vmatpush1.msra.mxu0 0.0
    %3123 = vmatprep.subr.mxu0 0.0
    %3124 = vmatpush1.msra.mxu0 0.0
    %3125 = vmatprep.subr.mxu0 0.0
    %3126 = vmatpush1.msra.mxu0 %v834
    %3127 = vmatprep.subr.mxu0 0.0
    %3128 = vmatpush1.msra.mxu0 %v833
    %3129 = vmatprep.subr.mxu0 0.0
    %3130 = vmatpush1.msra.mxu0 %v832
    %3131 = vmatprep.subr.mxu0 0.0
    %3132 = vmatpush1.msra.mxu0 %v831
    %3133 = vmatprep.subr.mxu0 0.0
    %3134 = vmatpush2.msra.mxu0 0.0
    %3135 = vmatprep.subr.mxu0 0.0
    %3136 = vmatpush2.msra.mxu0 0.0
    %3137 = vmatprep.subr.mxu0 0.0
    %3138 = vmatpush2.msra.mxu0 0.0
    %3139 = vmatprep.subr.mxu0 0.0
    %3140 = vmatpush2.msra.mxu0 0.0
    %3141 = vmatprep.subr.mxu0 0.0
    %3142 = vmatpush2.msra.mxu0 0.0
    %3143 = vmatprep.subr.mxu0 0.0
    %3144 = vmatpush2.msra.mxu0 0.0
    %3145 = vmatprep.subr.mxu0 0.0
    %3146 = vmatpush2.msra.mxu0 0.0
    %3147 = vmatprep.subr.mxu0 0.0
    %3148 = vmatpush2.msra.mxu0 0.0
    %3149 = vmatprep.subr.mxu0 0.0
    %3150 = vmatpush2.msra.mxu0 0.0
    %3151 = vmatprep.subr.mxu0 0.0
    %3152 = vmatpush2.msra.mxu0 0.0
    %3153 = vmatprep.subr.mxu0 0.0
    %3154 = vmatpush2.msra.mxu0 0.0
    %3155 = vmatprep.subr.mxu0 0.0
    %3156 = vmatpush2.msra.mxu0 0.0
    %3157 = vmatprep.subr.mxu0 0.0
    %3158 = vmatpush2.msra.mxu0 0.0
    %3159 = vmatprep.subr.mxu0 0.0
    %3160 = vmatpush2.msra.mxu0 0.0
    %3161 = vmatprep.subr.mxu0 0.0
    %3162 = vmatpush2.msra.mxu0 0.0
    %3163 = vmatprep.subr.mxu0 0.0
    %3164 = vmatpush2.msra.mxu0 0.0
    %3165 = vmatprep.mubr.f32.mxu0 0.0
    %3166 = vmatmul.mubr.f32.gmra.mxu0 %v3099
    %v3167 = vpop.f32.mrf.mxu0
    %v3168 = vadd.f32 0.0, %v3167
    %v3169 = vpop.f32.mrf.mxu0
    %3170 = vdwg.mxu0
    %v3171 = vadd.f32 %v3095, %v3168
    %v3172 = vmul.f32 %v3171, %v840
    %v3173 = vtanh.pop %v3172
    %v3174 = vmul.f32 %v3173, %v840
    %v3175 = vadd.f32 %v3174, %v841
    %v3176 = vmul.f32 %v3175, %v3088
    %3178 = vrot.lane.b32.xlu0 %v3175, 64
    %v3179 = vpop.permute.xlu0 %3178
    %v3181 = vmul.f32 %v3175, %v3179
    %3183 = vrot.lane.b32.xlu0 %v3181, 32
    %v3184 = vpop.permute.xlu0 %3183
    %v3186 = vadd.f32 %v3176, %v3184
    %v3187 = vtanh.pop %v3186
    %3189 = vrot.lane.b32.xlu0 %v3187, 64
    %v3190 = vpop.permute.xlu0 %3189
    %v3192 = vmul.f32 %v3175, %v3190
    %v3193 = vld [vmem:[%s817] sm:$0x3]
    %3195 = vrot.lane.b32.xlu0 %v3192, 32
    %v3196 = vpop.permute.xlu0 %3195
    %v3197 = vsel %vm843, %v3196, 0
    %3199 = vmatprep.subr.mxu0 0.0
    %3200 = vmatpush1.msra.mxu0 0.0
    %3201 = vmatprep.subr.mxu0 0.0
    %3202 = vmatpush1.msra.mxu0 0.0
    %3203 = vmatprep.subr.mxu0 0.0
    %3204 = vmatpush1.msra.mxu0 0.0
    %3205 = vmatprep.subr.mxu0 0.0
    %3206 = vmatpush1.msra.mxu0 0.0
    %3207 = vmatprep.subr.mxu0 0.0
    %3208 = vmatpush1.msra.mxu0 0.0
    %3209 = vmatprep.subr.mxu0 0.0
    %3210 = vmatpush1.msra.mxu0 0.0
    %3211 = vmatprep.subr.mxu0 0.0
    %3212 = vmatpush1.msra.mxu0 0.0
    %3213 = vmatprep.subr.mxu0 0.0
    %3214 = vmatpush1.msra.mxu0 0.0
    %3215 = vmatprep.subr.mxu0 0.0
    %3216 = vmatpush1.msra.mxu0 0.0
    %3217 = vmatprep.subr.mxu0 0.0
    %3218 = vmatpush1.msra.mxu0 0.0
    %3219 = vmatprep.subr.mxu0 0.0
    %3220 = vmatpush1.msra.mxu0 0.0
    %3221 = vmatprep.subr.mxu0 0.0
    %3222 = vmatpush1.msra.mxu0 0.0
    %3223 = vmatprep.subr.mxu0 0.0
    %3224 = vmatpush1.msra.mxu0 %v834
    %3225 = vmatprep.subr.mxu0 0.0
    %3226 = vmatpush1.msra.mxu0 %v833
    %3227 = vmatprep.subr.mxu0 0.0
    %3228 = vmatpush1.msra.mxu0 %v832
    %3229 = vmatprep.subr.mxu0 0.0
    %3230 = vmatpush1.msra.mxu0 %v831
    %3231 = vmatprep.subr.mxu0 0.0
    %3232 = vmatpush2.msra.mxu0 0.0
    %3233 = vmatprep.subr.mxu0 0.0
    %3234 = vmatpush2.msra.mxu0 0.0
    %3235 = vmatprep.subr.mxu0 0.0
    %3236 = vmatpush2.msra.mxu0 0.0
    %3237 = vmatprep.subr.mxu0 0.0
    %3238 = vmatpush2.msra.mxu0 0.0
    %3239 = vmatprep.subr.mxu0 0.0
    %3240 = vmatpush2.msra.mxu0 0.0
    %3241 = vmatprep.subr.mxu0 0.0
    %3242 = vmatpush2.msra.mxu0 0.0
    %3243 = vmatprep.subr.mxu0 0.0
    %3244 = vmatpush2.msra.mxu0 0.0
    %3245 = vmatprep.subr.mxu0 0.0
    %3246 = vmatpush2.msra.mxu0 0.0
    %3247 = vmatprep.subr.mxu0 0.0
    %3248 = vmatpush2.msra.mxu0 0.0
    %3249 = vmatprep.subr.mxu0 0.0
    %3250 = vmatpush2.msra.mxu0 0.0
    %3251 = vmatprep.subr.mxu0 0.0
    %3252 = vmatpush2.msra.mxu0 0.0
    %3253 = vmatprep.subr.mxu0 0.0
    %3254 = vmatpush2.msra.mxu0 0.0
    %3255 = vmatprep.subr.mxu0 0.0
    %3256 = vmatpush2.msra.mxu0 0.0
    %3257 = vmatprep.subr.mxu0 0.0
    %3258 = vmatpush2.msra.mxu0 0.0
    %3259 = vmatprep.subr.mxu0 0.0
    %3260 = vmatpush2.msra.mxu0 0.0
    %3261 = vmatprep.subr.mxu0 0.0
    %3262 = vmatpush2.msra.mxu0 0.0
    %3263 = vmatprep.mubr.f32.mxu0 0.0
    %3264 = vmatmul.mubr.f32.gmra.mxu0 %v3197
    %v3265 = vpop.f32.mrf.mxu0
    %v3266 = vadd.f32 0.0, %v3265
    %v3267 = vpop.f32.mrf.mxu0
    %3268 = vdwg.mxu0
    %v3269 = vadd.f32 %v3193, %v3266
    %v3270 = vmul.f32 %v3269, %v840
    %v3271 = vtanh.pop %v3270
    %v3272 = vmul.f32 %v3271, %v840
    %v3273 = vadd.f32 %v3272, %v841
    %v3274 = vmul.f32 %v3273, %v3186
    %3276 = vrot.lane.b32.xlu0 %v3273, 64
    %v3277 = vpop.permute.xlu0 %3276
    %v3279 = vmul.f32 %v3273, %v3277
    %3281 = vrot.lane.b32.xlu0 %v3279, 32
    %v3282 = vpop.permute.xlu0 %3281
    %v3284 = vadd.f32 %v3274, %v3282
    %v3285 = vtanh.pop %v3284
    %3287 = vrot.lane.b32.xlu0 %v3285, 64
    %v3288 = vpop.permute.xlu0 %3287
    %v3290 = vmul.f32 %v3273, %v3288
    %v3291 = vld [vmem:[%s819] sm:$0x3]
    %3293 = vrot.lane.b32.xlu0 %v3290, 32
    %v3294 = vpop.permute.xlu0 %3293
    %v3295 = vsel %vm843, %v3294, 0
    %3297 = vmatprep.subr.mxu0 0.0
    %3298 = vmatpush1.msra.mxu0 0.0
    %3299 = vmatprep.subr.mxu0 0.0
    %3300 = vmatpush1.msra.mxu0 0.0
    %3301 = vmatprep.subr.mxu0 0.0
    %3302 = vmatpush1.msra.mxu0 0.0
    %3303 = vmatprep.subr.mxu0 0.0
    %3304 = vmatpush1.msra.mxu0 0.0
    %3305 = vmatprep.subr.mxu0 0.0
    %3306 = vmatpush1.msra.mxu0 0.0
    %3307 = vmatprep.subr.mxu0 0.0
    %3308 = vmatpush1.msra.mxu0 0.0
    %3309 = vmatprep.subr.mxu0 0.0
    %3310 = vmatpush1.msra.mxu0 0.0
    %3311 = vmatprep.subr.mxu0 0.0
    %3312 = vmatpush1.msra.mxu0 0.0
    %3313 = vmatprep.subr.mxu0 0.0
    %3314 = vmatpush1.msra.mxu0 0.0
    %3315 = vmatprep.subr.mxu0 0.0
    %3316 = vmatpush1.msra.mxu0 0.0
    %3317 = vmatprep.subr.mxu0 0.0
    %3318 = vmatpush1.msra.mxu0 0.0
    %3319 = vmatprep.subr.mxu0 0.0
    %3320 = vmatpush1.msra.mxu0 0.0
    %3321 = vmatprep.subr.mxu0 0.0
    %3322 = vmatpush1.msra.mxu0 %v834
    %3323 = vmatprep.subr.mxu0 0.0
    %3324 = vmatpush1.msra.mxu0 %v833
    %3325 = vmatprep.subr.mxu0 0.0
    %3326 = vmatpush1.msra.mxu0 %v832
    %3327 = vmatprep.subr.mxu0 0.0
    %3328 = vmatpush1.msra.mxu0 %v831
    %3329 = vmatprep.subr.mxu0 0.0
    %3330 = vmatpush2.msra.mxu0 0.0
    %3331 = vmatprep.subr.mxu0 0.0
    %3332 = vmatpush2.msra.mxu0 0.0
    %3333 = vmatprep.subr.mxu0 0.0
    %3334 = vmatpush2.msra.mxu0 0.0
    %3335 = vmatprep.subr.mxu0 0.0
    %3336 = vmatpush2.msra.mxu0 0.0
    %3337 = vmatprep.subr.mxu0 0.0
    %3338 = vmatpush2.msra.mxu0 0.0
    %3339 = vmatprep.subr.mxu0 0.0
    %3340 = vmatpush2.msra.mxu0 0.0
    %3341 = vmatprep.subr.mxu0 0.0
    %3342 = vmatpush2.msra.mxu0 0.0
    %3343 = vmatprep.subr.mxu0 0.0
    %3344 = vmatpush2.msra.mxu0 0.0
    %3345 = vmatprep.subr.mxu0 0.0
    %3346 = vmatpush2.msra.mxu0 0.0
    %3347 = vmatprep.subr.mxu0 0.0
    %3348 = vmatpush2.msra.mxu0 0.0
    %3349 = vmatprep.subr.mxu0 0.0
    %3350 = vmatpush2.msra.mxu0 0.0
    %3351 = vmatprep.subr.mxu0 0.0
    %3352 = vmatpush2.msra.mxu0 0.0
    %3353 = vmatprep.subr.mxu0 0.0
    %3354 = vmatpush2.msra.mxu0 0.0
    %3355 = vmatprep.subr.mxu0 0.0
    %3356 = vmatpush2.msra.mxu0 0.0
    %3357 = vmatprep.subr.mxu0 0.0
    %3358 = vmatpush2.msra.mxu0 0.0
    %3359 = vmatprep.subr.mxu0 0.0
    %3360 = vmatpush2.msra.mxu0 0.0
    %3361 = vmatprep.mubr.f32.mxu0 0.0
    %3362 = vmatmul.mubr.f32.gmra.mxu0 %v3295
    %v3363 = vpop.f32.mrf.mxu0
    %v3364 = vadd.f32 0.0, %v3363
    %v3365 = vpop.f32.mrf.mxu0
    %3366 = vdwg.mxu0
    %v3367 = vadd.f32 %v3291, %v3364
    %v3368 = vmul.f32 %v3367, %v840
    %v3369 = vtanh.pop %v3368
    %v3370 = vmul.f32 %v3369, %v840
    %v3371 = vadd.f32 %v3370, %v841
    %v3372 = vmul.f32 %v3371, %v3284
    %3374 = vrot.lane.b32.xlu0 %v3371, 64
    %v3375 = vpop.permute.xlu0 %3374
    %v3377 = vmul.f32 %v3371, %v3375
    %3379 = vrot.lane.b32.xlu0 %v3377, 32
    %v3380 = vpop.permute.xlu0 %3379
    %v3382 = vadd.f32 %v3372, %v3380
    %v3383 = vtanh.pop %v3382
    %3385 = vrot.lane.b32.xlu0 %v3383, 64
    %v3386 = vpop.permute.xlu0 %3385
    %v3388 = vmul.f32 %v3371, %v3386
    %v3389 = vld [vmem:[%s821] sm:$0x3]
    %3391 = vrot.lane.b32.xlu0 %v3388, 32
    %v3392 = vpop.permute.xlu0 %3391
    %v3393 = vsel %vm843, %v3392, 0
    %3395 = vmatprep.subr.mxu0 0.0
    %3396 = vmatpush1.msra.mxu0 0.0
    %3397 = vmatprep.subr.mxu0 0.0
    %3398 = vmatpush1.msra.mxu0 0.0
    %3399 = vmatprep.subr.mxu0 0.0
    %3400 = vmatpush1.msra.mxu0 0.0
    %3401 = vmatprep.subr.mxu0 0.0
    %3402 = vmatpush1.msra.mxu0 0.0
    %3403 = vmatprep.subr.mxu0 0.0
    %3404 = vmatpush1.msra.mxu0 0.0
    %3405 = vmatprep.subr.mxu0 0.0
    %3406 = vmatpush1.msra.mxu0 0.0
    %3407 = vmatprep.subr.mxu0 0.0
    %3408 = vmatpush1.msra.mxu0 0.0
    %3409 = vmatprep.subr.mxu0 0.0
    %3410 = vmatpush1.msra.mxu0 0.0
    %3411 = vmatprep.subr.mxu0 0.0
    %3412 = vmatpush1.msra.mxu0 0.0
    %3413 = vmatprep.subr.mxu0 0.0
    %3414 = vmatpush1.msra.mxu0 0.0
    %3415 = vmatprep.subr.mxu0 0.0
    %3416 = vmatpush1.msra.mxu0 0.0
    %3417 = vmatprep.subr.mxu0 0.0
    %3418 = vmatpush1.msra.mxu0 0.0
    %3419 = vmatprep.subr.mxu0 0.0
    %3420 = vmatpush1.msra.mxu0 %v834
    %3421 = vmatprep.subr.mxu0 0.0
    %3422 = vmatpush1.msra.mxu0 %v833
    %3423 = vmatprep.subr.mxu0 0.0
    %3424 = vmatpush1.msra.mxu0 %v832
    %3425 = vmatprep.subr.mxu0 0.0
    %3426 = vmatpush1.msra.mxu0 %v831
    %3427 = vmatprep.subr.mxu0 0.0
    %3428 = vmatpush2.msra.mxu0 0.0
    %3429 = vmatprep.subr.mxu0 0.0
    %3430 = vmatpush2.msra.mxu0 0.0
    %3431 = vmatprep.subr.mxu0 0.0
    %3432 = vmatpush2.msra.mxu0 0.0
    %3433 = vmatprep.subr.mxu0 0.0
    %3434 = vmatpush2.msra.mxu0 0.0
    %3435 = vmatprep.subr.mxu0 0.0
    %3436 = vmatpush2.msra.mxu0 0.0
    %3437 = vmatprep.subr.mxu0 0.0
    %3438 = vmatpush2.msra.mxu0 0.0
    %3439 = vmatprep.subr.mxu0 0.0
    %3440 = vmatpush2.msra.mxu0 0.0
    %3441 = vmatprep.subr.mxu0 0.0
    %3442 = vmatpush2.msra.mxu0 0.0
    %3443 = vmatprep.subr.mxu0 0.0
    %3444 = vmatpush2.msra.mxu0 0.0
    %3445 = vmatprep.subr.mxu0 0.0
    %3446 = vmatpush2.msra.mxu0 0.0
    %3447 = vmatprep.subr.mxu0 0.0
    %3448 = vmatpush2.msra.mxu0 0.0
    %3449 = vmatprep.subr.mxu0 0.0
    %3450 = vmatpush2.msra.mxu0 0.0
    %3451 = vmatprep.subr.mxu0 0.0
    %3452 = vmatpush2.msra.mxu0 0.0
    %3453 = vmatprep.subr.mxu0 0.0
    %3454 = vmatpush2.msra.mxu0 0.0
    %3455 = vmatprep.subr.mxu0 0.0
    %3456 = vmatpush2.msra.mxu0 0.0
    %3457 = vmatprep.subr.mxu0 0.0
    %3458 = vmatpush2.msra.mxu0 0.0
    %3459 = vmatprep.mubr.f32.mxu0 0.0
    %3460 = vmatmul.mubr.f32.gmra.mxu0 %v3393
    %v3461 = vpop.f32.mrf.mxu0
    %v3462 = vadd.f32 0.0, %v3461
    %v3463 = vpop.f32.mrf.mxu0
    %3464 = vdwg.mxu0
    %v3465 = vadd.f32 %v3389, %v3462
    %v3466 = vmul.f32 %v3465, %v840
    %v3467 = vtanh.pop %v3466
    %v3468 = vmul.f32 %v3467, %v840
    %v3469 = vadd.f32 %v3468, %v841
    %v3470 = vmul.f32 %v3469, %v3382
    %3472 = vrot.lane.b32.xlu0 %v3469, 64
    %v3473 = vpop.permute.xlu0 %3472
    %v3475 = vmul.f32 %v3469, %v3473
    %3477 = vrot.lane.b32.xlu0 %v3475, 32
    %v3478 = vpop.permute.xlu0 %3477
    %v3480 = vadd.f32 %v3470, %v3478
    %v3481 = vtanh.pop %v3480
    %3483 = vrot.lane.b32.xlu0 %v3481, 64
    %v3484 = vpop.permute.xlu0 %3483
    %v3486 = vmul.f32 %v3469, %v3484
    %v3487 = vld [vmem:[%s823] sm:$0x3]
    %3489 = vrot.lane.b32.xlu0 %v3486, 32
    %v3490 = vpop.permute.xlu0 %3489
    %v3491 = vsel %vm843, %v3490, 0
    %3493 = vmatprep.subr.mxu0 0.0
    %3494 = vmatpush1.msra.mxu0 0.0
    %3495 = vmatprep.subr.mxu0 0.0
    %3496 = vmatpush1.msra.mxu0 0.0
    %3497 = vmatprep.subr.mxu0 0.0
    %3498 = vmatpush1.msra.mxu0 0.0
    %3499 = vmatprep.subr.mxu0 0.0
    %3500 = vmatpush1.msra.mxu0 0.0
    %3501 = vmatprep.subr.mxu0 0.0
    %3502 = vmatpush1.msra.mxu0 0.0
    %3503 = vmatprep.subr.mxu0 0.0
    %3504 = vmatpush1.msra.mxu0 0.0
    %3505 = vmatprep.subr.mxu0 0.0
    %3506 = vmatpush1.msra.mxu0 0.0
    %3507 = vmatprep.subr.mxu0 0.0
    %3508 = vmatpush1.msra.mxu0 0.0
    %3509 = vmatprep.subr.mxu0 0.0
    %3510 = vmatpush1.msra.mxu0 0.0
    %3511 = vmatprep.subr.mxu0 0.0
    %3512 = vmatpush1.msra.mxu0 0.0
    %3513 = vmatprep.subr.mxu0 0.0
    %3514 = vmatpush1.msra.mxu0 0.0
    %3515 = vmatprep.subr.mxu0 0.0
    %3516 = vmatpush1.msra.mxu0 0.0
    %3517 = vmatprep.subr.mxu0 0.0
    %3518 = vmatpush1.msra.mxu0 %v834
    %3519 = vmatprep.subr.mxu0 0.0
    %3520 = vmatpush1.msra.mxu0 %v833
    %3521 = vmatprep.subr.mxu0 0.0
    %3522 = vmatpush1.msra.mxu0 %v832
    %3523 = vmatprep.subr.mxu0 0.0
    %3524 = vmatpush1.msra.mxu0 %v831
    %3525 = vmatprep.subr.mxu0 0.0
    %3526 = vmatpush2.msra.mxu0 0.0
    %3527 = vmatprep.subr.mxu0 0.0
    %3528 = vmatpush2.msra.mxu0 0.0
    %3529 = vmatprep.subr.mxu0 0.0
    %3530 = vmatpush2.msra.mxu0 0.0
    %3531 = vmatprep.subr.mxu0 0.0
    %3532 = vmatpush2.msra.mxu0 0.0
    %3533 = vmatprep.subr.mxu0 0.0
    %3534 = vmatpush2.msra.mxu0 0.0
    %3535 = vmatprep.subr.mxu0 0.0
    %3536 = vmatpush2.msra.mxu0 0.0
    %3537 = vmatprep.subr.mxu0 0.0
    %3538 = vmatpush2.msra.mxu0 0.0
    %3539 = vmatprep.subr.mxu0 0.0
    %3540 = vmatpush2.msra.mxu0 0.0
    %3541 = vmatprep.subr.mxu0 0.0
    %3542 = vmatpush2.msra.mxu0 0.0
    %3543 = vmatprep.subr.mxu0 0.0
    %3544 = vmatpush2.msra.mxu0 0.0
    %3545 = vmatprep.subr.mxu0 0.0
    %3546 = vmatpush2.msra.mxu0 0.0
    %3547 = vmatprep.subr.mxu0 0.0
    %3548 = vmatpush2.msra.mxu0 0.0
    %3549 = vmatprep.subr.mxu0 0.0
    %3550 = vmatpush2.msra.mxu0 0.0
    %3551 = vmatprep.subr.mxu0 0.0
    %3552 = vmatpush2.msra.mxu0 0.0
    %3553 = vmatprep.subr.mxu0 0.0
    %3554 = vmatpush2.msra.mxu0 0.0
    %3555 = vmatprep.subr.mxu0 0.0
    %3556 = vmatpush2.msra.mxu0 0.0
    %3557 = vmatprep.mubr.f32.mxu0 0.0
    %3558 = vmatmul.mubr.f32.gmra.mxu0 %v3491
    %v3559 = vpop.f32.mrf.mxu0
    %v3560 = vadd.f32 0.0, %v3559
    %v3561 = vpop.f32.mrf.mxu0
    %3562 = vdwg.mxu0
    %v3563 = vadd.f32 %v3487, %v3560
    %v3564 = vmul.f32 %v3563, %v840
    %v3565 = vtanh.pop %v3564
    %v3566 = vmul.f32 %v3565, %v840
    %v3567 = vadd.f32 %v3566, %v841
    %v3568 = vmul.f32 %v3567, %v3480
    %3570 = vrot.lane.b32.xlu0 %v3567, 64
    %v3571 = vpop.permute.xlu0 %3570
    %v3573 = vmul.f32 %v3567, %v3571
    %3575 = vrot.lane.b32.xlu0 %v3573, 32
    %v3576 = vpop.permute.xlu0 %3575
    %v3578 = vadd.f32 %v3568, %v3576
    %v3579 = vtanh.pop %v3578
    %3581 = vrot.lane.b32.xlu0 %v3579, 64
    %v3582 = vpop.permute.xlu0 %3581
    %v3584 = vmul.f32 %v3567, %v3582
    %v3585 = vld [vmem:[%s825] sm:$0x3]
    %3587 = vrot.lane.b32.xlu0 %v3584, 32
    %v3588 = vpop.permute.xlu0 %3587
    %v3589 = vsel %vm843, %v3588, 0
    %3591 = vmatprep.subr.mxu0 0.0
    %3592 = vmatpush1.msra.mxu0 0.0
    %3593 = vmatprep.subr.mxu0 0.0
    %3594 = vmatpush1.msra.mxu0 0.0
    %3595 = vmatprep.subr.mxu0 0.0
    %3596 = vmatpush1.msra.mxu0 0.0
    %3597 = vmatprep.subr.mxu0 0.0
    %3598 = vmatpush1.msra.mxu0 0.0
    %3599 = vmatprep.subr.mxu0 0.0
    %3600 = vmatpush1.msra.mxu0 0.0
    %3601 = vmatprep.subr.mxu0 0.0
    %3602 = vmatpush1.msra.mxu0 0.0
    %3603 = vmatprep.subr.mxu0 0.0
    %3604 = vmatpush1.msra.mxu0 0.0
    %3605 = vmatprep.subr.mxu0 0.0
    %3606 = vmatpush1.msra.mxu0 0.0
    %3607 = vmatprep.subr.mxu0 0.0
    %3608 = vmatpush1.msra.mxu0 0.0
    %3609 = vmatprep.subr.mxu0 0.0
    %3610 = vmatpush1.msra.mxu0 0.0
    %3611 = vmatprep.subr.mxu0 0.0
    %3612 = vmatpush1.msra.mxu0 0.0
    %3613 = vmatprep.subr.mxu0 0.0
    %3614 = vmatpush1.msra.mxu0 0.0
    %3615 = vmatprep.subr.mxu0 0.0
    %3616 = vmatpush1.msra.mxu0 %v834
    %3617 = vmatprep.subr.mxu0 0.0
    %3618 = vmatpush1.msra.mxu0 %v833
    %3619 = vmatprep.subr.mxu0 0.0
    %3620 = vmatpush1.msra.mxu0 %v832
    %3621 = vmatprep.subr.mxu0 0.0
    %3622 = vmatpush1.msra.mxu0 %v831
    %3623 = vmatprep.subr.mxu0 0.0
    %3624 = vmatpush2.msra.mxu0 0.0
    %3625 = vmatprep.subr.mxu0 0.0
    %3626 = vmatpush2.msra.mxu0 0.0
    %3627 = vmatprep.subr.mxu0 0.0
    %3628 = vmatpush2.msra.mxu0 0.0
    %3629 = vmatprep.subr.mxu0 0.0
    %3630 = vmatpush2.msra.mxu0 0.0
    %3631 = vmatprep.subr.mxu0 0.0
    %3632 = vmatpush2.msra.mxu0 0.0
    %3633 = vmatprep.subr.mxu0 0.0
    %3634 = vmatpush2.msra.mxu0 0.0
    %3635 = vmatprep.subr.mxu0 0.0
    %3636 = vmatpush2.msra.mxu0 0.0
    %3637 = vmatprep.subr.mxu0 0.0
    %3638 = vmatpush2.msra.mxu0 0.0
    %3639 = vmatprep.subr.mxu0 0.0
    %3640 = vmatpush2.msra.mxu0 0.0
    %3641 = vmatprep.subr.mxu0 0.0
    %3642 = vmatpush2.msra.mxu0 0.0
    %3643 = vmatprep.subr.mxu0 0.0
    %3644 = vmatpush2.msra.mxu0 0.0
    %3645 = vmatprep.subr.mxu0 0.0
    %3646 = vmatpush2.msra.mxu0 0.0
    %3647 = vmatprep.subr.mxu0 0.0
    %3648 = vmatpush2.msra.mxu0 0.0
    %3649 = vmatprep.subr.mxu0 0.0
    %3650 = vmatpush2.msra.mxu0 0.0
    %3651 = vmatprep.subr.mxu0 0.0
    %3652 = vmatpush2.msra.mxu0 0.0
    %3653 = vmatprep.subr.mxu0 0.0
    %3654 = vmatpush2.msra.mxu0 0.0
    %3655 = vmatprep.mubr.f32.mxu0 0.0
    %3656 = vmatmul.mubr.f32.gmra.mxu0 %v3589
    %v3657 = vpop.f32.mrf.mxu0
    %v3658 = vadd.f32 0.0, %v3657
    %v3659 = vpop.f32.mrf.mxu0
    %3660 = vdwg.mxu0
    %v3661 = vadd.f32 %v3585, %v3658
    %v3662 = vmul.f32 %v3661, %v840
    %v3663 = vtanh.pop %v3662
    %v3664 = vmul.f32 %v3663, %v840
    %v3665 = vadd.f32 %v3664, %v841
    %v3666 = vmul.f32 %v3665, %v3578
    %3668 = vrot.lane.b32.xlu0 %v3665, 64
    %v3669 = vpop.permute.xlu0 %3668
    %v3671 = vmul.f32 %v3665, %v3669
    %3673 = vrot.lane.b32.xlu0 %v3671, 32
    %v3674 = vpop.permute.xlu0 %3673
    %v3676 = vadd.f32 %v3666, %v3674
    %v3677 = vtanh.pop %v3676
    %3679 = vrot.lane.b32.xlu0 %v3677, 64
    %v3680 = vpop.permute.xlu0 %3679
    %v3682 = vmul.f32 %v3665, %v3680
    %v3683 = vld [vmem:[%s827] sm:$0x3]
    %3685 = vrot.lane.b32.xlu0 %v3682, 32
    %v3686 = vpop.permute.xlu0 %3685
    %v3687 = vsel %vm843, %v3686, 0
    %3689 = vmatprep.subr.mxu0 0.0
    %3690 = vmatpush1.msra.mxu0 0.0
    %3691 = vmatprep.subr.mxu0 0.0
    %3692 = vmatpush1.msra.mxu0 0.0
    %3693 = vmatprep.subr.mxu0 0.0
    %3694 = vmatpush1.msra.mxu0 0.0
    %3695 = vmatprep.subr.mxu0 0.0
    %3696 = vmatpush1.msra.mxu0 0.0
    %3697 = vmatprep.subr.mxu0 0.0
    %3698 = vmatpush1.msra.mxu0 0.0
    %3699 = vmatprep.subr.mxu0 0.0
    %3700 = vmatpush1.msra.mxu0 0.0
    %3701 = vmatprep.subr.mxu0 0.0
    %3702 = vmatpush1.msra.mxu0 0.0
    %3703 = vmatprep.subr.mxu0 0.0
    %3704 = vmatpush1.msra.mxu0 0.0
    %3705 = vmatprep.subr.mxu0 0.0
    %3706 = vmatpush1.msra.mxu0 0.0
    %3707 = vmatprep.subr.mxu0 0.0
    %3708 = vmatpush1.msra.mxu0 0.0
    %3709 = vmatprep.subr.mxu0 0.0
    %3710 = vmatpush1.msra.mxu0 0.0
    %3711 = vmatprep.subr.mxu0 0.0
    %3712 = vmatpush1.msra.mxu0 0.0
    %3713 = vmatprep.subr.mxu0 0.0
    %3714 = vmatpush1.msra.mxu0 %v834
    %3715 = vmatprep.subr.mxu0 0.0
    %3716 = vmatpush1.msra.mxu0 %v833
    %3717 = vmatprep.subr.mxu0 0.0
    %3718 = vmatpush1.msra.mxu0 %v832
    %3719 = vmatprep.subr.mxu0 0.0
    %3720 = vmatpush1.msra.mxu0 %v831
    %3721 = vmatprep.subr.mxu0 0.0
    %3722 = vmatpush2.msra.mxu0 0.0
    %3723 = vmatprep.subr.mxu0 0.0
    %3724 = vmatpush2.msra.mxu0 0.0
    %3725 = vmatprep.subr.mxu0 0.0
    %3726 = vmatpush2.msra.mxu0 0.0
    %3727 = vmatprep.subr.mxu0 0.0
    %3728 = vmatpush2.msra.mxu0 0.0
    %3729 = vmatprep.subr.mxu0 0.0
    %3730 = vmatpush2.msra.mxu0 0.0
    %3731 = vmatprep.subr.mxu0 0.0
    %3732 = vmatpush2.msra.mxu0 0.0
    %3733 = vmatprep.subr.mxu0 0.0
    %3734 = vmatpush2.msra.mxu0 0.0
    %3735 = vmatprep.subr.mxu0 0.0
    %3736 = vmatpush2.msra.mxu0 0.0
    %3737 = vmatprep.subr.mxu0 0.0
    %3738 = vmatpush2.msra.mxu0 0.0
    %3739 = vmatprep.subr.mxu0 0.0
    %3740 = vmatpush2.msra.mxu0 0.0
    %3741 = vmatprep.subr.mxu0 0.0
    %3742 = vmatpush2.msra.mxu0 0.0
    %3743 = vmatprep.subr.mxu0 0.0
    %3744 = vmatpush2.msra.mxu0 0.0
    %3745 = vmatprep.subr.mxu0 0.0
    %3746 = vmatpush2.msra.mxu0 0.0
    %3747 = vmatprep.subr.mxu0 0.0
    %3748 = vmatpush2.msra.mxu0 0.0
    %3749 = vmatprep.subr.mxu0 0.0
    %3750 = vmatpush2.msra.mxu0 0.0
    %3751 = vmatprep.subr.mxu0 0.0
    %3752 = vmatpush2.msra.mxu0 0.0
    %3753 = vmatprep.mubr.f32.mxu0 0.0
    %3754 = vmatmul.mubr.f32.gmra.mxu0 %v3687
    %v3755 = vpop.f32.mrf.mxu0
    %v3756 = vadd.f32 0.0, %v3755
    %v3757 = vpop.f32.mrf.mxu0
    %3758 = vdwg.mxu0
    %v3759 = vadd.f32 %v3683, %v3756
    %v3760 = vmul.f32 %v3759, %v840
    %v3761 = vtanh.pop %v3760
    %v3762 = vmul.f32 %v3761, %v840
    %v3763 = vadd.f32 %v3762, %v841
    %v3764 = vmul.f32 %v3763, %v3676
    %3766 = vrot.lane.b32.xlu0 %v3763, 64
    %v3767 = vpop.permute.xlu0 %3766
    %v3769 = vmul.f32 %v3763, %v3767
    %3771 = vrot.lane.b32.xlu0 %v3769, 32
    %v3772 = vpop.permute.xlu0 %3771
    %v3774 = vadd.f32 %v3764, %v3772
    %v3775 = vtanh.pop %v3774
    %3777 = vrot.lane.b32.xlu0 %v3775, 64
    %v3778 = vpop.permute.xlu0 %3777
    %v3780 = vmul.f32 %v3763, %v3778
    %v3781 = vld [vmem:[%s829] sm:$0x3]
    %3783 = vrot.lane.b32.xlu0 %v3780, 32
    %v3784 = vpop.permute.xlu0 %3783
    %v3785 = vsel %vm843, %v3784, 0
    %3787 = vmatprep.subr.mxu0 0.0
    %3788 = vmatpush1.msra.mxu0 0.0
    %3789 = vmatprep.subr.mxu0 0.0
    %3790 = vmatpush1.msra.mxu0 0.0
    %3791 = vmatprep.subr.mxu0 0.0
    %3792 = vmatpush1.msra.mxu0 0.0
    %3793 = vmatprep.subr.mxu0 0.0
    %3794 = vmatpush1.msra.mxu0 0.0
    %3795 = vmatprep.subr.mxu0 0.0
    %3796 = vmatpush1.msra.mxu0 0.0
    %3797 = vmatprep.subr.mxu0 0.0
    %3798 = vmatpush1.msra.mxu0 0.0
    %3799 = vmatprep.subr.mxu0 0.0
    %3800 = vmatpush1.msra.mxu0 0.0
    %3801 = vmatprep.subr.mxu0 0.0
    %3802 = vmatpush1.msra.mxu0 0.0
    %3803 = vmatprep.subr.mxu0 0.0
    %3804 = vmatpush1.msra.mxu0 0.0
    %3805 = vmatprep.subr.mxu0 0.0
    %3806 = vmatpush1.msra.mxu0 0.0
    %3807 = vmatprep.subr.mxu0 0.0
    %3808 = vmatpush1.msra.mxu0 0.0
    %3809 = vmatprep.subr.mxu0 0.0
    %3810 = vmatpush1.msra.mxu0 0.0
    %3811 = vmatprep.subr.mxu0 0.0
    %3812 = vmatpush1.msra.mxu0 %v834
    %3813 = vmatprep.subr.mxu0 0.0
    %3814 = vmatpush1.msra.mxu0 %v833
    %3815 = vmatprep.subr.mxu0 0.0
    %3816 = vmatpush1.msra.mxu0 %v832
    %3817 = vmatprep.subr.mxu0 0.0
    %3818 = vmatpush1.msra.mxu0 %v831
    %3819 = vmatprep.subr.mxu0 0.0
    %3820 = vmatpush2.msra.mxu0 0.0
    %3821 = vmatprep.subr.mxu0 0.0
    %3822 = vmatpush2.msra.mxu0 0.0
    %3823 = vmatprep.subr.mxu0 0.0
    %3824 = vmatpush2.msra.mxu0 0.0
    %3825 = vmatprep.subr.mxu0 0.0
    %3826 = vmatpush2.msra.mxu0 0.0
    %3827 = vmatprep.subr.mxu0 0.0
    %3828 = vmatpush2.msra.mxu0 0.0
    %3829 = vmatprep.subr.mxu0 0.0
    %3830 = vmatpush2.msra.mxu0 0.0
    %3831 = vmatprep.subr.mxu0 0.0
    %3832 = vmatpush2.msra.mxu0 0.0
    %3833 = vmatprep.subr.mxu0 0.0
    %3834 = vmatpush2.msra.mxu0 0.0
    %3835 = vmatprep.subr.mxu0 0.0
    %3836 = vmatpush2.msra.mxu0 0.0
    %3837 = vmatprep.subr.mxu0 0.0
    %3838 = vmatpush2.msra.mxu0 0.0
    %3839 = vmatprep.subr.mxu0 0.0
    %3840 = vmatpush2.msra.mxu0 0.0
    %3841 = vmatprep.subr.mxu0 0.0
    %3842 = vmatpush2.msra.mxu0 0.0
    %3843 = vmatprep.subr.mxu0 0.0
    %3844 = vmatpush2.msra.mxu0 0.0
    %3845 = vmatprep.subr.mxu0 0.0
    %3846 = vmatpush2.msra.mxu0 0.0
    %3847 = vmatprep.subr.mxu0 0.0
    %3848 = vmatpush2.msra.mxu0 0.0
    %3849 = vmatprep.subr.mxu0 0.0
    %3850 = vmatpush2.msra.mxu0 0.0
    %3851 = vmatprep.mubr.f32.mxu0 0.0
    %3852 = vmatmul.mubr.f32.gmra.mxu0 %v3785
    %v3853 = vpop.f32.mrf.mxu0
    %v3854 = vadd.f32 0.0, %v3853
    %v3855 = vpop.f32.mrf.mxu0
    %3856 = vdwg.mxu0
    %v3857 = vadd.f32 %v3781, %v3854
    %v3858 = vmul.f32 %v3857, %v840
    %v3859 = vtanh.pop %v3858
    %v3860 = vmul.f32 %v3859, %v840
    %v3861 = vadd.f32 %v3860, %v841
    %v3862 = vmul.f32 %v3861, %v3774
    %3864 = vrot.lane.b32.xlu0 %v3861, 64
    %v3865 = vpop.permute.xlu0 %3864
    %v3867 = vmul.f32 %v3861, %v3865
    %3869 = vrot.lane.b32.xlu0 %v3867, 32
    %v3870 = vpop.permute.xlu0 %3869
    %v3872 = vadd.f32 %v3862, %v3870
    %v3873 = vtanh.pop %v3872
    %3875 = vrot.lane.b32.xlu0 %v3873, 64
    %v3876 = vpop.permute.xlu0 %3875
    %v3878 = vmul.f32 %v3861, %v3876
    %v3879 = vld [vmem:[%s6] sm:$0xff]
    %v3880 = vld [vmem:[%s6 + $0x8] sm:$0xff]
    %v3881 = vld [vmem:[%s6 + $0x10] sm:$0xff]
    %v3882 = vld [vmem:[%s6 + $0x18] sm:$0xff]
    %v3883 = vld [vmem:[%s7] sm:$0x1]
    %v3885 = vlaneseq
    %v3886 = vshrl.u32 %v3885, 7
    %v3887 = vsub.s32 0, %v3886
    %v3888 = vrot.slane %v3883, %v3887
    %3891 = vrot.lane.b32.xlu0 %v3878, 32
    %v3892 = vpop.permute.xlu0 %3891
    %v3893 = vsel %vm843, %v3892, 0
    %3895 = vmatprep.subr.mxu0 0.0
    %3896 = vmatpush1.msra.mxu0 0.0
    %3897 = vmatprep.subr.mxu0 0.0
    %3898 = vmatpush1.msra.mxu0 0.0
    %3899 = vmatprep.subr.mxu0 0.0
    %3900 = vmatpush1.msra.mxu0 0.0
    %3901 = vmatprep.subr.mxu0 0.0
    %3902 = vmatpush1.msra.mxu0 0.0
    %3903 = vmatprep.subr.mxu0 0.0
    %3904 = vmatpush1.msra.mxu0 0.0
    %3905 = vmatprep.subr.mxu0 0.0
    %3906 = vmatpush1.msra.mxu0 0.0
    %3907 = vmatprep.subr.mxu0 0.0
    %3908 = vmatpush1.msra.mxu0 0.0
    %3909 = vmatprep.subr.mxu0 0.0
    %3910 = vmatpush1.msra.mxu0 0.0
    %3911 = vmatprep.subr.mxu0 0.0
    %3912 = vmatpush1.msra.mxu0 0.0
    %3913 = vmatprep.subr.mxu0 0.0
    %3914 = vmatpush1.msra.mxu0 0.0
    %3915 = vmatprep.subr.mxu0 0.0
    %3916 = vmatpush1.msra.mxu0 0.0
    %3917 = vmatprep.subr.mxu0 0.0
    %3918 = vmatpush1.msra.mxu0 0.0
    %3919 = vmatprep.subr.mxu0 0.0
    %3920 = vmatpush1.msra.mxu0 %v3882
    %3921 = vmatprep.subr.mxu0 0.0
    %3922 = vmatpush1.msra.mxu0 %v3881
    %3923 = vmatprep.subr.mxu0 0.0
    %3924 = vmatpush1.msra.mxu0 %v3880
    %3925 = vmatprep.subr.mxu0 0.0
    %3926 = vmatpush1.msra.mxu0 %v3879
    %3927 = vmatprep.subr.mxu0 0.0
    %3928 = vmatpush2.msra.mxu0 0.0
    %3929 = vmatprep.subr.mxu0 0.0
    %3930 = vmatpush2.msra.mxu0 0.0
    %3931 = vmatprep.subr.mxu0 0.0
    %3932 = vmatpush2.msra.mxu0 0.0
    %3933 = vmatprep.subr.mxu0 0.0
    %3934 = vmatpush2.msra.mxu0 0.0
    %3935 = vmatprep.subr.mxu0 0.0
    %3936 = vmatpush2.msra.mxu0 0.0
    %3937 = vmatprep.subr.mxu0 0.0
    %3938 = vmatpush2.msra.mxu0 0.0
    %3939 = vmatprep.subr.mxu0 0.0
    %3940 = vmatpush2.msra.mxu0 0.0
    %3941 = vmatprep.subr.mxu0 0.0
    %3942 = vmatpush2.msra.mxu0 0.0
    %3943 = vmatprep.subr.mxu0 0.0
    %3944 = vmatpush2.msra.mxu0 0.0
    %3945 = vmatprep.subr.mxu0 0.0
    %3946 = vmatpush2.msra.mxu0 0.0
    %3947 = vmatprep.subr.mxu0 0.0
    %3948 = vmatpush2.msra.mxu0 0.0
    %3949 = vmatprep.subr.mxu0 0.0
    %3950 = vmatpush2.msra.mxu0 0.0
    %3951 = vmatprep.subr.mxu0 0.0
    %3952 = vmatpush2.msra.mxu0 0.0
    %3953 = vmatprep.subr.mxu0 0.0
    %3954 = vmatpush2.msra.mxu0 0.0
    %3955 = vmatprep.subr.mxu0 0.0
    %3956 = vmatpush2.msra.mxu0 0.0
    %3957 = vmatprep.subr.mxu0 0.0
    %3958 = vmatpush2.msra.mxu0 0.0
    %3959 = vmatprep.mubr.f32.mxu0 0.0
    %3960 = vmatmul.mubr.f32.gmra.mxu0 %v3893
    %v3961 = vpop.f32.mrf.mxu0
    %v3962 = vadd.f32 %v3888, %v3961
    %v3963 = vpop.f32.mrf.mxu0
    %3964 = vdwg.mxu0
    %vm3965 = vcmask 9216
    %3966 = vst.msk [vmem:[#allocation5] sm:$0x3] %vm3965, %v3962
    %v3967 = vsel %vm3965, %v3962, -inf
    %3968 = vmax.xlane.f32.xlu0 %v3967
    %v3969 = vpop.xlane.xlu0 %3968
    %v3970 = vsub.f32 %v3962, %v3969
    %v3971 = vmul.f32 %v3970, 1.442695
    %v3972 = vpow.pop %v3971
    %v3973 = vsel %vm3965, %v3972, 0.0
    %3974 = vadd.xlane.f32.xlu0 %v3973
    %v3975 = vpop.xlane.xlu0 %3974
    %v3976 = vrcp.pop %v3975
    %v3977 = vmul.f32 %v3972, %v3976
    %3978 = vst.msk [vmem:[#allocation3] sm:$0x3] %vm3965, %v3977
    // Predicated region
    $region34: #{tpu_custom_call.1} parent=1 // pred_check
      _
    $region35: #{tpu_custom_call.1} parent=1 // pred_check_branch
      %3980 = sbr.rel (0) target = $region37
    $region36: #{tpu_custom_call.1} parent=1 // pred_region
      %s3982 = ssub.s32 32, 32
      %3983 = vsyncadd [#allocation4], %s3982
      %s3985 = sshll.u32 [#allocation3], 4
      %s3986 = int_to_ptr.vmem [resolvable:$true] %s3985
      %3988 = dma.vmem_to_hbm [thread:$0]  %s3986, 32, %s8, [#allocation4]
    $region37: #{tpu_custom_call.1} parent=1 // pred_fallthru
      _
    // Predicated region
    $region38: #{tpu_custom_call.1} parent=1 // pred_check
      _
    $region39: #{tpu_custom_call.1} parent=1 // pred_check_branch
      %3990 = sbr.rel (0) target = $region41
    $region40: #{tpu_custom_call.1} parent=1 // pred_region
      %s3992 = ssub.s32 32, 32
      %3993 = vsyncadd [#allocation6], %s3992
      %s3995 = sshll.u32 [#allocation5], 4
      %s3996 = int_to_ptr.vmem [resolvable:$true] %s3995
      %3998 = dma.vmem_to_hbm [thread:$0]  %s3996, 32, %s9, [#allocation6]
    $region41: #{tpu_custom_call.1} parent=1 // pred_fallthru
      _
    // Predicated region
    $region42: #{tpu_custom_call.1} parent=1 // pred_check
      _
    $region43: #{tpu_custom_call.1} parent=1 // pred_check_branch
      %4000 = sbr.rel (0) target = $region45
    $region44: #{tpu_custom_call.1} parent=1 // pred_region
      %4001 = dma.done [#allocation4], 32
    $region45: #{tpu_custom_call.1} parent=1 // pred_fallthru
      _
    // Predicated region
    $region46: #{tpu_custom_call.1} parent=1 // pred_check
      _
    $region47: #{tpu_custom_call.1} parent=1 // pred_check_branch
      %4003 = sbr.rel (0) target = $region49
    $region48: #{tpu_custom_call.1} parent=1 // pred_region
      %4004 = dma.done [#allocation6], 32
    $region49: #{tpu_custom_call.1} parent=1 // pred_fallthru
      _
    %4005 = vsyncpa [#allocation4], 1
    %4006 = vsyncpa [#allocation6], 1

</llo_original>
